<compile_context>
chip_gen: v7x
topology: tpu7x:2x2x1
jax: 0.10.0
libtpu: 0.0.40
codegen_flags: <defaults>
</compile_context>

<pallas_src>
import functools

import numpy as np
import jax
import jax.numpy as jnp
from jax.experimental import pallas as pl
from jax.experimental.pallas import tpu as pltpu

ACT = jnp.bfloat16        # activation / conv-weight I/O dtype (accum is f32)
LANE_TILE_TARGET = 2048   # lane tile for the flattened spatial axis


# --------------------------------------------------------------------------
# Pallas kernels
# --------------------------------------------------------------------------
def conv1f_kernel(x_ref, w_ref, b_ref, c1_ref, cf_ref, *, f):
    # Composed conv1 + conv_f:  (2f, C) @ (C, TL) + bias, split into 2 outputs.
    acc = jnp.dot(w_ref[...], x_ref[0], preferred_element_type=jnp.float32)
    acc = acc + b_ref[...]
    c1_ref[0] = acc[:f, :].astype(c1_ref.dtype)
    cf_ref[0] = acc[f:, :].astype(cf_ref.dtype)


def convgemm_kernel(p_ref, w_ref, b_ref, o_ref, *, relu):
    # Generic conv-as-GEMM: (Cout, K) @ (K, TL) + bias [+ ReLU], lane-dense.
    acc = jnp.dot(w_ref[...], p_ref[0], preferred_element_type=jnp.float32)
    acc = acc + b_ref[...]
    if relu:
        acc = jnp.maximum(acc, 0.0)
    o_ref[0] = acc.astype(o_ref.dtype)


def tapmax_kernel(t_ref, o_ref, *, k):
    # Elementwise max over k stacked pooling taps (lane-dense).
    m = t_ref[0, 0]
    for t in range(1, k):
        m = jnp.maximum(m, t_ref[0, t])
    o_ref[0] = m


def resize_kernel(a_ref, x_ref, bt_ref, o_ref):
    # Fused separable bilinear resize for one (image, channel):  A @ X @ B^T.
    t = jnp.dot(a_ref[...], x_ref[0], preferred_element_type=jnp.float32)
    o_ref[0] = jnp.dot(t.astype(bt_ref.dtype), bt_ref[...],
                       preferred_element_type=jnp.float32).astype(o_ref.dtype)


def final_kernel(x_ref, c3_ref, cf_ref, w_ref, b_ref, o_ref):
    # c4 = W4 @ (c3 + cf) + b4 ;  m = sigmoid(c4) ;  out = x * m
    s = c3_ref[0] + cf_ref[0]                                  # (f, TL)
    c4 = jnp.dot(w_ref[...], s, preferred_element_type=jnp.float32)
    c4 = c4 + b_ref[...]
    m = jax.nn.sigmoid(c4)
    o_ref[0] = (x_ref[0] * m).astype(o_ref.dtype)


# --------------------------------------------------------------------------
# pallas_call wrappers
# --------------------------------------------------------------------------
def _parallel(n):
    return pltpu.CompilerParams(dimension_semantics=("parallel",) * n)


def _lane_tile(L):
    """Lane tile along the flattened spatial axis: full dim if small,
    otherwise a fixed 128-multiple with a ragged, masked tail."""
    return L if L <= LANE_TILE_TARGET else LANE_TILE_TARGET


def conv1_convf(x_flat, wcat, bcat, f):
    n, c, L = x_flat.shape
    tl = _lane_tile(L)
    grid = (n, pl.cdiv(L, tl))
    return pl.pallas_call(
        functools.partial(conv1f_kernel, f=f),
        grid=grid,
        in_specs=[pl.BlockSpec((1, c, tl), lambda i, j: (i, 0, j)),
                  pl.BlockSpec((2 * f, c), lambda i, j: (0, 0)),
                  pl.BlockSpec((2 * f, 1), lambda i, j: (0, 0))],
        out_specs=(pl.BlockSpec((1, f, tl), lambda i, j: (i, 0, j)),
                   pl.BlockSpec((1, f, tl), lambda i, j: (i, 0, j))),
        out_shape=(jax.ShapeDtypeStruct((n, f, L), ACT),
                   jax.ShapeDtypeStruct((n, f, L), ACT)),
        compiler_params=_parallel(2),
    )(x_flat, wcat, bcat)


def conv_gemm(patches, w, b, relu):
    n, k, L = patches.shape
    cout = w.shape[0]
    tl = _lane_tile(L)
    grid = (n, pl.cdiv(L, tl))
    return pl.pallas_call(
        functools.partial(convgemm_kernel, relu=relu),
        grid=grid,
        in_specs=[pl.BlockSpec((1, k, tl), lambda i, j: (i, 0, j)),
                  pl.BlockSpec((cout, k), lambda i, j: (0, 0)),
                  pl.BlockSpec((cout, 1), lambda i, j: (0, 0))],
        out_specs=pl.BlockSpec((1, cout, tl), lambda i, j: (i, 0, j)),
        out_shape=jax.ShapeDtypeStruct((n, cout, L), ACT),
        compiler_params=_parallel(2),
    )(patches, w, b)


def tap_max(taps):
    n, k, c, L = taps.shape
    tl = _lane_tile(L)
    grid = (n, pl.cdiv(L, tl))
    return pl.pallas_call(
        functools.partial(tapmax_kernel, k=k),
        grid=grid,
        in_specs=[pl.BlockSpec((1, k, c, tl), lambda i, j: (i, 0, 0, j))],
        out_specs=pl.BlockSpec((1, c, tl), lambda i, j: (i, 0, j)),
        out_shape=jax.ShapeDtypeStruct((n, c, L), ACT),
        compiler_params=_parallel(2),
    )(taps)


def bilinear_resize(c3, A, Bt, H, W):
    n, f, hp, wp = c3.shape
    x = c3.reshape(n * f, hp, wp)
    out = pl.pallas_call(
        resize_kernel,
        grid=(n * f,),
        in_specs=[pl.BlockSpec((H, hp), lambda i: (0, 0)),
                  pl.BlockSpec((1, hp, wp), lambda i: (i, 0, 0)),
                  pl.BlockSpec((wp, W), lambda i: (0, 0))],
        out_specs=pl.BlockSpec((1, H, W), lambda i: (i, 0, 0)),
        out_shape=jax.ShapeDtypeStruct((n * f, H, W), ACT),
        compiler_params=_parallel(1),
    )(A, x, Bt)
    return out.reshape(n, f, H * W)


def final_fused(x_flat, c3r, cf, w4, b4):
    n, c, L = x_flat.shape
    f = c3r.shape[1]
    tl = _lane_tile(L)
    grid = (n, pl.cdiv(L, tl))
    return pl.pallas_call(
        final_kernel,
        grid=grid,
        in_specs=[pl.BlockSpec((1, c, tl), lambda i, j: (i, 0, j)),
                  pl.BlockSpec((1, f, tl), lambda i, j: (i, 0, j)),
                  pl.BlockSpec((1, f, tl), lambda i, j: (i, 0, j)),
                  pl.BlockSpec((c, f), lambda i, j: (0, 0)),
                  pl.BlockSpec((c, 1), lambda i, j: (0, 0))],
        out_specs=pl.BlockSpec((1, c, tl), lambda i, j: (i, 0, j)),
        out_shape=jax.ShapeDtypeStruct((n, c, L), jnp.float32),
        compiler_params=_parallel(2),
    )(x_flat, c3r, cf, w4, b4)


# --------------------------------------------------------------------------
# Plain-JAX glue: tap stacking (im2col) and bilinear matrices
# --------------------------------------------------------------------------
def im2col_3x3(x, stride, padding):
    """Channels-first tap-stacked im2col for a 3x3 conv.
    x: (N, C, H, W) -> (patches (N, 9C, oh*ow), oh, ow); K is tap-major,
    channel-minor so it matches the (Cout, 9C) weight layout."""
    n, c, h, w = x.shape
    if padding:
        x = jnp.pad(x, ((0, 0), (0, 0), (padding, padding), (padding, padding)))
        h, w = h + 2 * padding, w + 2 * padding
    oh = (h - 3) // stride + 1
    ow = (w - 3) // stride + 1
    taps = []
    for di in range(3):
        for dj in range(3):
            t = x[:, :, di::stride, dj::stride][:, :, :oh, :ow]
            taps.append(t)
    p = jnp.stack(taps, axis=1)                       # (N, 9, C, oh, ow)
    return p.reshape(n, 9 * c, oh * ow), oh, ow


def pool_taps(x, axis, k, s):
    """Stack the k taps of a 1-D pooling window (size k, stride s) along a new
    axis 1.  x: (N, C, H, W); axis in {2, 3}.  Returns (taps, out_size)."""
    size = x.shape[axis]
    out = (size - k) // s + 1
    taps = []
    for d in range(k):
        idx = [slice(None)] * 4
        idx[axis] = slice(d, None, s)
        t = x[tuple(idx)]
        trim = [slice(None)] * 4
        trim[axis] = slice(0, out)
        taps.append(t[tuple(trim)])
    return jnp.stack(taps, axis=1), out               # (N, k, C, H', W')


def bilinear_matrix(out_size, in_size):
    """1-D bilinear interpolation matrix, align_corners=False (PyTorch)."""
    A = np.zeros((out_size, in_size), np.float32)
    if in_size == 1:
        A[:, 0] = 1.0
        return A
    scale = in_size / out_size
    for o in range(out_size):
        src = (o + 0.5) * scale - 0.5
        src = min(max(src, 0.0), in_size - 1)
        i0 = min(int(np.floor(src)), in_size - 1)
        frac = src - i0
        i1 = min(i0 + 1, in_size - 1)
        A[o, i0] += 1.0 - frac
        A[o, i1] += frac
    return A


# --------------------------------------------------------------------------
# Parameters.  1x1 weights are (Cout, Cin); 3x3 weights are (Cout, 9*Cin)
# with column index = (ky*3 + kx)*Cin + cin; biases are (Cout, 1).
# --------------------------------------------------------------------------
def init_params(key, n_feats):
    f = n_feats // 4
    ks = jax.random.split(key, 14)

    def wrand(k, shape, fan_in):
        return jax.random.normal(k, shape, jnp.float32) / np.sqrt(fan_in)

    def brand(k, cout):
        return 0.01 * jax.random.normal(k, (cout, 1), jnp.float32)

    def w3x3(k):
        ww = wrand(k, (f, f, 3, 3), 9 * f)            # PyTorch (out, in, ky, kx)
        return jnp.transpose(ww, (0, 2, 3, 1)).reshape(f, 9 * f)

    w1 = wrand(ks[0], (f, n_feats), n_feats)
    b1 = brand(ks[1], f)
    wf = wrand(ks[2], (f, f), f)
    bf_ = brand(ks[3], f)

    return {
        # conv_f composed with conv1 (two 1x1s, no nonlinearity between):
        #   rows [0, f)  -> c1_ = W1 x + b1
        #   rows [f, 2f) -> cf  = (Wf W1) x + (Wf b1 + bf)
        "wcat": jnp.concatenate([w1, wf @ w1], axis=0),
        "bcat": jnp.concatenate([b1, wf @ b1 + bf_], axis=0),
        "w2": w3x3(ks[4]).astype(ACT), "b2": brand(ks[5], f),
        "wmax": w3x3(ks[6]).astype(ACT), "bmax": brand(ks[7], f),
        "w3": w3x3(ks[8]).astype(ACT), "b3": brand(ks[9], f),
        "w3_": w3x3(ks[10]).astype(ACT), "b3_": brand(ks[11], f),
        "w4": wrand(ks[12], (n_feats, f), f).astype(ACT), "b4": brand(ks[13], n_feats),
    }


# --------------------------------------------------------------------------
# ESA forward (matches the PyTorch module semantics)
# --------------------------------------------------------------------------
def esa_forward(x_nchw, params):
    n, cn, h, w = x_nchw.shape
    f = cn // 4

    # Channels-first flatten is free for NCHW input (spatial goes to lanes).
    x_flat = x_nchw.reshape(n, cn, h * w)

    # conv1 (1x1) with conv_f composed in; two lane-dense outputs.
    c1_, cf = conv1_convf(x_flat, params["wcat"], params["bcat"], f)

    # conv2: 3x3 / stride 2 / pad 0, as one (f, 9f) @ (9f, L) GEMM.
    c1_img = c1_.reshape(n, f, h, w)
    p2, hc, wc = im2col_3x3(c1_img, stride=2, padding=0)
    c1 = conv_gemm(p2, params["w2"], params["b2"], relu=False)
    c1 = c1.reshape(n, f, hc, wc)

    # max_pool2d(7, stride=3): separable, two Pallas tap-max passes.
    tw, wp = pool_taps(c1, axis=3, k=7, s=3)
    v = tap_max(tw.reshape(n, 7, f, hc * wp)).reshape(n, f, hc, wp)
    th, hp = pool_taps(v, axis=2, k=7, s=3)
    vmax = tap_max(th.reshape(n, 7, f, hp * wp)).reshape(n, f, hp, wp)

    # conv_max + ReLU -> conv3 + ReLU -> conv3_  (each one 9f-K GEMM).
    p, _, _ = im2col_3x3(vmax, stride=1, padding=1)
    v_range = conv_gemm(p, params["wmax"], params["bmax"], relu=True)
    p, _, _ = im2col_3x3(v_range.reshape(n, f, hp, wp), stride=1, padding=1)
    c3 = conv_gemm(p, params["w3"], params["b3"], relu=True)
    p, _, _ = im2col_3x3(c3.reshape(n, f, hp, wp), stride=1, padding=1)
    c3 = conv_gemm(p, params["w3_"], params["b3_"], relu=False)
    c3 = c3.reshape(n, f, hp, wp)

    # Fused separable bilinear resize to (H, W), align_corners=False.
    A = jnp.asarray(bilinear_matrix(h, hp)).astype(ACT)      # (H, hp)
    Bt = jnp.asarray(bilinear_matrix(w, wp).T).astype(ACT)   # (wp, W)
    c3r = bilinear_resize(c3, A, Bt, h, w)                   # (N, f, H*W)

    # c4 = conv4(c3 + cf); m = sigmoid(c4); out = x * m  (fused, lane-dense).
    out = final_fused(x_flat, c3r, cf, params["w4"], params["b4"])
    return out.reshape(n, cn, h, w)


# --------------------------------------------------------------------------
if __name__ == "__main__":
    n_feats, batch, height, width = 16, 2, 16, 16

    x = jax.random.normal(jax.random.PRNGKey(0),
                          (batch, n_feats, height, width), jnp.float32)
    params = init_params(jax.random.PRNGKey(42), n_feats)

    out = jax.jit(esa_forward)(x, params)
    out = jax.block_until_ready(out)

    assert out.shape == (batch, n_feats, height, width)
    assert bool(jnp.all(jnp.isfinite(out)))
    print("KERNEL_OK")
</pallas_src>

<mosaic_0001>
module attributes {stable_mosaic.version = 11 : i64} {
  func.func @conv1f_kernel(%arg0: i32, %arg1: i32, %arg2: memref<1x16x256xf32, #tpu.memory_space<vmem>>, %arg3: memref<8x16xf32, #tpu.memory_space<vmem>>, %arg4: memref<8x1xf32, #tpu.memory_space<vmem>>, %arg5: memref<1x4x256xbf16, #tpu.memory_space<vmem>>, %arg6: memref<1x4x256xbf16, #tpu.memory_space<vmem>>) attributes {dimension_semantics = [#tpu.dimension_semantics<parallel>, #tpu.dimension_semantics<parallel>], iteration_bounds = array<i64: 2, 1>, scalar_prefetch = 0 : i64, scratch_operands = 0 : i64, tpu.core_type = #tpu.core_type<tc>, window_params = [{transform_indices = @transform_0, window_bounds = array<i64: 1, 16, 256>}, {pipeline_mode = #tpu.pipeline_mode<synchronous>, transform_indices = @transform_1, window_bounds = array<i64: 8, 16>}, {pipeline_mode = #tpu.pipeline_mode<synchronous>, transform_indices = @transform_2, window_bounds = array<i64: 8, 1>}, {transform_indices = @transform_3, window_bounds = array<i64: 1, 4, 256>}, {transform_indices = @transform_4, window_bounds = array<i64: 1, 4, 256>}]} {
    %c0 = arith.constant 0 : index
    %c0_0 = arith.constant 0 : index
    %0 = vector.load %arg3[%c0, %c0_0] : memref<8x16xf32, #tpu.memory_space<vmem>>, vector<8x16xf32>
    %c0_1 = arith.constant 0 : index
    %c0_2 = arith.constant 0 : index
    %c0_3 = arith.constant 0 : index
    %1 = vector.load %arg2[%c0_1, %c0_2, %c0_3] : memref<1x16x256xf32, #tpu.memory_space<vmem>>, vector<1x16x256xf32>
    %2 = vector.shape_cast %1 : vector<1x16x256xf32> to vector<16x256xf32>
    %cst = arith.constant dense<0.000000e+00> : vector<8x256xf32>
    %3 = tpu.matmul %0, %2, %cst {dimension_numbers = #tpu.dot_dimension_numbers<[1], [0], [0], [1], [0, 0, 1, 1], [], []>} : vector<8x16xf32>, vector<16x256xf32>, vector<8x256xf32> -> vector<8x256xf32>
    %c0_4 = arith.constant 0 : index
    %c0_5 = arith.constant 0 : index
    %4 = vector.load %arg4[%c0_4, %c0_5] : memref<8x1xf32, #tpu.memory_space<vmem>>, vector<8x1xf32>
    %5 = vector.broadcast %4 : vector<8x1xf32> to vector<8x256xf32>
    %6 = arith.addf %3, %5 : vector<8x256xf32>
    %7 = vector.extract_strided_slice %6 {offsets = [0, 0], sizes = [4, 256], strides = [1, 1]} : vector<8x256xf32> to vector<4x256xf32>
    %8 = arith.truncf %7 : vector<4x256xf32> to vector<4x256xbf16>
    %c0_6 = arith.constant 0 : index
    %c0_7 = arith.constant 0 : index
    %c0_8 = arith.constant 0 : index
    %9 = vector.load %arg5[%c0_6, %c0_7, %c0_8] : memref<1x4x256xbf16, #tpu.memory_space<vmem>>, vector<1x4x256xbf16>
    %10 = vector.shape_cast %9 : vector<1x4x256xbf16> to vector<4x256xbf16>
    %11 = vector.shape_cast %8 : vector<4x256xbf16> to vector<1x4x256xbf16>
    tpu.vector_store %arg5[%c0_6, %c0_7, %c0_8], %11 {strides = array<i32>} : memref<1x4x256xbf16, #tpu.memory_space<vmem>>, vector<1x4x256xbf16>,
    %12 = vector.extract_strided_slice %6 {offsets = [4, 0], sizes = [4, 256], strides = [1, 1]} : vector<8x256xf32> to vector<4x256xf32>
    %13 = arith.truncf %12 : vector<4x256xf32> to vector<4x256xbf16>
    %c0_9 = arith.constant 0 : index
    %c0_10 = arith.constant 0 : index
    %c0_11 = arith.constant 0 : index
    %14 = vector.load %arg6[%c0_9, %c0_10, %c0_11] : memref<1x4x256xbf16, #tpu.memory_space<vmem>>, vector<1x4x256xbf16>
    %15 = vector.shape_cast %14 : vector<1x4x256xbf16> to vector<4x256xbf16>
    %16 = vector.shape_cast %13 : vector<4x256xbf16> to vector<1x4x256xbf16>
    tpu.vector_store %arg6[%c0_9, %c0_10, %c0_11], %16 {strides = array<i32>} : memref<1x4x256xbf16, #tpu.memory_space<vmem>>, vector<1x4x256xbf16>,
    return
  }
  func.func @transform_0(%arg0: i32, %arg1: i32) -> (i32, i32, i32) {
    %c0_i32 = arith.constant 0 : i32
    %c0_i32_0 = arith.constant 0 : i32
    return %arg0, %c0_i32, %arg1 : i32, i32, i32
  }
  func.func @transform_1(%arg0: i32, %arg1: i32) -> (i32, i32) {
    %c0_i32 = arith.constant 0 : i32
    %c0_i32_0 = arith.constant 0 : i32
    %c0_i32_1 = arith.constant 0 : i32
    return %c0_i32, %c0_i32_0 : i32, i32
  }
  func.func @transform_2(%arg0: i32, %arg1: i32) -> (i32, i32) {
    %c0_i32 = arith.constant 0 : i32
    %c0_i32_0 = arith.constant 0 : i32
    %c0_i32_1 = arith.constant 0 : i32
    return %c0_i32, %c0_i32_0 : i32, i32
  }
  func.func @transform_3(%arg0: i32, %arg1: i32) -> (i32, i32, i32) {
    %c0_i32 = arith.constant 0 : i32
    %c0_i32_0 = arith.constant 0 : i32
    return %arg0, %c0_i32, %arg1 : i32, i32, i32
  }
  func.func @transform_4(%arg0: i32, %arg1: i32) -> (i32, i32, i32) {
    %c0_i32 = arith.constant 0 : i32
    %c0_i32_0 = arith.constant 0 : i32
    return %arg0, %c0_i32, %arg1 : i32, i32, i32
  }
}

module attributes {stable_mosaic.version = 11 : i64} {
  func.func @convgemm_kernel(%arg0: i32, %arg1: i32, %arg2: memref<1x36x49xbf16, #tpu.memory_space<vmem>>, %arg3: memref<4x36xbf16, #tpu.memory_space<vmem>>, %arg4: memref<4x1xf32, #tpu.memory_space<vmem>>, %arg5: memref<1x4x49xbf16, #tpu.memory_space<vmem>>) attributes {dimension_semantics = [#tpu.dimension_semantics<parallel>, #tpu.dimension_semantics<parallel>], iteration_bounds = array<i64: 2, 1>, scalar_prefetch = 0 : i64, scratch_operands = 0 : i64, tpu.core_type = #tpu.core_type<tc>, window_params = [{transform_indices = @transform_0, window_bounds = array<i64: 1, 36, 49>}, {pipeline_mode = #tpu.pipeline_mode<synchronous>, transform_indices = @transform_1, window_bounds = array<i64: 4, 36>}, {pipeline_mode = #tpu.pipeline_mode<synchronous>, transform_indices = @transform_2, window_bounds = array<i64: 4, 1>}, {transform_indices = @transform_3, window_bounds = array<i64: 1, 4, 49>}]} {
    %c0 = arith.constant 0 : index
    %c0_0 = arith.constant 0 : index
    %0 = vector.load %arg3[%c0, %c0_0] : memref<4x36xbf16, #tpu.memory_space<vmem>>, vector<4x36xbf16>
    %c0_1 = arith.constant 0 : index
    %c0_2 = arith.constant 0 : index
    %c0_3 = arith.constant 0 : index
    %1 = vector.load %arg2[%c0_1, %c0_2, %c0_3] : memref<1x36x49xbf16, #tpu.memory_space<vmem>>, vector<1x36x49xbf16>
    %2 = vector.shape_cast %1 : vector<1x36x49xbf16> to vector<36x49xbf16>
    %cst = arith.constant dense<0.000000e+00> : vector<4x49xf32>
    %3 = tpu.matmul %0, %2, %cst {dimension_numbers = #tpu.dot_dimension_numbers<[1], [0], [0], [1], [0, 0, 1, 1], [], []>} : vector<4x36xbf16>, vector<36x49xbf16>, vector<4x49xf32> -> vector<4x49xf32>
    %c0_4 = arith.constant 0 : index
    %c0_5 = arith.constant 0 : index
    %4 = vector.load %arg4[%c0_4, %c0_5] : memref<4x1xf32, #tpu.memory_space<vmem>>, vector<4x1xf32>
    %5 = vector.broadcast %4 : vector<4x1xf32> to vector<4x49xf32>
    %6 = arith.addf %3, %5 : vector<4x49xf32>
    %7 = arith.truncf %6 : vector<4x49xf32> to vector<4x49xbf16>
    %c0_6 = arith.constant 0 : index
    %c0_7 = arith.constant 0 : index
    %c0_8 = arith.constant 0 : index
    %8 = vector.load %arg5[%c0_6, %c0_7, %c0_8] : memref<1x4x49xbf16, #tpu.memory_space<vmem>>, vector<1x4x49xbf16>
    %9 = vector.shape_cast %8 : vector<1x4x49xbf16> to vector<4x49xbf16>
    %10 = vector.shape_cast %7 : vector<4x49xbf16> to vector<1x4x49xbf16>
    tpu.vector_store %arg5[%c0_6, %c0_7, %c0_8], %10 {strides = array<i32>} : memref<1x4x49xbf16, #tpu.memory_space<vmem>>, vector<1x4x49xbf16>,
    return
  }
  func.func @transform_0(%arg0: i32, %arg1: i32) -> (i32, i32, i32) {
    %c0_i32 = arith.constant 0 : i32
    %c0_i32_0 = arith.constant 0 : i32
    return %arg0, %c0_i32, %arg1 : i32, i32, i32
  }
  func.func @transform_1(%arg0: i32, %arg1: i32) -> (i32, i32) {
    %c0_i32 = arith.constant 0 : i32
    %c0_i32_0 = arith.constant 0 : i32
    %c0_i32_1 = arith.constant 0 : i32
    return %c0_i32, %c0_i32_0 : i32, i32
  }
  func.func @transform_2(%arg0: i32, %arg1: i32) -> (i32, i32) {
    %c0_i32 = arith.constant 0 : i32
    %c0_i32_0 = arith.constant 0 : i32
    %c0_i32_1 = arith.constant 0 : i32
    return %c0_i32, %c0_i32_0 : i32, i32
  }
  func.func @transform_3(%arg0: i32, %arg1: i32) -> (i32, i32, i32) {
    %c0_i32 = arith.constant 0 : i32
    %c0_i32_0 = arith.constant 0 : i32
    return %arg0, %c0_i32, %arg1 : i32, i32, i32
  }
}

module attributes {stable_mosaic.version = 11 : i64} {
  func.func @tapmax_kernel(%arg0: i32, %arg1: i32, %arg2: memref<1x7x4x7xbf16, #tpu.memory_space<vmem>>, %arg3: memref<1x4x7xbf16, #tpu.memory_space<vmem>>) attributes {dimension_semantics = [#tpu.dimension_semantics<parallel>, #tpu.dimension_semantics<parallel>], iteration_bounds = array<i64: 2, 1>, scalar_prefetch = 0 : i64, scratch_operands = 0 : i64, tpu.core_type = #tpu.core_type<tc>, window_params = [{transform_indices = @transform_0, window_bounds = array<i64: 1, 7, 4, 7>}, {transform_indices = @transform_1, window_bounds = array<i64: 1, 4, 7>}]} {
    %c0 = arith.constant 0 : index
    %c0_0 = arith.constant 0 : index
    %c0_1 = arith.constant 0 : index
    %c0_2 = arith.constant 0 : index
    %0 = vector.load %arg2[%c0, %c0_0, %c0_1, %c0_2] : memref<1x7x4x7xbf16, #tpu.memory_space<vmem>>, vector<1x1x4x7xbf16>
    %1 = vector.shape_cast %0 : vector<1x1x4x7xbf16> to vector<4x7xbf16>
    %c0_3 = arith.constant 0 : index
    %c1 = arith.constant 1 : index
    %c0_4 = arith.constant 0 : index
    %c0_5 = arith.constant 0 : index
    %2 = vector.load %arg2[%c0_3, %c1, %c0_4, %c0_5] : memref<1x7x4x7xbf16, #tpu.memory_space<vmem>>, vector<1x1x4x7xbf16>
    %3 = vector.shape_cast %2 : vector<1x1x4x7xbf16> to vector<4x7xbf16>
    %4 = arith.maximumf %1, %3 : vector<4x7xbf16>
    %c0_6 = arith.constant 0 : index
    %c2 = arith.constant 2 : index
    %c0_7 = arith.constant 0 : index
    %c0_8 = arith.constant 0 : index
    %5 = vector.load %arg2[%c0_6, %c2, %c0_7, %c0_8] : memref<1x7x4x7xbf16, #tpu.memory_space<vmem>>, vector<1x1x4x7xbf16>
    %6 = vector.shape_cast %5 : vector<1x1x4x7xbf16> to vector<4x7xbf16>
    %7 = arith.maximumf %4, %6 : vector<4x7xbf16>
    %c0_9 = arith.constant 0 : index
    %c3 = arith.constant 3 : index
    %c0_10 = arith.constant 0 : index
    %c0_11 = arith.constant 0 : index
    %8 = vector.load %arg2[%c0_9, %c3, %c0_10, %c0_11] : memref<1x7x4x7xbf16, #tpu.memory_space<vmem>>, vector<1x1x4x7xbf16>
    %9 = vector.shape_cast %8 : vector<1x1x4x7xbf16> to vector<4x7xbf16>
    %10 = arith.maximumf %7, %9 : vector<4x7xbf16>
    %c0_12 = arith.constant 0 : index
    %c4 = arith.constant 4 : index
    %c0_13 = arith.constant 0 : index
    %c0_14 = arith.constant 0 : index
    %11 = vector.load %arg2[%c0_12, %c4, %c0_13, %c0_14] : memref<1x7x4x7xbf16, #tpu.memory_space<vmem>>, vector<1x1x4x7xbf16>
    %12 = vector.shape_cast %11 : vector<1x1x4x7xbf16> to vector<4x7xbf16>
    %13 = arith.maximumf %10, %12 : vector<4x7xbf16>
    %c0_15 = arith.constant 0 : index
    %c5 = arith.constant 5 : index
    %c0_16 = arith.constant 0 : index
    %c0_17 = arith.constant 0 : index
    %14 = vector.load %arg2[%c0_15, %c5, %c0_16, %c0_17] : memref<1x7x4x7xbf16, #tpu.memory_space<vmem>>, vector<1x1x4x7xbf16>
    %15 = vector.shape_cast %14 : vector<1x1x4x7xbf16> to vector<4x7xbf16>
    %16 = arith.maximumf %13, %15 : vector<4x7xbf16>
    %c0_18 = arith.constant 0 : index
    %c6 = arith.constant 6 : index
    %c0_19 = arith.constant 0 : index
    %c0_20 = arith.constant 0 : index
    %17 = vector.load %arg2[%c0_18, %c6, %c0_19, %c0_20] : memref<1x7x4x7xbf16, #tpu.memory_space<vmem>>, vector<1x1x4x7xbf16>
    %18 = vector.shape_cast %17 : vector<1x1x4x7xbf16> to vector<4x7xbf16>
    %19 = arith.maximumf %16, %18 : vector<4x7xbf16>
    %c0_21 = arith.constant 0 : index
    %c0_22 = arith.constant 0 : index
    %c0_23 = arith.constant 0 : index
    %20 = vector.load %arg3[%c0_21, %c0_22, %c0_23] : memref<1x4x7xbf16, #tpu.memory_space<vmem>>, vector<1x4x7xbf16>
    %21 = vector.shape_cast %20 : vector<1x4x7xbf16> to vector<4x7xbf16>
    %22 = vector.shape_cast %19 : vector<4x7xbf16> to vector<1x4x7xbf16>
    tpu.vector_store %arg3[%c0_21, %c0_22, %c0_23], %22 {strides = array<i32>} : memref<1x4x7xbf16, #tpu.memory_space<vmem>>, vector<1x4x7xbf16>,
    return
  }
  func.func @transform_0(%arg0: i32, %arg1: i32) -> (i32, i32, i32, i32) {
    %c0_i32 = arith.constant 0 : i32
    %c0_i32_0 = arith.constant 0 : i32
    %c0_i32_1 = arith.constant 0 : i32
    return %arg0, %c0_i32, %c0_i32_0, %arg1 : i32, i32, i32, i32
  }
  func.func @transform_1(%arg0: i32, %arg1: i32) -> (i32, i32, i32) {
    %c0_i32 = arith.constant 0 : i32
    %c0_i32_0 = arith.constant 0 : i32
    return %arg0, %c0_i32, %arg1 : i32, i32, i32
  }
}

module attributes {stable_mosaic.version = 11 : i64} {
  func.func @tapmax_kernel(%arg0: i32, %arg1: i32, %arg2: memref<1x7x4x1xbf16, #tpu.memory_space<vmem>>, %arg3: memref<1x4x1xbf16, #tpu.memory_space<vmem>>) attributes {dimension_semantics = [#tpu.dimension_semantics<parallel>, #tpu.dimension_semantics<parallel>], iteration_bounds = array<i64: 2, 1>, scalar_prefetch = 0 : i64, scratch_operands = 0 : i64, tpu.core_type = #tpu.core_type<tc>, window_params = [{transform_indices = @transform_0, window_bounds = array<i64: 1, 7, 4, 1>}, {transform_indices = @transform_1, window_bounds = array<i64: 1, 4, 1>}]} {
    %c0 = arith.constant 0 : index
    %c0_0 = arith.constant 0 : index
    %c0_1 = arith.constant 0 : index
    %c0_2 = arith.constant 0 : index
    %0 = vector.load %arg2[%c0, %c0_0, %c0_1, %c0_2] : memref<1x7x4x1xbf16, #tpu.memory_space<vmem>>, vector<1x1x4x1xbf16>
    %1 = vector.shape_cast %0 : vector<1x1x4x1xbf16> to vector<4x1xbf16>
    %c0_3 = arith.constant 0 : index
    %c1 = arith.constant 1 : index
    %c0_4 = arith.constant 0 : index
    %c0_5 = arith.constant 0 : index
    %2 = vector.load %arg2[%c0_3, %c1, %c0_4, %c0_5] : memref<1x7x4x1xbf16, #tpu.memory_space<vmem>>, vector<1x1x4x1xbf16>
    %3 = vector.shape_cast %2 : vector<1x1x4x1xbf16> to vector<4x1xbf16>
    %4 = arith.maximumf %1, %3 : vector<4x1xbf16>
    %c0_6 = arith.constant 0 : index
    %c2 = arith.constant 2 : index
    %c0_7 = arith.constant 0 : index
    %c0_8 = arith.constant 0 : index
    %5 = vector.load %arg2[%c0_6, %c2, %c0_7, %c0_8] : memref<1x7x4x1xbf16, #tpu.memory_space<vmem>>, vector<1x1x4x1xbf16>
    %6 = vector.shape_cast %5 : vector<1x1x4x1xbf16> to vector<4x1xbf16>
    %7 = arith.maximumf %4, %6 : vector<4x1xbf16>
    %c0_9 = arith.constant 0 : index
    %c3 = arith.constant 3 : index
    %c0_10 = arith.constant 0 : index
    %c0_11 = arith.constant 0 : index
    %8 = vector.load %arg2[%c0_9, %c3, %c0_10, %c0_11] : memref<1x7x4x1xbf16, #tpu.memory_space<vmem>>, vector<1x1x4x1xbf16>
    %9 = vector.shape_cast %8 : vector<1x1x4x1xbf16> to vector<4x1xbf16>
    %10 = arith.maximumf %7, %9 : vector<4x1xbf16>
    %c0_12 = arith.constant 0 : index
    %c4 = arith.constant 4 : index
    %c0_13 = arith.constant 0 : index
    %c0_14 = arith.constant 0 : index
    %11 = vector.load %arg2[%c0_12, %c4, %c0_13, %c0_14] : memref<1x7x4x1xbf16, #tpu.memory_space<vmem>>, vector<1x1x4x1xbf16>
    %12 = vector.shape_cast %11 : vector<1x1x4x1xbf16> to vector<4x1xbf16>
    %13 = arith.maximumf %10, %12 : vector<4x1xbf16>
    %c0_15 = arith.constant 0 : index
    %c5 = arith.constant 5 : index
    %c0_16 = arith.constant 0 : index
    %c0_17 = arith.constant 0 : index
    %14 = vector.load %arg2[%c0_15, %c5, %c0_16, %c0_17] : memref<1x7x4x1xbf16, #tpu.memory_space<vmem>>, vector<1x1x4x1xbf16>
    %15 = vector.shape_cast %14 : vector<1x1x4x1xbf16> to vector<4x1xbf16>
    %16 = arith.maximumf %13, %15 : vector<4x1xbf16>
    %c0_18 = arith.constant 0 : index
    %c6 = arith.constant 6 : index
    %c0_19 = arith.constant 0 : index
    %c0_20 = arith.constant 0 : index
    %17 = vector.load %arg2[%c0_18, %c6, %c0_19, %c0_20] : memref<1x7x4x1xbf16, #tpu.memory_space<vmem>>, vector<1x1x4x1xbf16>
    %18 = vector.shape_cast %17 : vector<1x1x4x1xbf16> to vector<4x1xbf16>
    %19 = arith.maximumf %16, %18 : vector<4x1xbf16>
    %c0_21 = arith.constant 0 : index
    %c0_22 = arith.constant 0 : index
    %c0_23 = arith.constant 0 : index
    %20 = vector.load %arg3[%c0_21, %c0_22, %c0_23] : memref<1x4x1xbf16, #tpu.memory_space<vmem>>, vector<1x4x1xbf16>
    %21 = vector.shape_cast %20 : vector<1x4x1xbf16> to vector<4x1xbf16>
    %22 = vector.shape_cast %19 : vector<4x1xbf16> to vector<1x4x1xbf16>
    tpu.vector_store %arg3[%c0_21, %c0_22, %c0_23], %22 {strides = array<i32>} : memref<1x4x1xbf16, #tpu.memory_space<vmem>>, vector<1x4x1xbf16>,
    return
  }
  func.func @transform_0(%arg0: i32, %arg1: i32) -> (i32, i32, i32, i32) {
    %c0_i32 = arith.constant 0 : i32
    %c0_i32_0 = arith.constant 0 : i32
    %c0_i32_1 = arith.constant 0 : i32
    return %arg0, %c0_i32, %c0_i32_0, %arg1 : i32, i32, i32, i32
  }
  func.func @transform_1(%arg0: i32, %arg1: i32) -> (i32, i32, i32) {
    %c0_i32 = arith.constant 0 : i32
    %c0_i32_0 = arith.constant 0 : i32
    return %arg0, %c0_i32, %arg1 : i32, i32, i32
  }
}

module attributes {stable_mosaic.version = 11 : i64} {
  func.func @convgemm_kernel(%arg0: i32, %arg1: i32, %arg2: memref<1x36x1xbf16, #tpu.memory_space<vmem>>, %arg3: memref<4x36xbf16, #tpu.memory_space<vmem>>, %arg4: memref<4x1xf32, #tpu.memory_space<vmem>>, %arg5: memref<1x4x1xbf16, #tpu.memory_space<vmem>>) attributes {dimension_semantics = [#tpu.dimension_semantics<parallel>, #tpu.dimension_semantics<parallel>], iteration_bounds = array<i64: 2, 1>, scalar_prefetch = 0 : i64, scratch_operands = 0 : i64, tpu.core_type = #tpu.core_type<tc>, window_params = [{transform_indices = @transform_0, window_bounds = array<i64: 1, 36, 1>}, {pipeline_mode = #tpu.pipeline_mode<synchronous>, transform_indices = @transform_1, window_bounds = array<i64: 4, 36>}, {pipeline_mode = #tpu.pipeline_mode<synchronous>, transform_indices = @transform_2, window_bounds = array<i64: 4, 1>}, {transform_indices = @transform_3, window_bounds = array<i64: 1, 4, 1>}]} {
    %c0 = arith.constant 0 : index
    %c0_0 = arith.constant 0 : index
    %0 = vector.load %arg3[%c0, %c0_0] : memref<4x36xbf16, #tpu.memory_space<vmem>>, vector<4x36xbf16>
    %c0_1 = arith.constant 0 : index
    %c0_2 = arith.constant 0 : index
    %c0_3 = arith.constant 0 : index
    %1 = vector.load %arg2[%c0_1, %c0_2, %c0_3] : memref<1x36x1xbf16, #tpu.memory_space<vmem>>, vector<1x36x1xbf16>
    %2 = vector.shape_cast %1 : vector<1x36x1xbf16> to vector<36x1xbf16>
    %cst = arith.constant dense<0.000000e+00> : vector<4x1xf32>
    %3 = tpu.matmul %0, %2, %cst {dimension_numbers = #tpu.dot_dimension_numbers<[1], [0], [0], [1], [0, 0, 1, 1], [], []>} : vector<4x36xbf16>, vector<36x1xbf16>, vector<4x1xf32> -> vector<4x1xf32>
    %c0_4 = arith.constant 0 : index
    %c0_5 = arith.constant 0 : index
    %4 = vector.load %arg4[%c0_4, %c0_5] : memref<4x1xf32, #tpu.memory_space<vmem>>, vector<4x1xf32>
    %5 = arith.addf %3, %4 : vector<4x1xf32>
    %cst_6 = arith.constant 0.000000e+00 : f32
    %6 = vector.broadcast %cst_6 : f32 to vector<4x1xf32>
    %7 = arith.maximumf %5, %6 : vector<4x1xf32>
    %8 = arith.truncf %7 : vector<4x1xf32> to vector<4x1xbf16>
    %c0_7 = arith.constant 0 : index
    %c0_8 = arith.constant 0 : index
    %c0_9 = arith.constant 0 : index
    %9 = vector.load %arg5[%c0_7, %c0_8, %c0_9] : memref<1x4x1xbf16, #tpu.memory_space<vmem>>, vector<1x4x1xbf16>
    %10 = vector.shape_cast %9 : vector<1x4x1xbf16> to vector<4x1xbf16>
    %11 = vector.shape_cast %8 : vector<4x1xbf16> to vector<1x4x1xbf16>
    tpu.vector_store %arg5[%c0_7, %c0_8, %c0_9], %11 {strides = array<i32>} : memref<1x4x1xbf16, #tpu.memory_space<vmem>>, vector<1x4x1xbf16>,
    return
  }
  func.func @transform_0(%arg0: i32, %arg1: i32) -> (i32, i32, i32) {
    %c0_i32 = arith.constant 0 : i32
    %c0_i32_0 = arith.constant 0 : i32
    return %arg0, %c0_i32, %arg1 : i32, i32, i32
  }
  func.func @transform_1(%arg0: i32, %arg1: i32) -> (i32, i32) {
    %c0_i32 = arith.constant 0 : i32
    %c0_i32_0 = arith.constant 0 : i32
    %c0_i32_1 = arith.constant 0 : i32
    return %c0_i32, %c0_i32_0 : i32, i32
  }
  func.func @transform_2(%arg0: i32, %arg1: i32) -> (i32, i32) {
    %c0_i32 = arith.constant 0 : i32
    %c0_i32_0 = arith.constant 0 : i32
    %c0_i32_1 = arith.constant 0 : i32
    return %c0_i32, %c0_i32_0 : i32, i32
  }
  func.func @transform_3(%arg0: i32, %arg1: i32) -> (i32, i32, i32) {
    %c0_i32 = arith.constant 0 : i32
    %c0_i32_0 = arith.constant 0 : i32
    return %arg0, %c0_i32, %arg1 : i32, i32, i32
  }
}

module attributes {stable_mosaic.version = 11 : i64} {
  func.func @convgemm_kernel(%arg0: i32, %arg1: i32, %arg2: memref<1x36x1xbf16, #tpu.memory_space<vmem>>, %arg3: memref<4x36xbf16, #tpu.memory_space<vmem>>, %arg4: memref<4x1xf32, #tpu.memory_space<vmem>>, %arg5: memref<1x4x1xbf16, #tpu.memory_space<vmem>>) attributes {dimension_semantics = [#tpu.dimension_semantics<parallel>, #tpu.dimension_semantics<parallel>], iteration_bounds = array<i64: 2, 1>, scalar_prefetch = 0 : i64, scratch_operands = 0 : i64, tpu.core_type = #tpu.core_type<tc>, window_params = [{transform_indices = @transform_0, window_bounds = array<i64: 1, 36, 1>}, {pipeline_mode = #tpu.pipeline_mode<synchronous>, transform_indices = @transform_1, window_bounds = array<i64: 4, 36>}, {pipeline_mode = #tpu.pipeline_mode<synchronous>, transform_indices = @transform_2, window_bounds = array<i64: 4, 1>}, {transform_indices = @transform_3, window_bounds = array<i64: 1, 4, 1>}]} {
    %c0 = arith.constant 0 : index
    %c0_0 = arith.constant 0 : index
    %0 = vector.load %arg3[%c0, %c0_0] : memref<4x36xbf16, #tpu.memory_space<vmem>>, vector<4x36xbf16>
    %c0_1 = arith.constant 0 : index
    %c0_2 = arith.constant 0 : index
    %c0_3 = arith.constant 0 : index
    %1 = vector.load %arg2[%c0_1, %c0_2, %c0_3] : memref<1x36x1xbf16, #tpu.memory_space<vmem>>, vector<1x36x1xbf16>
    %2 = vector.shape_cast %1 : vector<1x36x1xbf16> to vector<36x1xbf16>
    %cst = arith.constant dense<0.000000e+00> : vector<4x1xf32>
    %3 = tpu.matmul %0, %2, %cst {dimension_numbers = #tpu.dot_dimension_numbers<[1], [0], [0], [1], [0, 0, 1, 1], [], []>} : vector<4x36xbf16>, vector<36x1xbf16>, vector<4x1xf32> -> vector<4x1xf32>
    %c0_4 = arith.constant 0 : index
    %c0_5 = arith.constant 0 : index
    %4 = vector.load %arg4[%c0_4, %c0_5] : memref<4x1xf32, #tpu.memory_space<vmem>>, vector<4x1xf32>
    %5 = arith.addf %3, %4 : vector<4x1xf32>
    %6 = arith.truncf %5 : vector<4x1xf32> to vector<4x1xbf16>
    %c0_6 = arith.constant 0 : index
    %c0_7 = arith.constant 0 : index
    %c0_8 = arith.constant 0 : index
    %7 = vector.load %arg5[%c0_6, %c0_7, %c0_8] : memref<1x4x1xbf16, #tpu.memory_space<vmem>>, vector<1x4x1xbf16>
    %8 = vector.shape_cast %7 : vector<1x4x1xbf16> to vector<4x1xbf16>
    %9 = vector.shape_cast %6 : vector<4x1xbf16> to vector<1x4x1xbf16>
    tpu.vector_store %arg5[%c0_6, %c0_7, %c0_8], %9 {strides = array<i32>} : memref<1x4x1xbf16, #tpu.memory_space<vmem>>, vector<1x4x1xbf16>,
    return
  }
  func.func @transform_0(%arg0: i32, %arg1: i32) -> (i32, i32, i32) {
    %c0_i32 = arith.constant 0 : i32
    %c0_i32_0 = arith.constant 0 : i32
    return %arg0, %c0_i32, %arg1 : i32, i32, i32
  }
  func.func @transform_1(%arg0: i32, %arg1: i32) -> (i32, i32) {
    %c0_i32 = arith.constant 0 : i32
    %c0_i32_0 = arith.constant 0 : i32
    %c0_i32_1 = arith.constant 0 : i32
    return %c0_i32, %c0_i32_0 : i32, i32
  }
  func.func @transform_2(%arg0: i32, %arg1: i32) -> (i32, i32) {
    %c0_i32 = arith.constant 0 : i32
    %c0_i32_0 = arith.constant 0 : i32
    %c0_i32_1 = arith.constant 0 : i32
    return %c0_i32, %c0_i32_0 : i32, i32
  }
  func.func @transform_3(%arg0: i32, %arg1: i32) -> (i32, i32, i32) {
    %c0_i32 = arith.constant 0 : i32
    %c0_i32_0 = arith.constant 0 : i32
    return %arg0, %c0_i32, %arg1 : i32, i32, i32
  }
}

module attributes {stable_mosaic.version = 11 : i64} {
  func.func @resize_kernel(%arg0: i32, %arg1: memref<16x1xbf16, #tpu.memory_space<vmem>>, %arg2: memref<1x1x1xbf16, #tpu.memory_space<vmem>>, %arg3: memref<1x16xbf16, #tpu.memory_space<vmem>>, %arg4: memref<1x16x16xbf16, #tpu.memory_space<vmem>>) attributes {dimension_semantics = [#tpu.dimension_semantics<parallel>], iteration_bounds = array<i64: 8>, scalar_prefetch = 0 : i64, scratch_operands = 0 : i64, tpu.core_type = #tpu.core_type<tc>, window_params = [{pipeline_mode = #tpu.pipeline_mode<synchronous>, transform_indices = @transform_0, window_bounds = array<i64: 16, 1>}, {transform_indices = @transform_1, window_bounds = array<i64: 1, 1, 1>}, {pipeline_mode = #tpu.pipeline_mode<synchronous>, transform_indices = @transform_2, window_bounds = array<i64: 1, 16>}, {transform_indices = @transform_3, window_bounds = array<i64: 1, 16, 16>}]} {
    %c0 = arith.constant 0 : index
    %c0_0 = arith.constant 0 : index
    %0 = vector.load %arg1[%c0, %c0_0] : memref<16x1xbf16, #tpu.memory_space<vmem>>, vector<16x1xbf16>
    %c0_1 = arith.constant 0 : index
    %c0_2 = arith.constant 0 : index
    %c0_3 = arith.constant 0 : index
    %1 = vector.load %arg2[%c0_1, %c0_2, %c0_3] : memref<1x1x1xbf16, #tpu.memory_space<vmem>>, vector<1x1x1xbf16>
    %2 = vector.shape_cast %1 : vector<1x1x1xbf16> to vector<1x1xbf16>
    %cst = arith.constant dense<0.000000e+00> : vector<16x1xf32>
    %3 = tpu.matmul %0, %2, %cst {dimension_numbers = #tpu.dot_dimension_numbers<[1], [0], [0], [1], [0, 0, 1, 1], [], []>} : vector<16x1xbf16>, vector<1x1xbf16>, vector<16x1xf32> -> vector<16x1xf32>
    %4 = arith.truncf %3 : vector<16x1xf32> to vector<16x1xbf16>
    %c0_4 = arith.constant 0 : index
    %c0_5 = arith.constant 0 : index
    %5 = vector.load %arg3[%c0_4, %c0_5] : memref<1x16xbf16, #tpu.memory_space<vmem>>, vector<1x16xbf16>
    %cst_6 = arith.constant dense<0.000000e+00> : vector<16x16xf32>
    %6 = tpu.matmul %4, %5, %cst_6 {dimension_numbers = #tpu.dot_dimension_numbers<[1], [0], [0], [1], [0, 0, 1, 1], [], []>} : vector<16x1xbf16>, vector<1x16xbf16>, vector<16x16xf32> -> vector<16x16xf32>
    %7 = arith.truncf %6 : vector<16x16xf32> to vector<16x16xbf16>
    %c0_7 = arith.constant 0 : index
    %c0_8 = arith.constant 0 : index
    %c0_9 = arith.constant 0 : index
    %8 = vector.load %arg4[%c0_7, %c0_8, %c0_9] : memref<1x16x16xbf16, #tpu.memory_space<vmem>>, vector<1x16x16xbf16>
    %9 = vector.shape_cast %8 : vector<1x16x16xbf16> to vector<16x16xbf16>
    %10 = vector.shape_cast %7 : vector<16x16xbf16> to vector<1x16x16xbf16>
    tpu.vector_store %arg4[%c0_7, %c0_8, %c0_9], %10 {strides = array<i32>} : memref<1x16x16xbf16, #tpu.memory_space<vmem>>, vector<1x16x16xbf16>,
    return
  }
  func.func @transform_0(%arg0: i32) -> (i32, i32) {
    %c0_i32 = arith.constant 0 : i32
    %c0_i32_0 = arith.constant 0 : i32
    %c0_i32_1 = arith.constant 0 : i32
    return %c0_i32, %c0_i32_0 : i32, i32
  }
  func.func @transform_1(%arg0: i32) -> (i32, i32, i32) {
    %c0_i32 = arith.constant 0 : i32
    %c0_i32_0 = arith.constant 0 : i32
    %c0_i32_1 = arith.constant 0 : i32
    return %arg0, %c0_i32, %c0_i32_0 : i32, i32, i32
  }
  func.func @transform_2(%arg0: i32) -> (i32, i32) {
    %c0_i32 = arith.constant 0 : i32
    %c0_i32_0 = arith.constant 0 : i32
    %c0_i32_1 = arith.constant 0 : i32
    return %c0_i32, %c0_i32_0 : i32, i32
  }
  func.func @transform_3(%arg0: i32) -> (i32, i32, i32) {
    %c0_i32 = arith.constant 0 : i32
    %c0_i32_0 = arith.constant 0 : i32
    %c0_i32_1 = arith.constant 0 : i32
    return %arg0, %c0_i32, %c0_i32_0 : i32, i32, i32
  }
}

module attributes {stable_mosaic.version = 11 : i64} {
  func.func @final_kernel(%arg0: i32, %arg1: i32, %arg2: memref<1x16x256xf32, #tpu.memory_space<vmem>>, %arg3: memref<1x4x256xbf16, #tpu.memory_space<vmem>>, %arg4: memref<1x4x256xbf16, #tpu.memory_space<vmem>>, %arg5: memref<16x4xbf16, #tpu.memory_space<vmem>>, %arg6: memref<16x1xf32, #tpu.memory_space<vmem>>, %arg7: memref<1x16x256xf32, #tpu.memory_space<vmem>>) attributes {dimension_semantics = [#tpu.dimension_semantics<parallel>, #tpu.dimension_semantics<parallel>], iteration_bounds = array<i64: 2, 1>, scalar_prefetch = 0 : i64, scratch_operands = 0 : i64, tpu.core_type = #tpu.core_type<tc>, window_params = [{transform_indices = @transform_0, window_bounds = array<i64: 1, 16, 256>}, {transform_indices = @transform_1, window_bounds = array<i64: 1, 4, 256>}, {transform_indices = @transform_2, window_bounds = array<i64: 1, 4, 256>}, {pipeline_mode = #tpu.pipeline_mode<synchronous>, transform_indices = @transform_3, window_bounds = array<i64: 16, 4>}, {pipeline_mode = #tpu.pipeline_mode<synchronous>, transform_indices = @transform_4, window_bounds = array<i64: 16, 1>}, {transform_indices = @transform_5, window_bounds = array<i64: 1, 16, 256>}]} {
    %c0 = arith.constant 0 : index
    %c0_0 = arith.constant 0 : index
    %c0_1 = arith.constant 0 : index
    %0 = vector.load %arg3[%c0, %c0_0, %c0_1] : memref<1x4x256xbf16, #tpu.memory_space<vmem>>, vector<1x4x256xbf16>
    %1 = vector.shape_cast %0 : vector<1x4x256xbf16> to vector<4x256xbf16>
    %c0_2 = arith.constant 0 : index
    %c0_3 = arith.constant 0 : index
    %c0_4 = arith.constant 0 : index
    %2 = vector.load %arg4[%c0_2, %c0_3, %c0_4] : memref<1x4x256xbf16, #tpu.memory_space<vmem>>, vector<1x4x256xbf16>
    %3 = vector.shape_cast %2 : vector<1x4x256xbf16> to vector<4x256xbf16>
    %4 = arith.addf %1, %3 : vector<4x256xbf16>
    %c0_5 = arith.constant 0 : index
    %c0_6 = arith.constant 0 : index
    %5 = vector.load %arg5[%c0_5, %c0_6] : memref<16x4xbf16, #tpu.memory_space<vmem>>, vector<16x4xbf16>
    %cst = arith.constant dense<0.000000e+00> : vector<16x256xf32>
    %6 = tpu.matmul %5, %4, %cst {dimension_numbers = #tpu.dot_dimension_numbers<[1], [0], [0], [1], [0, 0, 1, 1], [], []>} : vector<16x4xbf16>, vector<4x256xbf16>, vector<16x256xf32> -> vector<16x256xf32>
    %c0_7 = arith.constant 0 : index
    %c0_8 = arith.constant 0 : index
    %7 = vector.load %arg6[%c0_7, %c0_8] : memref<16x1xf32, #tpu.memory_space<vmem>>, vector<16x1xf32>
    %8 = vector.broadcast %7 : vector<16x1xf32> to vector<16x256xf32>
    %9 = arith.addf %6, %8 : vector<16x256xf32>
    %10 = arith.negf %9 : vector<16x256xf32>
    %11 = math.exp %10 : vector<16x256xf32>
    %cst_9 = arith.constant 1.000000e+00 : f32
    %12 = vector.broadcast %cst_9 : f32 to vector<16x256xf32>
    %13 = arith.addf %12, %11 : vector<16x256xf32>
    %14 = arith.divf %12, %13 : vector<16x256xf32>
    %c0_10 = arith.constant 0 : index
    %c0_11 = arith.constant 0 : index
    %c0_12 = arith.constant 0 : index
    %15 = vector.load %arg2[%c0_10, %c0_11, %c0_12] : memref<1x16x256xf32, #tpu.memory_space<vmem>>, vector<1x16x256xf32>
    %16 = vector.shape_cast %15 : vector<1x16x256xf32> to vector<16x256xf32>
    %17 = arith.mulf %16, %14 : vector<16x256xf32>
    %c0_13 = arith.constant 0 : index
    %c0_14 = arith.constant 0 : index
    %c0_15 = arith.constant 0 : index
    %18 = vector.load %arg7[%c0_13, %c0_14, %c0_15] : memref<1x16x256xf32, #tpu.memory_space<vmem>>, vector<1x16x256xf32>
    %19 = vector.shape_cast %18 : vector<1x16x256xf32> to vector<16x256xf32>
    %20 = vector.shape_cast %17 : vector<16x256xf32> to vector<1x16x256xf32>
    tpu.vector_store %arg7[%c0_13, %c0_14, %c0_15], %20 {strides = array<i32>} : memref<1x16x256xf32, #tpu.memory_space<vmem>>, vector<1x16x256xf32>,
    return
  }
  func.func @transform_0(%arg0: i32, %arg1: i32) -> (i32, i32, i32) {
    %c0_i32 = arith.constant 0 : i32
    %c0_i32_0 = arith.constant 0 : i32
    return %arg0, %c0_i32, %arg1 : i32, i32, i32
  }
  func.func @transform_1(%arg0: i32, %arg1: i32) -> (i32, i32, i32) {
    %c0_i32 = arith.constant 0 : i32
    %c0_i32_0 = arith.constant 0 : i32
    return %arg0, %c0_i32, %arg1 : i32, i32, i32
  }
  func.func @transform_2(%arg0: i32, %arg1: i32) -> (i32, i32, i32) {
    %c0_i32 = arith.constant 0 : i32
    %c0_i32_0 = arith.constant 0 : i32
    return %arg0, %c0_i32, %arg1 : i32, i32, i32
  }
  func.func @transform_3(%arg0: i32, %arg1: i32) -> (i32, i32) {
    %c0_i32 = arith.constant 0 : i32
    %c0_i32_0 = arith.constant 0 : i32
    %c0_i32_1 = arith.constant 0 : i32
    return %c0_i32, %c0_i32_0 : i32, i32
  }
  func.func @transform_4(%arg0: i32, %arg1: i32) -> (i32, i32) {
    %c0_i32 = arith.constant 0 : i32
    %c0_i32_0 = arith.constant 0 : i32
    %c0_i32_1 = arith.constant 0 : i32
    return %c0_i32, %c0_i32_0 : i32, i32
  }
  func.func @transform_5(%arg0: i32, %arg1: i32) -> (i32, i32, i32) {
    %c0_i32 = arith.constant 0 : i32
    %c0_i32_0 = arith.constant 0 : i32
    return %arg0, %c0_i32, %arg1 : i32, i32, i32
  }
}

</mosaic_0001>

<llo_original>
// kernel: esa_forward.9
$region0: #{esa_forward.9}
  #allocation0 [shape = 'u32[]', space=smem, size = 0x4, offset = 0x4, fixed_abs, tag = 'smem constant byte address 0x4 - core index']
  #allocation1 [shape = 'u32[144,128]{1,0:T(1,128)}', space=vmem, size = 0x12000, scoped, tag = 'internal scratch']
  %s0 = inlined_call_operand.vmem [shape: f32[2,16,256], index: 0, kind: input, shape index: {}]
  %s1 = inlined_call_operand.vmem [shape: f32[8,16], index: 1, kind: input, shape index: {}]
  %s2 = inlined_call_operand.vmem [shape: f32[8,1], index: 2, kind: input, shape index: {}]
  %s3 = inlined_call_operand.vmem [shape: bf16[2,4,256], index: 3, kind: output, shape index: {0}]
  %s4 = inlined_call_operand.vmem [shape: bf16[2,4,256], index: 4, kind: output, shape index: {1}]
  %5 = xla_tuple %s3, %s4
  %s6 = sld [smem:[#allocation0]]
  $region53: #{esa_forward.9} parent=0
    _
  %s8 = ssub.s32 1, %s6
  %s9 = scalar_select 0, %s8, %s6
  loop: start=0, step=1, limit=4
  $region2: #{esa_forward.9} parent=0 // loop_pre_header
    _
  $region3: #{esa_forward.9} parent=0 // loop_header
    %s11 = sphi 0, %s15
    %p12 = scmp.ge.s32.totalorder %s11, 4
    %s18 = sphi 0, %s30
    %s19 = sphi 0, %s26
    %s20 = sphi 0, %s18
    %s21 = sphi 0, %s19
    %s22 = sphi 0, %s20
    %s23 = sphi 0, %s21
    %s35 = sphi 0, %s37
    %s38 = sphi 0, %s35
    %s39 = sphi 0, %s38
    %s55 = sphi 0, %s39
    %s59 = sphi 0, %s59
    %s61 = sphi 0, %s59
    %s62 = sphi 0, %s61
    %s76 = sphi 0, %s62
    %s80 = sphi 0, %s80
    %s82 = sphi 0, %s80
    %s83 = sphi 0, %s82
    %s97 = sphi 0, %s83
    %s105 = sphi 0, %s107
    %s108 = sphi 0, %s105
    %s109 = sphi 0, %s108
    %s125 = sphi 0, %s109
    %s133 = sphi 0, %s135
    %s136 = sphi 0, %s133
    %s137 = sphi 0, %s136
    %s153 = sphi 0, %s137
  $region4: #{esa_forward.9} parent=0 // loop_header_branch
    %14 = sbr.rel (%p12) target = $region8
  $region5: #{esa_forward.9} parent=0 // loop_body
    %s16 = ssub.s32 %s11, 1
    %s17 = ssub.s32 %s11, 2
    %s24 = sadd.s32 1, %s19
    %p25 = scmp.ge.s32.totalorder %s24, 1
    %s26 = scalar_select %p25, 0, %s24
    %s27 = sadd.s32 1, %s18
    %s28 = scalar_select %p25, %s27, %s18
    %p29 = scmp.ge.s32.totalorder %s28, 2
    %s30 = scalar_select %p29, 0, %s28
    %s31 = ssub.s32 %s18, %s30
    %s32 = ssub.s32 %s19, %s26
    %s33 = sor.u32 %s31, %s32
    %p34 = scmp.eq.s32.totalorder %s33, 0
    %s36 = sadd.s32 %s35, 1
    %s37 = scalar_select %p34, %s35, %s36
    %p40 = pneg %p34
    %p41 = scmp.eq.s32.totalorder %s11, 1
    %p42 = por %p40, %p41
    %p43 = scmp.ne.s32.totalorder %s35, %s38
    %p44 = scmp.eq.s32.totalorder %s11, 0
    %p45 = por %p43, %p44
    %p46 = scmp.ne.s32.totalorder %s35, %s38
    %p47 = scmp.eq.s32.totalorder %s16, 1
    %p48 = por %p46, %p47
    %p49 = scmp.ne.s32.totalorder %s38, %s39
    %p50 = scmp.eq.s32.totalorder %s16, 0
    %p51 = por %p49, %p50
    %p52 = scmp.ne.s32.totalorder %s38, %s39
    %p53 = scmp.eq.s32.totalorder %s17, 1
    %p54 = por %p52, %p53
    %p56 = scmp.ne.s32.totalorder %s39, %s55
    %p57 = scmp.eq.s32.totalorder %s17, 0
    %p58 = por %p56, %p57
    %s60 = sadd.s32 %s59, 1
    %p63 = scmp.eq.s32.totalorder %s11, 1
    %p64 = scmp.ne.s32.totalorder %s59, %s61
    %p65 = scmp.eq.s32.totalorder %s11, 0
    %p66 = por %p64, %p65
    %p67 = scmp.ne.s32.totalorder %s59, %s61
    %p68 = scmp.eq.s32.totalorder %s16, 1
    %p69 = por %p67, %p68
    %p70 = scmp.ne.s32.totalorder %s61, %s62
    %p71 = scmp.eq.s32.totalorder %s16, 0
    %p72 = por %p70, %p71
    %p73 = scmp.ne.s32.totalorder %s61, %s62
    %p74 = scmp.eq.s32.totalorder %s17, 1
    %p75 = por %p73, %p74
    %p77 = scmp.ne.s32.totalorder %s62, %s76
    %p78 = scmp.eq.s32.totalorder %s17, 0
    %p79 = por %p77, %p78
    %s81 = sadd.s32 %s80, 1
    %p84 = scmp.eq.s32.totalorder %s11, 1
    %p85 = scmp.ne.s32.totalorder %s80, %s82
    %p86 = scmp.eq.s32.totalorder %s11, 0
    %p87 = por %p85, %p86
    %p88 = scmp.ne.s32.totalorder %s80, %s82
    %p89 = scmp.eq.s32.totalorder %s16, 1
    %p90 = por %p88, %p89
    %p91 = scmp.ne.s32.totalorder %s82, %s83
    %p92 = scmp.eq.s32.totalorder %s16, 0
    %p93 = por %p91, %p92
    %p94 = scmp.ne.s32.totalorder %s82, %s83
    %p95 = scmp.eq.s32.totalorder %s17, 1
    %p96 = por %p94, %p95
    %p98 = scmp.ne.s32.totalorder %s83, %s97
    %p99 = scmp.eq.s32.totalorder %s17, 0
    %p100 = por %p98, %p99
    %s101 = ssub.s32 %s18, %s30
    %s102 = ssub.s32 %s19, %s26
    %s103 = sor.u32 %s101, %s102
    %p104 = scmp.eq.s32.totalorder %s103, 0
    %s106 = sadd.s32 %s105, 1
    %s107 = scalar_select %p104, %s105, %s106
    %p110 = pneg %p104
    %p111 = scmp.eq.s32.totalorder %s11, 1
    %p112 = por %p110, %p111
    %p113 = scmp.ne.s32.totalorder %s105, %s108
    %p114 = scmp.eq.s32.totalorder %s11, 0
    %p115 = por %p113, %p114
    %p116 = scmp.ne.s32.totalorder %s105, %s108
    %p117 = scmp.eq.s32.totalorder %s16, 1
    %p118 = por %p116, %p117
    %p119 = scmp.ne.s32.totalorder %s108, %s109
    %p120 = scmp.eq.s32.totalorder %s16, 0
    %p121 = por %p119, %p120
    %p122 = scmp.ne.s32.totalorder %s108, %s109
    %p123 = scmp.eq.s32.totalorder %s17, 1
    %p124 = por %p122, %p123
    %p126 = scmp.ne.s32.totalorder %s109, %s125
    %p127 = scmp.eq.s32.totalorder %s17, 0
    %p128 = por %p126, %p127
    %s129 = ssub.s32 %s18, %s30
    %s130 = ssub.s32 %s19, %s26
    %s131 = sor.u32 %s129, %s130
    %p132 = scmp.eq.s32.totalorder %s131, 0
    %s134 = sadd.s32 %s133, 1
    %s135 = scalar_select %p132, %s133, %s134
    %p138 = pneg %p132
    %p139 = scmp.eq.s32.totalorder %s11, 1
    %p140 = por %p138, %p139
    %p141 = scmp.ne.s32.totalorder %s133, %s136
    %p142 = scmp.eq.s32.totalorder %s11, 0
    %p143 = por %p141, %p142
    %p144 = scmp.ne.s32.totalorder %s133, %s136
    %p145 = scmp.eq.s32.totalorder %s16, 1
    %p146 = por %p144, %p145
    %p147 = scmp.ne.s32.totalorder %s136, %s137
    %p148 = scmp.eq.s32.totalorder %s16, 0
    %p149 = por %p147, %p148
    %p150 = scmp.ne.s32.totalorder %s136, %s137
    %p151 = scmp.eq.s32.totalorder %s17, 1
    %p152 = por %p150, %p151
    %p154 = scmp.ne.s32.totalorder %s137, %s153
    %p155 = scmp.eq.s32.totalorder %s17, 0
    %p156 = por %p154, %p155
    %p157 = scmp.le.s32.totalorder 1, %s11
    %p158 = scmp.lt.s32.totalorder %s11, 3
    %p159 = pnand %p157, %p158
    %p160 = pneg %p159
    // Predicated region
    $region9: #{esa_forward.9} parent=5 // pred_check
      _
    $region10: #{esa_forward.9} parent=5 // pred_check_branch
      %162 = sbr.rel (%p159) target = $region12
    $region11: #{esa_forward.9} parent=5 // pred_region
      %s163 = ssub.s32 %s11, 1
      // Predicated region
      $region13: #{esa_forward.9} parent=11 // pred_check
        %p164 = pneg %p72
      $region14: #{esa_forward.9} parent=11 // pred_check_branch
        %166 = sbr.rel (%p164) target = $region16
      $region15: #{esa_forward.9} parent=11 // pred_region
        _
      $region16: #{esa_forward.9} parent=11 // pred_fallthru
        _
      // Predicated region
      $region17: #{esa_forward.9} parent=11 // pred_check
        %p167 = pneg %p93
      $region18: #{esa_forward.9} parent=11 // pred_check_branch
        %169 = sbr.rel (%p167) target = $region20
      $region19: #{esa_forward.9} parent=11 // pred_region
        _
      $region20: #{esa_forward.9} parent=11 // pred_fallthru
        _
    $region12: #{esa_forward.9} parent=5 // pred_fallthru
      _
    %p170 = scmp.lt.s32.totalorder %s11, 2
    // Predicated region
    $region21: #{esa_forward.9} parent=5 // pred_check
      %p171 = pneg %p170
    $region22: #{esa_forward.9} parent=5 // pred_check_branch
      %173 = sbr.rel (%p171) target = $region24
    $region23: #{esa_forward.9} parent=5 // pred_region
      // Predicated region
      $region25: #{esa_forward.9} parent=23 // pred_check
        %p174 = pneg %p45
      $region26: #{esa_forward.9} parent=23 // pred_check_branch
        %176 = sbr.rel (%p174) target = $region28
      $region27: #{esa_forward.9} parent=23 // pred_region
        %s177 = smul.u32 2, %s19
        %p178 = scmp.lt.s32.totalorder %s18, 1
        %s179 = scalar_select %p178, %s18, 1
        %p180 = scmp.lt.s32.totalorder %s177, 1
        %s181 = scalar_select %p180, %s177, 1
        %s182 = smul.addr %s179, 4
        %s183 = sadd.s32 %s181, %s182
        %s184 = smul.addr %s183, 8
        %s185 = scalar_lea.vmem %s0, %s184
        %s186 = smul.u32 2, %s19
      $region28: #{esa_forward.9} parent=23 // pred_fallthru
        _
    $region24: #{esa_forward.9} parent=5 // pred_fallthru
      _
    %p187 = scmp.le.s32.totalorder 1, %s11
    %p188 = scmp.lt.s32.totalorder %s11, 3
    %p189 = pnand %p187, %p188
    %p190 = pneg %p189
    // Predicated region
    $region29: #{esa_forward.9} parent=5 // pred_check
      _
    $region30: #{esa_forward.9} parent=5 // pred_check_branch
      %192 = sbr.rel (%p189) target = $region32
    $region31: #{esa_forward.9} parent=5 // pred_region
      %s193 = ssub.s32 %s11, 1
      %s194 = smul.u32 2, %s21
      %p195 = scmp.lt.s32.totalorder %s20, 1
      %s196 = scalar_select %p195, %s20, 1
      %p197 = scmp.lt.s32.totalorder %s194, 1
      %s198 = scalar_select %p197, %s194, 1
      %s199 = smul.addr %s196, 4
      %s200 = sadd.s32 %s198, %s199
      %s201 = smul.addr %s200, 8
      %s202 = scalar_lea.vmem %s0, %s201
      %p203 = pneg %p51
      %p204 = pneg %p48
      %p205 = pneg %p72
      %p206 = pneg %p69
      %p207 = pneg %p93
      %p208 = pneg %p90
      %p209 = pneg %p121
      %p210 = pneg %p118
      %s211 = smul.u32 2, %s21
      %p212 = scmp.lt.s32.totalorder %s20, 1
      %s213 = scalar_select %p212, %s20, 1
      %p214 = scmp.lt.s32.totalorder %s211, 1
      %s215 = scalar_select %p214, %s211, 1
      %s216 = smul.addr %s213, 2
      %s217 = sadd.s32 %s215, %s216
      %s218 = smul.addr %s217, 2
      %s219 = scalar_lea.vmem %s3, %s218
      %p220 = pneg %p149
      %p221 = pneg %p146
      %s222 = smul.u32 2, %s21
      %p223 = scmp.lt.s32.totalorder %s20, 1
      %s224 = scalar_select %p223, %s20, 1
      %p225 = scmp.lt.s32.totalorder %s222, 1
      %s226 = scalar_select %p225, %s222, 1
      %s227 = smul.addr %s224, 2
      %s228 = sadd.s32 %s226, %s227
      %s229 = smul.addr %s228, 2
      %s230 = scalar_lea.vmem %s4, %s229
      %s231 = smul.u32 2, %s21
      %p232 = scmp.lt.s32.totalorder %s20, 1
      %s233 = scalar_select %p232, %s20, 1
      %p234 = scmp.lt.s32.totalorder %s231, 1
      %s235 = scalar_select %p234, %s231, 1
      %s236 = smul.addr %s233, 4
      %s237 = sadd.s32 %s235, %s236
      %s238 = smul.addr %s237, 8
      %s239 = scalar_lea.vmem %s0, %s238
      %s240 = smul.u32 2, %s21
      %s241 = smul.u32 2, %s21
      %p242 = scmp.lt.s32.totalorder %s20, 1
      %s243 = scalar_select %p242, %s20, 1
      %p244 = scmp.lt.s32.totalorder %s241, 1
      %s245 = scalar_select %p244, %s241, 1
      %s246 = smul.addr %s243, 2
      %s247 = sadd.s32 %s245, %s246
      %s248 = smul.addr %s247, 2
      %s249 = scalar_lea.vmem %s3, %s248
      %s250 = smul.u32 2, %s21
      %s251 = smul.u32 2, %s21
      %p252 = scmp.lt.s32.totalorder %s20, 1
      %s253 = scalar_select %p252, %s20, 1
      %p254 = scmp.lt.s32.totalorder %s251, 1
      %s255 = scalar_select %p254, %s251, 1
      %s256 = smul.addr %s253, 2
      %s257 = sadd.s32 %s255, %s256
      %s258 = smul.addr %s257, 2
      %s259 = scalar_lea.vmem %s4, %s258
      %s260 = smul.u32 2, %s21
      %v261 = vld [vmem:[%s1] sm:$0xff]
      %v262 = vld [vmem:[%s239] sm:$0xff]
      %v263 = vld [vmem:[%s239 + $0x8] sm:$0xff]
      %v264 = vld [vmem:[%s239 + $0x10] sm:$0xff]
      %v265 = vld [vmem:[%s239 + $0x18] sm:$0xff]
      %v266 = vld [vmem:[%s2] sm:$0xff]
      %268 = vset.pattern.permute.xlu0 0
      %269 = vperm.xlu0 %268, %v266
      %v270 = vpop.permute.xlu0 %269
      %vm272 = vcmask 130048
      %v274 = vsel %vm272, %v261, 0
      %276 = vmatprep.subr.mxu0 %v263
      %277 = vmatpush1.msra.mxu0 %v262
      %278 = vmatprep.subr.mxu0 %v265
      %279 = vmatpush1.msra.mxu0 %v264
      %280 = vmatprep.subr.mxu0 0.0
      %281 = vmatpush1.msra.mxu0 0.0
      %282 = vmatprep.subr.mxu0 0.0
      %283 = vmatpush1.msra.mxu0 0.0
      %284 = vmatprep.subr.mxu0 0.0
      %285 = vmatpush1.msra.mxu0 0.0
      %286 = vmatprep.subr.mxu0 0.0
      %287 = vmatpush1.msra.mxu0 0.0
      %288 = vmatprep.subr.mxu0 0.0
      %289 = vmatpush1.msra.mxu0 0.0
      %290 = vmatprep.subr.mxu0 0.0
      %291 = vmatpush1.msra.mxu0 0.0
      %292 = vmatprep.subr.mxu0 0.0
      %293 = vmatpush1.msra.mxu0 0.0
      %294 = vmatprep.subr.mxu0 0.0
      %295 = vmatpush1.msra.mxu0 0.0
      %296 = vmatprep.subr.mxu0 0.0
      %297 = vmatpush1.msra.mxu0 0.0
      %298 = vmatprep.subr.mxu0 0.0
      %299 = vmatpush1.msra.mxu0 0.0
      %300 = vmatprep.subr.mxu0 0.0
      %301 = vmatpush1.msra.mxu0 0.0
      %302 = vmatprep.subr.mxu0 0.0
      %303 = vmatpush1.msra.mxu0 0.0
      %304 = vmatprep.subr.mxu0 0.0
      %305 = vmatpush1.msra.mxu0 0.0
      %306 = vmatprep.subr.mxu0 0.0
      %307 = vmatpush1.msra.mxu0 0.0
      %308 = vmatprep.subr.mxu0 0.0
      %309 = vmatpush1.msra.mxu0 0.0
      %310 = vmatprep.subr.mxu0 0.0
      %311 = vmatpush1.msra.mxu0 0.0
      %312 = vmatprep.subr.mxu0 0.0
      %313 = vmatpush1.msra.mxu0 0.0
      %314 = vmatprep.subr.mxu0 0.0
      %315 = vmatpush1.msra.mxu0 0.0
      %316 = vmatprep.subr.mxu0 0.0
      %317 = vmatpush1.msra.mxu0 0.0
      %318 = vmatprep.subr.mxu0 0.0
      %319 = vmatpush1.msra.mxu0 0.0
      %320 = vmatprep.subr.mxu0 0.0
      %321 = vmatpush1.msra.mxu0 0.0
      %322 = vmatprep.subr.mxu0 0.0
      %323 = vmatpush1.msra.mxu0 0.0
      %324 = vmatprep.subr.mxu0 0.0
      %325 = vmatpush1.msra.mxu0 0.0
      %326 = vmatprep.subr.mxu0 0.0
      %327 = vmatpush1.msra.mxu0 0.0
      %328 = vmatprep.subr.mxu0 0.0
      %329 = vmatpush1.msra.mxu0 0.0
      %330 = vmatprep.subr.mxu0 0.0
      %331 = vmatpush1.msra.mxu0 0.0
      %332 = vmatprep.subr.mxu0 0.0
      %333 = vmatpush1.msra.mxu0 0.0
      %334 = vmatprep.subr.mxu0 0.0
      %335 = vmatpush1.msra.mxu0 0.0
      %336 = vmatprep.subr.mxu0 0.0
      %337 = vmatpush1.msra.mxu0 0.0
      %338 = vmatprep.subr.mxu0 0.0
      %339 = vmatpush1.msra.mxu0 0.0
      %340 = vmatprep.mubr.f32.mxu0 0.0
      %341 = vmatmul.mubr.f32.gmra.mrb[0].mxu0 %v274
      %v342 = vpop.f32.mrb[0].mxu0
      %v343 = vadd.f32 %v270, %v342
      %v344 = vpop.f32.mrb[0].mxu0
      %v345 = vadd.f32 %v270, %v344
      %346 = vdwg.mxu0
      %v347 = vpack.c.bf16 %v343, %v343
      %v348 = vpack.c.bf16 %v345, %v345
      %v351 = vcombine.low %v347, %v348
      %v353 = vunpack.c.l.s4 1983009808
      %v354 = vunpack.c.0.s8 %v353
      %v355 = vlaneseq
      %v356 = vshrl.u32 %v355, 7
      %v357 = vsub.s32 %v354, %v356
      %v358 = vrot.slane %v351, %v357
      %360 = vst [vmem:[%s249] sm:$0xf] %v358
      %v361 = vcombine.high %v358, %v358
      %363 = vst [vmem:[%s259] sm:$0xf] %v361
      %s364 = smul.u32 2, %s21
      %p365 = scmp.lt.s32.totalorder %s20, 1
      %s366 = scalar_select %p365, %s20, 1
      %p367 = scmp.lt.s32.totalorder %s364, 1
      %s368 = scalar_select %p367, %s364, 1
      %s369 = smul.addr %s366, 2
      %s370 = sadd.s32 %s368, %s369
      %s371 = smul.addr %s370, 2
      %s372 = scalar_lea.vmem %s3, %s371
      %s373 = smul.u32 2, %s21
      %p374 = scmp.lt.s32.totalorder %s20, 1
      %s375 = scalar_select %p374, %s20, 1
      %p376 = scmp.lt.s32.totalorder %s373, 1
      %s377 = scalar_select %p376, %s373, 1
      %s378 = smul.addr %s375, 2
      %s379 = sadd.s32 %s377, %s378
      %s380 = smul.addr %s379, 2
      %s381 = scalar_lea.vmem %s4, %s380
      // Predicated region
      $region33: #{esa_forward.9} parent=31 // pred_check
        %p382 = pneg %p118
      $region34: #{esa_forward.9} parent=31 // pred_check_branch
        %384 = sbr.rel (%p382) target = $region36
      $region35: #{esa_forward.9} parent=31 // pred_region
        %s385 = smul.u32 2, %s21
      $region36: #{esa_forward.9} parent=31 // pred_fallthru
        _
      // Predicated region
      $region37: #{esa_forward.9} parent=31 // pred_check
        %p386 = pneg %p146
      $region38: #{esa_forward.9} parent=31 // pred_check_branch
        %388 = sbr.rel (%p386) target = $region40
      $region39: #{esa_forward.9} parent=31 // pred_region
        %s389 = smul.u32 2, %s21
      $region40: #{esa_forward.9} parent=31 // pred_fallthru
        _
    $region32: #{esa_forward.9} parent=5 // pred_fallthru
      _
    %p390 = scmp.le.s32.totalorder 2, %s11
    // Predicated region
    $region41: #{esa_forward.9} parent=5 // pred_check
      %p391 = pneg %p390
    $region42: #{esa_forward.9} parent=5 // pred_check_branch
      %393 = sbr.rel (%p391) target = $region44
    $region43: #{esa_forward.9} parent=5 // pred_region
      %s394 = ssub.s32 %s11, 2
      // Predicated region
      $region45: #{esa_forward.9} parent=43 // pred_check
        %p395 = pneg %p124
      $region46: #{esa_forward.9} parent=43 // pred_check_branch
        %397 = sbr.rel (%p395) target = $region48
      $region47: #{esa_forward.9} parent=43 // pred_region
        %s398 = smul.u32 2, %s23
        %p399 = scmp.lt.s32.totalorder %s22, 1
        %s400 = scalar_select %p399, %s22, 1
        %p401 = scmp.lt.s32.totalorder %s398, 1
        %s402 = scalar_select %p401, %s398, 1
        %s403 = smul.addr %s400, 2
        %s404 = sadd.s32 %s402, %s403
        %s405 = smul.addr %s404, 2
        %s406 = scalar_lea.vmem %s3, %s405
      $region48: #{esa_forward.9} parent=43 // pred_fallthru
        _
      // Predicated region
      $region49: #{esa_forward.9} parent=43 // pred_check
        %p407 = pneg %p152
      $region50: #{esa_forward.9} parent=43 // pred_check_branch
        %409 = sbr.rel (%p407) target = $region52
      $region51: #{esa_forward.9} parent=43 // pred_region
        %s410 = smul.u32 2, %s23
        %p411 = scmp.lt.s32.totalorder %s22, 1
        %s412 = scalar_select %p411, %s22, 1
        %p413 = scmp.lt.s32.totalorder %s410, 1
        %s414 = scalar_select %p413, %s410, 1
        %s415 = smul.addr %s412, 2
        %s416 = sadd.s32 %s414, %s415
        %s417 = smul.addr %s416, 2
        %s418 = scalar_lea.vmem %s4, %s417
      $region52: #{esa_forward.9} parent=43 // pred_fallthru
        _
    $region44: #{esa_forward.9} parent=5 // pred_fallthru
      _
  $region6: #{esa_forward.9} parent=0 // loop_footer
    %s15 = sadd.s32 1, %s11
  $region7: #{esa_forward.9} parent=0 // loop_footer_branch
    %10 = sbr.rel target = $region3
  $region8: #{esa_forward.9} parent=0 // loop_exit
    _

// kernel: esa_forward.10
$region0: #{esa_forward.10}
  #allocation0 [shape = 'u32[]', space=smem, size = 0x4, offset = 0x4, fixed_abs, tag = 'smem constant byte address 0x4 - core index']
  #allocation1 [shape = 'u32[144,128]{1,0:T(1,128)}', space=vmem, size = 0x12000, scoped, tag = 'internal scratch']
  %s0 = inlined_call_operand.vmem [shape: bf16[2,36,49], index: 0, kind: input, shape index: {}]
  %s1 = inlined_call_operand.vmem [shape: bf16[4,36], index: 1, kind: input, shape index: {}]
  %s2 = inlined_call_operand.vmem [shape: f32[4,1], index: 2, kind: input, shape index: {}]
  %s3 = inlined_call_operand.vmem [shape: bf16[2,4,49], index: 3, kind: output, shape index: {}]
  %s4 = sld [smem:[#allocation0]]
  $region45: #{esa_forward.10} parent=0
    _
  %s6 = ssub.s32 1, %s4
  %s7 = scalar_select 0, %s6, %s4
  loop: start=0, step=1, limit=4
  $region2: #{esa_forward.10} parent=0 // loop_pre_header
    _
  $region3: #{esa_forward.10} parent=0 // loop_header
    %s9 = sphi 0, %s13
    %p10 = scmp.ge.s32.totalorder %s9, 4
    %s16 = sphi 0, %s28
    %s17 = sphi 0, %s24
    %s18 = sphi 0, %s16
    %s19 = sphi 0, %s17
    %s20 = sphi 0, %s18
    %s21 = sphi 0, %s19
    %s33 = sphi 0, %s35
    %s36 = sphi 0, %s33
    %s37 = sphi 0, %s36
    %s53 = sphi 0, %s37
    %s57 = sphi 0, %s57
    %s59 = sphi 0, %s57
    %s60 = sphi 0, %s59
    %s74 = sphi 0, %s60
    %s78 = sphi 0, %s78
    %s80 = sphi 0, %s78
    %s81 = sphi 0, %s80
    %s95 = sphi 0, %s81
    %s103 = sphi 0, %s105
    %s106 = sphi 0, %s103
    %s107 = sphi 0, %s106
    %s123 = sphi 0, %s107
  $region4: #{esa_forward.10} parent=0 // loop_header_branch
    %12 = sbr.rel (%p10) target = $region8
  $region5: #{esa_forward.10} parent=0 // loop_body
    %s14 = ssub.s32 %s9, 1
    %s15 = ssub.s32 %s9, 2
    %s22 = sadd.s32 1, %s17
    %p23 = scmp.ge.s32.totalorder %s22, 1
    %s24 = scalar_select %p23, 0, %s22
    %s25 = sadd.s32 1, %s16
    %s26 = scalar_select %p23, %s25, %s16
    %p27 = scmp.ge.s32.totalorder %s26, 2
    %s28 = scalar_select %p27, 0, %s26
    %s29 = ssub.s32 %s16, %s28
    %s30 = ssub.s32 %s17, %s24
    %s31 = sor.u32 %s29, %s30
    %p32 = scmp.eq.s32.totalorder %s31, 0
    %s34 = sadd.s32 %s33, 1
    %s35 = scalar_select %p32, %s33, %s34
    %p38 = pneg %p32
    %p39 = scmp.eq.s32.totalorder %s9, 1
    %p40 = por %p38, %p39
    %p41 = scmp.ne.s32.totalorder %s33, %s36
    %p42 = scmp.eq.s32.totalorder %s9, 0
    %p43 = por %p41, %p42
    %p44 = scmp.ne.s32.totalorder %s33, %s36
    %p45 = scmp.eq.s32.totalorder %s14, 1
    %p46 = por %p44, %p45
    %p47 = scmp.ne.s32.totalorder %s36, %s37
    %p48 = scmp.eq.s32.totalorder %s14, 0
    %p49 = por %p47, %p48
    %p50 = scmp.ne.s32.totalorder %s36, %s37
    %p51 = scmp.eq.s32.totalorder %s15, 1
    %p52 = por %p50, %p51
    %p54 = scmp.ne.s32.totalorder %s37, %s53
    %p55 = scmp.eq.s32.totalorder %s15, 0
    %p56 = por %p54, %p55
    %s58 = sadd.s32 %s57, 1
    %p61 = scmp.eq.s32.totalorder %s9, 1
    %p62 = scmp.ne.s32.totalorder %s57, %s59
    %p63 = scmp.eq.s32.totalorder %s9, 0
    %p64 = por %p62, %p63
    %p65 = scmp.ne.s32.totalorder %s57, %s59
    %p66 = scmp.eq.s32.totalorder %s14, 1
    %p67 = por %p65, %p66
    %p68 = scmp.ne.s32.totalorder %s59, %s60
    %p69 = scmp.eq.s32.totalorder %s14, 0
    %p70 = por %p68, %p69
    %p71 = scmp.ne.s32.totalorder %s59, %s60
    %p72 = scmp.eq.s32.totalorder %s15, 1
    %p73 = por %p71, %p72
    %p75 = scmp.ne.s32.totalorder %s60, %s74
    %p76 = scmp.eq.s32.totalorder %s15, 0
    %p77 = por %p75, %p76
    %s79 = sadd.s32 %s78, 1
    %p82 = scmp.eq.s32.totalorder %s9, 1
    %p83 = scmp.ne.s32.totalorder %s78, %s80
    %p84 = scmp.eq.s32.totalorder %s9, 0
    %p85 = por %p83, %p84
    %p86 = scmp.ne.s32.totalorder %s78, %s80
    %p87 = scmp.eq.s32.totalorder %s14, 1
    %p88 = por %p86, %p87
    %p89 = scmp.ne.s32.totalorder %s80, %s81
    %p90 = scmp.eq.s32.totalorder %s14, 0
    %p91 = por %p89, %p90
    %p92 = scmp.ne.s32.totalorder %s80, %s81
    %p93 = scmp.eq.s32.totalorder %s15, 1
    %p94 = por %p92, %p93
    %p96 = scmp.ne.s32.totalorder %s81, %s95
    %p97 = scmp.eq.s32.totalorder %s15, 0
    %p98 = por %p96, %p97
    %s99 = ssub.s32 %s16, %s28
    %s100 = ssub.s32 %s17, %s24
    %s101 = sor.u32 %s99, %s100
    %p102 = scmp.eq.s32.totalorder %s101, 0
    %s104 = sadd.s32 %s103, 1
    %s105 = scalar_select %p102, %s103, %s104
    %p108 = pneg %p102
    %p109 = scmp.eq.s32.totalorder %s9, 1
    %p110 = por %p108, %p109
    %p111 = scmp.ne.s32.totalorder %s103, %s106
    %p112 = scmp.eq.s32.totalorder %s9, 0
    %p113 = por %p111, %p112
    %p114 = scmp.ne.s32.totalorder %s103, %s106
    %p115 = scmp.eq.s32.totalorder %s14, 1
    %p116 = por %p114, %p115
    %p117 = scmp.ne.s32.totalorder %s106, %s107
    %p118 = scmp.eq.s32.totalorder %s14, 0
    %p119 = por %p117, %p118
    %p120 = scmp.ne.s32.totalorder %s106, %s107
    %p121 = scmp.eq.s32.totalorder %s15, 1
    %p122 = por %p120, %p121
    %p124 = scmp.ne.s32.totalorder %s107, %s123
    %p125 = scmp.eq.s32.totalorder %s15, 0
    %p126 = por %p124, %p125
    %p127 = scmp.le.s32.totalorder 1, %s9
    %p128 = scmp.lt.s32.totalorder %s9, 3
    %p129 = pnand %p127, %p128
    %p130 = pneg %p129
    // Predicated region
    $region9: #{esa_forward.10} parent=5 // pred_check
      _
    $region10: #{esa_forward.10} parent=5 // pred_check_branch
      %132 = sbr.rel (%p129) target = $region12
    $region11: #{esa_forward.10} parent=5 // pred_region
      %s133 = ssub.s32 %s9, 1
      // Predicated region
      $region13: #{esa_forward.10} parent=11 // pred_check
        %p134 = pneg %p70
      $region14: #{esa_forward.10} parent=11 // pred_check_branch
        %136 = sbr.rel (%p134) target = $region16
      $region15: #{esa_forward.10} parent=11 // pred_region
        _
      $region16: #{esa_forward.10} parent=11 // pred_fallthru
        _
      // Predicated region
      $region17: #{esa_forward.10} parent=11 // pred_check
        %p137 = pneg %p91
      $region18: #{esa_forward.10} parent=11 // pred_check_branch
        %139 = sbr.rel (%p137) target = $region20
      $region19: #{esa_forward.10} parent=11 // pred_region
        _
      $region20: #{esa_forward.10} parent=11 // pred_fallthru
        _
    $region12: #{esa_forward.10} parent=5 // pred_fallthru
      _
    %p140 = scmp.lt.s32.totalorder %s9, 2
    // Predicated region
    $region21: #{esa_forward.10} parent=5 // pred_check
      %p141 = pneg %p140
    $region22: #{esa_forward.10} parent=5 // pred_check_branch
      %143 = sbr.rel (%p141) target = $region24
    $region23: #{esa_forward.10} parent=5 // pred_region
      // Predicated region
      $region25: #{esa_forward.10} parent=23 // pred_check
        %p144 = pneg %p43
      $region26: #{esa_forward.10} parent=23 // pred_check_branch
        %146 = sbr.rel (%p144) target = $region28
      $region27: #{esa_forward.10} parent=23 // pred_region
        %p147 = scmp.lt.s32.totalorder %s16, 1
        %s148 = scalar_select %p147, %s16, 1
        %p149 = scmp.lt.s32.totalorder %s17, 0
        %s150 = scalar_select %p149, %s17, 0
        %s151 = smul.addr %s148, 5
        %s152 = sadd.s32 %s150, %s151
        %s153 = smul.addr %s152, 4
        %s154 = scalar_lea.vmem %s0, %s153
      $region28: #{esa_forward.10} parent=23 // pred_fallthru
        _
    $region24: #{esa_forward.10} parent=5 // pred_fallthru
      _
    %p155 = scmp.le.s32.totalorder 1, %s9
    %p156 = scmp.lt.s32.totalorder %s9, 3
    %p157 = pnand %p155, %p156
    %p158 = pneg %p157
    // Predicated region
    $region29: #{esa_forward.10} parent=5 // pred_check
      _
    $region30: #{esa_forward.10} parent=5 // pred_check_branch
      %160 = sbr.rel (%p157) target = $region32
    $region31: #{esa_forward.10} parent=5 // pred_region
      %s161 = ssub.s32 %s9, 1
      %p162 = scmp.lt.s32.totalorder %s18, 1
      %s163 = scalar_select %p162, %s18, 1
      %p164 = scmp.lt.s32.totalorder %s19, 0
      %s165 = scalar_select %p164, %s19, 0
      %s166 = smul.addr %s163, 5
      %s167 = sadd.s32 %s165, %s166
      %s168 = smul.addr %s167, 4
      %s169 = scalar_lea.vmem %s0, %s168
      %p170 = pneg %p49
      %p171 = pneg %p46
      %p172 = pneg %p70
      %p173 = pneg %p67
      %p174 = pneg %p91
      %p175 = pneg %p88
      %p176 = pneg %p119
      %p177 = pneg %p116
      %p178 = scmp.lt.s32.totalorder %s18, 1
      %s179 = scalar_select %p178, %s18, 1
      %p180 = scmp.lt.s32.totalorder %s19, 0
      %s181 = scalar_select %p180, %s19, 0
      %s182 = sadd.s32 %s181, %s179
      %s183 = smul.addr %s182, 2
      %s184 = scalar_lea.vmem %s3, %s183
      %p185 = scmp.lt.s32.totalorder %s18, 1
      %s186 = scalar_select %p185, %s18, 1
      %p187 = scmp.lt.s32.totalorder %s19, 0
      %s188 = scalar_select %p187, %s19, 0
      %s189 = smul.addr %s186, 5
      %s190 = sadd.s32 %s188, %s189
      %s191 = smul.addr %s190, 4
      %s192 = scalar_lea.vmem %s0, %s191
      %p193 = scmp.lt.s32.totalorder %s18, 1
      %s194 = scalar_select %p193, %s18, 1
      %p195 = scmp.lt.s32.totalorder %s19, 0
      %s196 = scalar_select %p195, %s19, 0
      %s197 = sadd.s32 %s196, %s194
      %s198 = smul.addr %s197, 2
      %s199 = scalar_lea.vmem %s3, %s198
      %v201 = vld [vmem:[%s1] sm:$0x3]
      %v202 = vld [vmem:[%s192] sm:$0xf]
      %v203 = vld [vmem:[%s192 + $0x4] sm:$0xf]
      %v204 = vld [vmem:[%s192 + $0x8] sm:$0xf]
      %v205 = vld [vmem:[%s192 + $0xc] sm:$0xf]
      %v206 = vld [vmem:[%s192 + $0x10] sm:$0x3]
      %v207 = vld [vmem:[%s2] sm:$0xf]
      %209 = vset.pattern.permute.xlu0 0
      %210 = vperm.xlu0 %209, %v207
      %v211 = vpop.permute.xlu0 %210
      %v218 = vunpack.c.l.b16 %v202
      %v219 = vunpack.c.l.b16 %v203
      %v220 = vunpack.c.l.b16 %v204
      %v221 = vunpack.c.l.b16 %v205
      %v222 = vunpack.c.l.b16 %v206
      %v223 = vpack.c.b16 %v219, %v218
      %v224 = vpack.c.b16 %v221, %v220
      %v225 = vpack.c.b16 %v222, %v222
      %vm228 = vcmask 293888
      %v230 = vsel %vm228, %v201, 0
      %vm232 = vcmask 1041408
      %v234 = vsel %vm232, %v225, 0
      %236 = vmatprep.subr.bf16.mxu0 0
      %237 = vmatpush1.bf16.msra.mxu0 %v223
      %238 = vmatprep.subr.bf16.mxu0 0
      %239 = vmatpush1.bf16.msra.mxu0 %v224
      %240 = vmatprep.subr.bf16.mxu0 0
      %241 = vmatpush1.bf16.msra.mxu0 %v234
      %242 = vmatprep.subr.bf16.mxu0 0
      %243 = vmatpush1.bf16.msra.mxu0 0
      %244 = vmatprep.subr.bf16.mxu0 0
      %245 = vmatpush1.bf16.msra.mxu0 0
      %246 = vmatprep.subr.bf16.mxu0 0
      %247 = vmatpush1.bf16.msra.mxu0 0
      %248 = vmatprep.subr.bf16.mxu0 0
      %249 = vmatpush1.bf16.msra.mxu0 0
      %250 = vmatprep.subr.bf16.mxu0 0
      %251 = vmatpush1.bf16.msra.mxu0 0
      %252 = vmatprep.subr.bf16.mxu0 0
      %253 = vmatpush1.bf16.msra.mxu0 0
      %254 = vmatprep.subr.bf16.mxu0 0
      %255 = vmatpush1.bf16.msra.mxu0 0
      %256 = vmatprep.subr.bf16.mxu0 0
      %257 = vmatpush1.bf16.msra.mxu0 0
      %258 = vmatprep.subr.bf16.mxu0 0
      %259 = vmatpush1.bf16.msra.mxu0 0
      %260 = vmatprep.subr.bf16.mxu0 0
      %261 = vmatpush1.bf16.msra.mxu0 0
      %262 = vmatprep.subr.bf16.mxu0 0
      %263 = vmatpush1.bf16.msra.mxu0 0
      %264 = vmatprep.subr.bf16.mxu0 0
      %265 = vmatpush1.bf16.msra.mxu0 0
      %266 = vmatprep.subr.bf16.mxu0 0
      %267 = vmatpush1.bf16.msra.mxu0 0
      %268 = vmatprep.mubr.bf16.mxu0 0
      %269 = vmatmul.mubr.bf16.gmra.mrb[0].mxu0 %v230
      %v270 = vpop.f32.mrb[0].mxu0
      %v271 = vadd.f32 %v211, %v270
      %v272 = vpop.f32.mrb[0].mxu0
      %v273 = vpop.f32.mrb[0].mxu0
      %v274 = vpop.f32.mrb[0].mxu0
      %275 = vdwg.mxu0
      %v276 = vpack.c.bf16 %v271, %v271
      %vm277 = vcmask 394240
      %278 = vst.msk [vmem:[%s199] sm:$0x3] %vm277, %v276
      %p279 = scmp.lt.s32.totalorder %s18, 1
      %s280 = scalar_select %p279, %s18, 1
      %p281 = scmp.lt.s32.totalorder %s19, 0
      %s282 = scalar_select %p281, %s19, 0
      %s283 = sadd.s32 %s282, %s280
      %s284 = smul.addr %s283, 2
      %s285 = scalar_lea.vmem %s3, %s284
      // Predicated region
      $region33: #{esa_forward.10} parent=31 // pred_check
        %p286 = pneg %p116
      $region34: #{esa_forward.10} parent=31 // pred_check_branch
        %288 = sbr.rel (%p286) target = $region36
      $region35: #{esa_forward.10} parent=31 // pred_region
        _
      $region36: #{esa_forward.10} parent=31 // pred_fallthru
        _
    $region32: #{esa_forward.10} parent=5 // pred_fallthru
      _
    %p289 = scmp.le.s32.totalorder 2, %s9
    // Predicated region
    $region37: #{esa_forward.10} parent=5 // pred_check
      %p290 = pneg %p289
    $region38: #{esa_forward.10} parent=5 // pred_check_branch
      %292 = sbr.rel (%p290) target = $region40
    $region39: #{esa_forward.10} parent=5 // pred_region
      %s293 = ssub.s32 %s9, 2
      // Predicated region
      $region41: #{esa_forward.10} parent=39 // pred_check
        %p294 = pneg %p122
      $region42: #{esa_forward.10} parent=39 // pred_check_branch
        %296 = sbr.rel (%p294) target = $region44
      $region43: #{esa_forward.10} parent=39 // pred_region
        %p297 = scmp.lt.s32.totalorder %s20, 1
        %s298 = scalar_select %p297, %s20, 1
        %p299 = scmp.lt.s32.totalorder %s21, 0
        %s300 = scalar_select %p299, %s21, 0
        %s301 = sadd.s32 %s300, %s298
        %s302 = smul.addr %s301, 2
        %s303 = scalar_lea.vmem %s3, %s302
      $region44: #{esa_forward.10} parent=39 // pred_fallthru
        _
    $region40: #{esa_forward.10} parent=5 // pred_fallthru
      _
  $region6: #{esa_forward.10} parent=0 // loop_footer
    %s13 = sadd.s32 1, %s9
  $region7: #{esa_forward.10} parent=0 // loop_footer_branch
    %8 = sbr.rel target = $region3
  $region8: #{esa_forward.10} parent=0 // loop_exit
    _

// kernel: esa_forward.11
$region0: #{esa_forward.11}
  #allocation0 [shape = 'u32[]', space=smem, size = 0x4, offset = 0x4, fixed_abs, tag = 'smem constant byte address 0x4 - core index']
  #allocation1 [shape = 'u32[144,128]{1,0:T(1,128)}', space=vmem, size = 0x12000, scoped, tag = 'internal scratch']
  %s0 = inlined_call_operand.vmem [shape: bf16[2,7,4,7], index: 0, kind: input, shape index: {}]
  %s1 = inlined_call_operand.vmem [shape: bf16[2,4,7], index: 1, kind: output, shape index: {}]
  %s2 = sld [smem:[#allocation0]]
  $region37: #{esa_forward.11} parent=0
    _
  %s4 = ssub.s32 1, %s2
  %s5 = scalar_select 0, %s4, %s2
  loop: start=0, step=1, limit=4
  $region2: #{esa_forward.11} parent=0 // loop_pre_header
    _
  $region3: #{esa_forward.11} parent=0 // loop_header
    %s7 = sphi 0, %s11
    %p8 = scmp.ge.s32.totalorder %s7, 4
    %s14 = sphi 0, %s26
    %s15 = sphi 0, %s22
    %s16 = sphi 0, %s14
    %s17 = sphi 0, %s15
    %s18 = sphi 0, %s16
    %s19 = sphi 0, %s17
    %s31 = sphi 0, %s33
    %s34 = sphi 0, %s31
    %s35 = sphi 0, %s34
    %s51 = sphi 0, %s35
    %s59 = sphi 0, %s61
    %s62 = sphi 0, %s59
    %s63 = sphi 0, %s62
    %s79 = sphi 0, %s63
  $region4: #{esa_forward.11} parent=0 // loop_header_branch
    %10 = sbr.rel (%p8) target = $region8
  $region5: #{esa_forward.11} parent=0 // loop_body
    %s12 = ssub.s32 %s7, 1
    %s13 = ssub.s32 %s7, 2
    %s20 = sadd.s32 1, %s15
    %p21 = scmp.ge.s32.totalorder %s20, 1
    %s22 = scalar_select %p21, 0, %s20
    %s23 = sadd.s32 1, %s14
    %s24 = scalar_select %p21, %s23, %s14
    %p25 = scmp.ge.s32.totalorder %s24, 2
    %s26 = scalar_select %p25, 0, %s24
    %s27 = ssub.s32 %s14, %s26
    %s28 = ssub.s32 %s15, %s22
    %s29 = sor.u32 %s27, %s28
    %p30 = scmp.eq.s32.totalorder %s29, 0
    %s32 = sadd.s32 %s31, 1
    %s33 = scalar_select %p30, %s31, %s32
    %p36 = pneg %p30
    %p37 = scmp.eq.s32.totalorder %s7, 1
    %p38 = por %p36, %p37
    %p39 = scmp.ne.s32.totalorder %s31, %s34
    %p40 = scmp.eq.s32.totalorder %s7, 0
    %p41 = por %p39, %p40
    %p42 = scmp.ne.s32.totalorder %s31, %s34
    %p43 = scmp.eq.s32.totalorder %s12, 1
    %p44 = por %p42, %p43
    %p45 = scmp.ne.s32.totalorder %s34, %s35
    %p46 = scmp.eq.s32.totalorder %s12, 0
    %p47 = por %p45, %p46
    %p48 = scmp.ne.s32.totalorder %s34, %s35
    %p49 = scmp.eq.s32.totalorder %s13, 1
    %p50 = por %p48, %p49
    %p52 = scmp.ne.s32.totalorder %s35, %s51
    %p53 = scmp.eq.s32.totalorder %s13, 0
    %p54 = por %p52, %p53
    %s55 = ssub.s32 %s14, %s26
    %s56 = ssub.s32 %s15, %s22
    %s57 = sor.u32 %s55, %s56
    %p58 = scmp.eq.s32.totalorder %s57, 0
    %s60 = sadd.s32 %s59, 1
    %s61 = scalar_select %p58, %s59, %s60
    %p64 = pneg %p58
    %p65 = scmp.eq.s32.totalorder %s7, 1
    %p66 = por %p64, %p65
    %p67 = scmp.ne.s32.totalorder %s59, %s62
    %p68 = scmp.eq.s32.totalorder %s7, 0
    %p69 = por %p67, %p68
    %p70 = scmp.ne.s32.totalorder %s59, %s62
    %p71 = scmp.eq.s32.totalorder %s12, 1
    %p72 = por %p70, %p71
    %p73 = scmp.ne.s32.totalorder %s62, %s63
    %p74 = scmp.eq.s32.totalorder %s12, 0
    %p75 = por %p73, %p74
    %p76 = scmp.ne.s32.totalorder %s62, %s63
    %p77 = scmp.eq.s32.totalorder %s13, 1
    %p78 = por %p76, %p77
    %p80 = scmp.ne.s32.totalorder %s63, %s79
    %p81 = scmp.eq.s32.totalorder %s13, 0
    %p82 = por %p80, %p81
    %p83 = scmp.le.s32.totalorder 1, %s7
    %p84 = scmp.lt.s32.totalorder %s7, 3
    %p85 = pnand %p83, %p84
    %p86 = pneg %p85
    // Predicated region
    $region9: #{esa_forward.11} parent=5 // pred_check
      _
    $region10: #{esa_forward.11} parent=5 // pred_check_branch
      %88 = sbr.rel (%p85) target = $region12
    $region11: #{esa_forward.11} parent=5 // pred_region
      %s89 = ssub.s32 %s7, 1
    $region12: #{esa_forward.11} parent=5 // pred_fallthru
      _
    %p90 = scmp.lt.s32.totalorder %s7, 2
    // Predicated region
    $region13: #{esa_forward.11} parent=5 // pred_check
      %p91 = pneg %p90
    $region14: #{esa_forward.11} parent=5 // pred_check_branch
      %93 = sbr.rel (%p91) target = $region16
    $region15: #{esa_forward.11} parent=5 // pred_region
      // Predicated region
      $region17: #{esa_forward.11} parent=15 // pred_check
        %p94 = pneg %p41
      $region18: #{esa_forward.11} parent=15 // pred_check_branch
        %96 = sbr.rel (%p94) target = $region20
      $region19: #{esa_forward.11} parent=15 // pred_region
        %p97 = scmp.lt.s32.totalorder %s14, 1
        %s98 = scalar_select %p97, %s14, 1
        %p99 = scmp.lt.s32.totalorder %s15, 0
        %s100 = scalar_select %p99, %s15, 0
        %s101 = smul.addr %s98, 7
        %s102 = sadd.s32 %s100, %s101
        %s103 = smul.addr %s102, 2
        %s104 = scalar_lea.vmem %s0, %s103
      $region20: #{esa_forward.11} parent=15 // pred_fallthru
        _
    $region16: #{esa_forward.11} parent=5 // pred_fallthru
      _
    %p105 = scmp.le.s32.totalorder 1, %s7
    %p106 = scmp.lt.s32.totalorder %s7, 3
    %p107 = pnand %p105, %p106
    %p108 = pneg %p107
    // Predicated region
    $region21: #{esa_forward.11} parent=5 // pred_check
      _
    $region22: #{esa_forward.11} parent=5 // pred_check_branch
      %110 = sbr.rel (%p107) target = $region24
    $region23: #{esa_forward.11} parent=5 // pred_region
      %s111 = ssub.s32 %s7, 1
      %p112 = scmp.lt.s32.totalorder %s16, 1
      %s113 = scalar_select %p112, %s16, 1
      %p114 = scmp.lt.s32.totalorder %s17, 0
      %s115 = scalar_select %p114, %s17, 0
      %s116 = smul.addr %s113, 7
      %s117 = sadd.s32 %s115, %s116
      %s118 = smul.addr %s117, 2
      %s119 = scalar_lea.vmem %s0, %s118
      %p120 = pneg %p47
      %p121 = pneg %p44
      %p122 = pneg %p75
      %p123 = pneg %p72
      %p124 = scmp.lt.s32.totalorder %s16, 1
      %s125 = scalar_select %p124, %s16, 1
      %p126 = scmp.lt.s32.totalorder %s17, 0
      %s127 = scalar_select %p126, %s17, 0
      %s128 = sadd.s32 %s127, %s125
      %s129 = smul.addr %s128, 2
      %s130 = scalar_lea.vmem %s1, %s129
      %p131 = scmp.lt.s32.totalorder %s16, 1
      %s132 = scalar_select %p131, %s16, 1
      %p133 = scmp.lt.s32.totalorder %s17, 0
      %s134 = scalar_select %p133, %s17, 0
      %s135 = smul.addr %s132, 7
      %s136 = sadd.s32 %s134, %s135
      %s137 = smul.addr %s136, 2
      %s138 = scalar_lea.vmem %s0, %s137
      %p139 = scmp.lt.s32.totalorder %s16, 1
      %s140 = scalar_select %p139, %s16, 1
      %p141 = scmp.lt.s32.totalorder %s17, 0
      %s142 = scalar_select %p141, %s17, 0
      %s143 = sadd.s32 %s142, %s140
      %s144 = smul.addr %s143, 2
      %s145 = scalar_lea.vmem %s1, %s144
      %v146 = vld [vmem:[%s138] sm:$0x3]
      %s147 = scalar_lea.vmem %s138, 2
      %v148 = vld [vmem:[%s147] sm:$0x3]
      %v149 = vmax.bf16 %v146, %v148
      %s150 = scalar_lea.vmem %s138, 4
      %v151 = vld [vmem:[%s150] sm:$0x3]
      %v152 = vmax.bf16 %v149, %v151
      %s153 = scalar_lea.vmem %s138, 6
      %v154 = vld [vmem:[%s153] sm:$0x3]
      %v155 = vmax.bf16 %v152, %v154
      %s156 = scalar_lea.vmem %s138, 8
      %v157 = vld [vmem:[%s156] sm:$0x3]
      %v158 = vmax.bf16 %v155, %v157
      %s159 = scalar_lea.vmem %s138, 10
      %v160 = vld [vmem:[%s159] sm:$0x3]
      %v161 = vmax.bf16 %v158, %v160
      %s162 = scalar_lea.vmem %s138, 12
      %v163 = vld [vmem:[%s162] sm:$0x3]
      %v164 = vmax.bf16 %v161, %v163
      %vm165 = vcmask 50176
      %166 = vst.msk [vmem:[%s145] sm:$0x3] %vm165, %v164
      %p167 = scmp.lt.s32.totalorder %s16, 1
      %s168 = scalar_select %p167, %s16, 1
      %p169 = scmp.lt.s32.totalorder %s17, 0
      %s170 = scalar_select %p169, %s17, 0
      %s171 = sadd.s32 %s170, %s168
      %s172 = smul.addr %s171, 2
      %s173 = scalar_lea.vmem %s1, %s172
      // Predicated region
      $region25: #{esa_forward.11} parent=23 // pred_check
        %p174 = pneg %p72
      $region26: #{esa_forward.11} parent=23 // pred_check_branch
        %176 = sbr.rel (%p174) target = $region28
      $region27: #{esa_forward.11} parent=23 // pred_region
        _
      $region28: #{esa_forward.11} parent=23 // pred_fallthru
        _
    $region24: #{esa_forward.11} parent=5 // pred_fallthru
      _
    %p177 = scmp.le.s32.totalorder 2, %s7
    // Predicated region
    $region29: #{esa_forward.11} parent=5 // pred_check
      %p178 = pneg %p177
    $region30: #{esa_forward.11} parent=5 // pred_check_branch
      %180 = sbr.rel (%p178) target = $region32
    $region31: #{esa_forward.11} parent=5 // pred_region
      %s181 = ssub.s32 %s7, 2
      // Predicated region
      $region33: #{esa_forward.11} parent=31 // pred_check
        %p182 = pneg %p78
      $region34: #{esa_forward.11} parent=31 // pred_check_branch
        %184 = sbr.rel (%p182) target = $region36
      $region35: #{esa_forward.11} parent=31 // pred_region
        %p185 = scmp.lt.s32.totalorder %s18, 1
        %s186 = scalar_select %p185, %s18, 1
        %p187 = scmp.lt.s32.totalorder %s19, 0
        %s188 = scalar_select %p187, %s19, 0
        %s189 = sadd.s32 %s188, %s186
        %s190 = smul.addr %s189, 2
        %s191 = scalar_lea.vmem %s1, %s190
      $region36: #{esa_forward.11} parent=31 // pred_fallthru
        _
    $region32: #{esa_forward.11} parent=5 // pred_fallthru
      _
  $region6: #{esa_forward.11} parent=0 // loop_footer
    %s11 = sadd.s32 1, %s7
  $region7: #{esa_forward.11} parent=0 // loop_footer_branch
    %6 = sbr.rel target = $region3
  $region8: #{esa_forward.11} parent=0 // loop_exit
    _

// kernel: esa_forward.12
$region0: #{esa_forward.12}
  #allocation0 [shape = 'u32[]', space=smem, size = 0x4, offset = 0x4, fixed_abs, tag = 'smem constant byte address 0x4 - core index']
  #allocation1 [shape = 'u32[144,128]{1,0:T(1,128)}', space=vmem, size = 0x12000, scoped, tag = 'internal scratch']
  %s0 = inlined_call_operand.vmem [shape: bf16[2,7,4,1], index: 0, kind: input, shape index: {}]
  %s1 = inlined_call_operand.vmem [shape: bf16[2,4,1], index: 1, kind: output, shape index: {}]
  %s2 = sld [smem:[#allocation0]]
  $region37: #{esa_forward.12} parent=0
    _
  %s4 = ssub.s32 1, %s2
  %s5 = scalar_select 0, %s4, %s2
  loop: start=0, step=1, limit=4
  $region2: #{esa_forward.12} parent=0 // loop_pre_header
    _
  $region3: #{esa_forward.12} parent=0 // loop_header
    %s7 = sphi 0, %s11
    %p8 = scmp.ge.s32.totalorder %s7, 4
    %s14 = sphi 0, %s26
    %s15 = sphi 0, %s22
    %s16 = sphi 0, %s14
    %s17 = sphi 0, %s15
    %s18 = sphi 0, %s16
    %s19 = sphi 0, %s17
    %s31 = sphi 0, %s33
    %s34 = sphi 0, %s31
    %s35 = sphi 0, %s34
    %s51 = sphi 0, %s35
    %s59 = sphi 0, %s61
    %s62 = sphi 0, %s59
    %s63 = sphi 0, %s62
    %s79 = sphi 0, %s63
  $region4: #{esa_forward.12} parent=0 // loop_header_branch
    %10 = sbr.rel (%p8) target = $region8
  $region5: #{esa_forward.12} parent=0 // loop_body
    %s12 = ssub.s32 %s7, 1
    %s13 = ssub.s32 %s7, 2
    %s20 = sadd.s32 1, %s15
    %p21 = scmp.ge.s32.totalorder %s20, 1
    %s22 = scalar_select %p21, 0, %s20
    %s23 = sadd.s32 1, %s14
    %s24 = scalar_select %p21, %s23, %s14
    %p25 = scmp.ge.s32.totalorder %s24, 2
    %s26 = scalar_select %p25, 0, %s24
    %s27 = ssub.s32 %s14, %s26
    %s28 = ssub.s32 %s15, %s22
    %s29 = sor.u32 %s27, %s28
    %p30 = scmp.eq.s32.totalorder %s29, 0
    %s32 = sadd.s32 %s31, 1
    %s33 = scalar_select %p30, %s31, %s32
    %p36 = pneg %p30
    %p37 = scmp.eq.s32.totalorder %s7, 1
    %p38 = por %p36, %p37
    %p39 = scmp.ne.s32.totalorder %s31, %s34
    %p40 = scmp.eq.s32.totalorder %s7, 0
    %p41 = por %p39, %p40
    %p42 = scmp.ne.s32.totalorder %s31, %s34
    %p43 = scmp.eq.s32.totalorder %s12, 1
    %p44 = por %p42, %p43
    %p45 = scmp.ne.s32.totalorder %s34, %s35
    %p46 = scmp.eq.s32.totalorder %s12, 0
    %p47 = por %p45, %p46
    %p48 = scmp.ne.s32.totalorder %s34, %s35
    %p49 = scmp.eq.s32.totalorder %s13, 1
    %p50 = por %p48, %p49
    %p52 = scmp.ne.s32.totalorder %s35, %s51
    %p53 = scmp.eq.s32.totalorder %s13, 0
    %p54 = por %p52, %p53
    %s55 = ssub.s32 %s14, %s26
    %s56 = ssub.s32 %s15, %s22
    %s57 = sor.u32 %s55, %s56
    %p58 = scmp.eq.s32.totalorder %s57, 0
    %s60 = sadd.s32 %s59, 1
    %s61 = scalar_select %p58, %s59, %s60
    %p64 = pneg %p58
    %p65 = scmp.eq.s32.totalorder %s7, 1
    %p66 = por %p64, %p65
    %p67 = scmp.ne.s32.totalorder %s59, %s62
    %p68 = scmp.eq.s32.totalorder %s7, 0
    %p69 = por %p67, %p68
    %p70 = scmp.ne.s32.totalorder %s59, %s62
    %p71 = scmp.eq.s32.totalorder %s12, 1
    %p72 = por %p70, %p71
    %p73 = scmp.ne.s32.totalorder %s62, %s63
    %p74 = scmp.eq.s32.totalorder %s12, 0
    %p75 = por %p73, %p74
    %p76 = scmp.ne.s32.totalorder %s62, %s63
    %p77 = scmp.eq.s32.totalorder %s13, 1
    %p78 = por %p76, %p77
    %p80 = scmp.ne.s32.totalorder %s63, %s79
    %p81 = scmp.eq.s32.totalorder %s13, 0
    %p82 = por %p80, %p81
    %p83 = scmp.le.s32.totalorder 1, %s7
    %p84 = scmp.lt.s32.totalorder %s7, 3
    %p85 = pnand %p83, %p84
    %p86 = pneg %p85
    // Predicated region
    $region9: #{esa_forward.12} parent=5 // pred_check
      _
    $region10: #{esa_forward.12} parent=5 // pred_check_branch
      %88 = sbr.rel (%p85) target = $region12
    $region11: #{esa_forward.12} parent=5 // pred_region
      %s89 = ssub.s32 %s7, 1
    $region12: #{esa_forward.12} parent=5 // pred_fallthru
      _
    %p90 = scmp.lt.s32.totalorder %s7, 2
    // Predicated region
    $region13: #{esa_forward.12} parent=5 // pred_check
      %p91 = pneg %p90
    $region14: #{esa_forward.12} parent=5 // pred_check_branch
      %93 = sbr.rel (%p91) target = $region16
    $region15: #{esa_forward.12} parent=5 // pred_region
      // Predicated region
      $region17: #{esa_forward.12} parent=15 // pred_check
        %p94 = pneg %p41
      $region18: #{esa_forward.12} parent=15 // pred_check_branch
        %96 = sbr.rel (%p94) target = $region20
      $region19: #{esa_forward.12} parent=15 // pred_region
        %p97 = scmp.lt.s32.totalorder %s14, 1
        %s98 = scalar_select %p97, %s14, 1
        %p99 = scmp.lt.s32.totalorder %s15, 0
        %s100 = scalar_select %p99, %s15, 0
        %s101 = smul.addr %s98, 7
        %s102 = sadd.s32 %s100, %s101
        %s103 = smul.addr %s102, 2
        %s104 = scalar_lea.vmem %s0, %s103
      $region20: #{esa_forward.12} parent=15 // pred_fallthru
        _
    $region16: #{esa_forward.12} parent=5 // pred_fallthru
      _
    %p105 = scmp.le.s32.totalorder 1, %s7
    %p106 = scmp.lt.s32.totalorder %s7, 3
    %p107 = pnand %p105, %p106
    %p108 = pneg %p107
    // Predicated region
    $region21: #{esa_forward.12} parent=5 // pred_check
      _
    $region22: #{esa_forward.12} parent=5 // pred_check_branch
      %110 = sbr.rel (%p107) target = $region24
    $region23: #{esa_forward.12} parent=5 // pred_region
      %s111 = ssub.s32 %s7, 1
      %p112 = scmp.lt.s32.totalorder %s16, 1
      %s113 = scalar_select %p112, %s16, 1
      %p114 = scmp.lt.s32.totalorder %s17, 0
      %s115 = scalar_select %p114, %s17, 0
      %s116 = smul.addr %s113, 7
      %s117 = sadd.s32 %s115, %s116
      %s118 = smul.addr %s117, 2
      %s119 = scalar_lea.vmem %s0, %s118
      %p120 = pneg %p47
      %p121 = pneg %p44
      %p122 = pneg %p75
      %p123 = pneg %p72
      %p124 = scmp.lt.s32.totalorder %s16, 1
      %s125 = scalar_select %p124, %s16, 1
      %p126 = scmp.lt.s32.totalorder %s17, 0
      %s127 = scalar_select %p126, %s17, 0
      %s128 = sadd.s32 %s127, %s125
      %s129 = smul.addr %s128, 2
      %s130 = scalar_lea.vmem %s1, %s129
      %p131 = scmp.lt.s32.totalorder %s16, 1
      %s132 = scalar_select %p131, %s16, 1
      %p133 = scmp.lt.s32.totalorder %s17, 0
      %s134 = scalar_select %p133, %s17, 0
      %s135 = smul.addr %s132, 7
      %s136 = sadd.s32 %s134, %s135
      %s137 = smul.addr %s136, 2
      %s138 = scalar_lea.vmem %s0, %s137
      %p139 = scmp.lt.s32.totalorder %s16, 1
      %s140 = scalar_select %p139, %s16, 1
      %p141 = scmp.lt.s32.totalorder %s17, 0
      %s142 = scalar_select %p141, %s17, 0
      %s143 = sadd.s32 %s142, %s140
      %s144 = smul.addr %s143, 2
      %s145 = scalar_lea.vmem %s1, %s144
      %v146 = vld [vmem:[%s138] sm:$0x3]
      %s147 = scalar_lea.vmem %s138, 2
      %v148 = vld [vmem:[%s147] sm:$0x3]
      %v149 = vmax.bf16 %v146, %v148
      %s150 = scalar_lea.vmem %s138, 4
      %v151 = vld [vmem:[%s150] sm:$0x3]
      %v152 = vmax.bf16 %v149, %v151
      %s153 = scalar_lea.vmem %s138, 6
      %v154 = vld [vmem:[%s153] sm:$0x3]
      %v155 = vmax.bf16 %v152, %v154
      %s156 = scalar_lea.vmem %s138, 8
      %v157 = vld [vmem:[%s156] sm:$0x3]
      %v158 = vmax.bf16 %v155, %v157
      %s159 = scalar_lea.vmem %s138, 10
      %v160 = vld [vmem:[%s159] sm:$0x3]
      %v161 = vmax.bf16 %v158, %v160
      %s162 = scalar_lea.vmem %s138, 12
      %v163 = vld [vmem:[%s162] sm:$0x3]
      %v164 = vmax.bf16 %v161, %v163
      %vm165 = vcmask 1024
      %166 = vst.msk [vmem:[%s145] sm:$0x3] %vm165, %v164
      %p167 = scmp.lt.s32.totalorder %s16, 1
      %s168 = scalar_select %p167, %s16, 1
      %p169 = scmp.lt.s32.totalorder %s17, 0
      %s170 = scalar_select %p169, %s17, 0
      %s171 = sadd.s32 %s170, %s168
      %s172 = smul.addr %s171, 2
      %s173 = scalar_lea.vmem %s1, %s172
      // Predicated region
      $region25: #{esa_forward.12} parent=23 // pred_check
        %p174 = pneg %p72
      $region26: #{esa_forward.12} parent=23 // pred_check_branch
        %176 = sbr.rel (%p174) target = $region28
      $region27: #{esa_forward.12} parent=23 // pred_region
        _
      $region28: #{esa_forward.12} parent=23 // pred_fallthru
        _
    $region24: #{esa_forward.12} parent=5 // pred_fallthru
      _
    %p177 = scmp.le.s32.totalorder 2, %s7
    // Predicated region
    $region29: #{esa_forward.12} parent=5 // pred_check
      %p178 = pneg %p177
    $region30: #{esa_forward.12} parent=5 // pred_check_branch
      %180 = sbr.rel (%p178) target = $region32
    $region31: #{esa_forward.12} parent=5 // pred_region
      %s181 = ssub.s32 %s7, 2
      // Predicated region
      $region33: #{esa_forward.12} parent=31 // pred_check
        %p182 = pneg %p78
      $region34: #{esa_forward.12} parent=31 // pred_check_branch
        %184 = sbr.rel (%p182) target = $region36
      $region35: #{esa_forward.12} parent=31 // pred_region
        %p185 = scmp.lt.s32.totalorder %s18, 1
        %s186 = scalar_select %p185, %s18, 1
        %p187 = scmp.lt.s32.totalorder %s19, 0
        %s188 = scalar_select %p187, %s19, 0
        %s189 = sadd.s32 %s188, %s186
        %s190 = smul.addr %s189, 2
        %s191 = scalar_lea.vmem %s1, %s190
      $region36: #{esa_forward.12} parent=31 // pred_fallthru
        _
    $region32: #{esa_forward.12} parent=5 // pred_fallthru
      _
  $region6: #{esa_forward.12} parent=0 // loop_footer
    %s11 = sadd.s32 1, %s7
  $region7: #{esa_forward.12} parent=0 // loop_footer_branch
    %6 = sbr.rel target = $region3
  $region8: #{esa_forward.12} parent=0 // loop_exit
    _

// kernel: esa_forward.13
$region0: #{esa_forward.13}
  #allocation0 [shape = 'u32[]', space=smem, size = 0x4, offset = 0x4, fixed_abs, tag = 'smem constant byte address 0x4 - core index']
  #allocation1 [shape = 'u32[144,128]{1,0:T(1,128)}', space=vmem, size = 0x12000, scoped, tag = 'internal scratch']
  %s0 = inlined_call_operand.vmem [shape: bf16[2,36,1], index: 0, kind: input, shape index: {}]
  %s1 = inlined_call_operand.vmem [shape: bf16[4,36], index: 1, kind: input, shape index: {}]
  %s2 = inlined_call_operand.vmem [shape: f32[4,1], index: 2, kind: input, shape index: {}]
  %s3 = inlined_call_operand.vmem [shape: bf16[2,4,1], index: 3, kind: output, shape index: {}]
  %s4 = sld [smem:[#allocation0]]
  $region45: #{esa_forward.13} parent=0
    _
  %s6 = ssub.s32 1, %s4
  %s7 = scalar_select 0, %s6, %s4
  loop: start=0, step=1, limit=4
  $region2: #{esa_forward.13} parent=0 // loop_pre_header
    _
  $region3: #{esa_forward.13} parent=0 // loop_header
    %s9 = sphi 0, %s13
    %p10 = scmp.ge.s32.totalorder %s9, 4
    %s16 = sphi 0, %s28
    %s17 = sphi 0, %s24
    %s18 = sphi 0, %s16
    %s19 = sphi 0, %s17
    %s20 = sphi 0, %s18
    %s21 = sphi 0, %s19
    %s33 = sphi 0, %s35
    %s36 = sphi 0, %s33
    %s37 = sphi 0, %s36
    %s53 = sphi 0, %s37
    %s57 = sphi 0, %s57
    %s59 = sphi 0, %s57
    %s60 = sphi 0, %s59
    %s74 = sphi 0, %s60
    %s78 = sphi 0, %s78
    %s80 = sphi 0, %s78
    %s81 = sphi 0, %s80
    %s95 = sphi 0, %s81
    %s103 = sphi 0, %s105
    %s106 = sphi 0, %s103
    %s107 = sphi 0, %s106
    %s123 = sphi 0, %s107
  $region4: #{esa_forward.13} parent=0 // loop_header_branch
    %12 = sbr.rel (%p10) target = $region8
  $region5: #{esa_forward.13} parent=0 // loop_body
    %s14 = ssub.s32 %s9, 1
    %s15 = ssub.s32 %s9, 2
    %s22 = sadd.s32 1, %s17
    %p23 = scmp.ge.s32.totalorder %s22, 1
    %s24 = scalar_select %p23, 0, %s22
    %s25 = sadd.s32 1, %s16
    %s26 = scalar_select %p23, %s25, %s16
    %p27 = scmp.ge.s32.totalorder %s26, 2
    %s28 = scalar_select %p27, 0, %s26
    %s29 = ssub.s32 %s16, %s28
    %s30 = ssub.s32 %s17, %s24
    %s31 = sor.u32 %s29, %s30
    %p32 = scmp.eq.s32.totalorder %s31, 0
    %s34 = sadd.s32 %s33, 1
    %s35 = scalar_select %p32, %s33, %s34
    %p38 = pneg %p32
    %p39 = scmp.eq.s32.totalorder %s9, 1
    %p40 = por %p38, %p39
    %p41 = scmp.ne.s32.totalorder %s33, %s36
    %p42 = scmp.eq.s32.totalorder %s9, 0
    %p43 = por %p41, %p42
    %p44 = scmp.ne.s32.totalorder %s33, %s36
    %p45 = scmp.eq.s32.totalorder %s14, 1
    %p46 = por %p44, %p45
    %p47 = scmp.ne.s32.totalorder %s36, %s37
    %p48 = scmp.eq.s32.totalorder %s14, 0
    %p49 = por %p47, %p48
    %p50 = scmp.ne.s32.totalorder %s36, %s37
    %p51 = scmp.eq.s32.totalorder %s15, 1
    %p52 = por %p50, %p51
    %p54 = scmp.ne.s32.totalorder %s37, %s53
    %p55 = scmp.eq.s32.totalorder %s15, 0
    %p56 = por %p54, %p55
    %s58 = sadd.s32 %s57, 1
    %p61 = scmp.eq.s32.totalorder %s9, 1
    %p62 = scmp.ne.s32.totalorder %s57, %s59
    %p63 = scmp.eq.s32.totalorder %s9, 0
    %p64 = por %p62, %p63
    %p65 = scmp.ne.s32.totalorder %s57, %s59
    %p66 = scmp.eq.s32.totalorder %s14, 1
    %p67 = por %p65, %p66
    %p68 = scmp.ne.s32.totalorder %s59, %s60
    %p69 = scmp.eq.s32.totalorder %s14, 0
    %p70 = por %p68, %p69
    %p71 = scmp.ne.s32.totalorder %s59, %s60
    %p72 = scmp.eq.s32.totalorder %s15, 1
    %p73 = por %p71, %p72
    %p75 = scmp.ne.s32.totalorder %s60, %s74
    %p76 = scmp.eq.s32.totalorder %s15, 0
    %p77 = por %p75, %p76
    %s79 = sadd.s32 %s78, 1
    %p82 = scmp.eq.s32.totalorder %s9, 1
    %p83 = scmp.ne.s32.totalorder %s78, %s80
    %p84 = scmp.eq.s32.totalorder %s9, 0
    %p85 = por %p83, %p84
    %p86 = scmp.ne.s32.totalorder %s78, %s80
    %p87 = scmp.eq.s32.totalorder %s14, 1
    %p88 = por %p86, %p87
    %p89 = scmp.ne.s32.totalorder %s80, %s81
    %p90 = scmp.eq.s32.totalorder %s14, 0
    %p91 = por %p89, %p90
    %p92 = scmp.ne.s32.totalorder %s80, %s81
    %p93 = scmp.eq.s32.totalorder %s15, 1
    %p94 = por %p92, %p93
    %p96 = scmp.ne.s32.totalorder %s81, %s95
    %p97 = scmp.eq.s32.totalorder %s15, 0
    %p98 = por %p96, %p97
    %s99 = ssub.s32 %s16, %s28
    %s100 = ssub.s32 %s17, %s24
    %s101 = sor.u32 %s99, %s100
    %p102 = scmp.eq.s32.totalorder %s101, 0
    %s104 = sadd.s32 %s103, 1
    %s105 = scalar_select %p102, %s103, %s104
    %p108 = pneg %p102
    %p109 = scmp.eq.s32.totalorder %s9, 1
    %p110 = por %p108, %p109
    %p111 = scmp.ne.s32.totalorder %s103, %s106
    %p112 = scmp.eq.s32.totalorder %s9, 0
    %p113 = por %p111, %p112
    %p114 = scmp.ne.s32.totalorder %s103, %s106
    %p115 = scmp.eq.s32.totalorder %s14, 1
    %p116 = por %p114, %p115
    %p117 = scmp.ne.s32.totalorder %s106, %s107
    %p118 = scmp.eq.s32.totalorder %s14, 0
    %p119 = por %p117, %p118
    %p120 = scmp.ne.s32.totalorder %s106, %s107
    %p121 = scmp.eq.s32.totalorder %s15, 1
    %p122 = por %p120, %p121
    %p124 = scmp.ne.s32.totalorder %s107, %s123
    %p125 = scmp.eq.s32.totalorder %s15, 0
    %p126 = por %p124, %p125
    %p127 = scmp.le.s32.totalorder 1, %s9
    %p128 = scmp.lt.s32.totalorder %s9, 3
    %p129 = pnand %p127, %p128
    %p130 = pneg %p129
    // Predicated region
    $region9: #{esa_forward.13} parent=5 // pred_check
      _
    $region10: #{esa_forward.13} parent=5 // pred_check_branch
      %132 = sbr.rel (%p129) target = $region12
    $region11: #{esa_forward.13} parent=5 // pred_region
      %s133 = ssub.s32 %s9, 1
      // Predicated region
      $region13: #{esa_forward.13} parent=11 // pred_check
        %p134 = pneg %p70
      $region14: #{esa_forward.13} parent=11 // pred_check_branch
        %136 = sbr.rel (%p134) target = $region16
      $region15: #{esa_forward.13} parent=11 // pred_region
        _
      $region16: #{esa_forward.13} parent=11 // pred_fallthru
        _
      // Predicated region
      $region17: #{esa_forward.13} parent=11 // pred_check
        %p137 = pneg %p91
      $region18: #{esa_forward.13} parent=11 // pred_check_branch
        %139 = sbr.rel (%p137) target = $region20
      $region19: #{esa_forward.13} parent=11 // pred_region
        _
      $region20: #{esa_forward.13} parent=11 // pred_fallthru
        _
    $region12: #{esa_forward.13} parent=5 // pred_fallthru
      _
    %p140 = scmp.lt.s32.totalorder %s9, 2
    // Predicated region
    $region21: #{esa_forward.13} parent=5 // pred_check
      %p141 = pneg %p140
    $region22: #{esa_forward.13} parent=5 // pred_check_branch
      %143 = sbr.rel (%p141) target = $region24
    $region23: #{esa_forward.13} parent=5 // pred_region
      // Predicated region
      $region25: #{esa_forward.13} parent=23 // pred_check
        %p144 = pneg %p43
      $region26: #{esa_forward.13} parent=23 // pred_check_branch
        %146 = sbr.rel (%p144) target = $region28
      $region27: #{esa_forward.13} parent=23 // pred_region
        %p147 = scmp.lt.s32.totalorder %s16, 1
        %s148 = scalar_select %p147, %s16, 1
        %p149 = scmp.lt.s32.totalorder %s17, 0
        %s150 = scalar_select %p149, %s17, 0
        %s151 = smul.addr %s148, 5
        %s152 = sadd.s32 %s150, %s151
        %s153 = smul.addr %s152, 4
        %s154 = scalar_lea.vmem %s0, %s153
      $region28: #{esa_forward.13} parent=23 // pred_fallthru
        _
    $region24: #{esa_forward.13} parent=5 // pred_fallthru
      _
    %p155 = scmp.le.s32.totalorder 1, %s9
    %p156 = scmp.lt.s32.totalorder %s9, 3
    %p157 = pnand %p155, %p156
    %p158 = pneg %p157
    // Predicated region
    $region29: #{esa_forward.13} parent=5 // pred_check
      _
    $region30: #{esa_forward.13} parent=5 // pred_check_branch
      %160 = sbr.rel (%p157) target = $region32
    $region31: #{esa_forward.13} parent=5 // pred_region
      %s161 = ssub.s32 %s9, 1
      %p162 = scmp.lt.s32.totalorder %s18, 1
      %s163 = scalar_select %p162, %s18, 1
      %p164 = scmp.lt.s32.totalorder %s19, 0
      %s165 = scalar_select %p164, %s19, 0
      %s166 = smul.addr %s163, 5
      %s167 = sadd.s32 %s165, %s166
      %s168 = smul.addr %s167, 4
      %s169 = scalar_lea.vmem %s0, %s168
      %p170 = pneg %p49
      %p171 = pneg %p46
      %p172 = pneg %p70
      %p173 = pneg %p67
      %p174 = pneg %p91
      %p175 = pneg %p88
      %p176 = pneg %p119
      %p177 = pneg %p116
      %p178 = scmp.lt.s32.totalorder %s18, 1
      %s179 = scalar_select %p178, %s18, 1
      %p180 = scmp.lt.s32.totalorder %s19, 0
      %s181 = scalar_select %p180, %s19, 0
      %s182 = sadd.s32 %s181, %s179
      %s183 = smul.addr %s182, 2
      %s184 = scalar_lea.vmem %s3, %s183
      %p185 = scmp.lt.s32.totalorder %s18, 1
      %s186 = scalar_select %p185, %s18, 1
      %p187 = scmp.lt.s32.totalorder %s19, 0
      %s188 = scalar_select %p187, %s19, 0
      %s189 = smul.addr %s186, 5
      %s190 = sadd.s32 %s188, %s189
      %s191 = smul.addr %s190, 4
      %s192 = scalar_lea.vmem %s0, %s191
      %p193 = scmp.lt.s32.totalorder %s18, 1
      %s194 = scalar_select %p193, %s18, 1
      %p195 = scmp.lt.s32.totalorder %s19, 0
      %s196 = scalar_select %p195, %s19, 0
      %s197 = sadd.s32 %s196, %s194
      %s198 = smul.addr %s197, 2
      %s199 = scalar_lea.vmem %s3, %s198
      %v201 = vld [vmem:[%s1] sm:$0x3]
      %v202 = vld [vmem:[%s192] sm:$0xf]
      %v203 = vld [vmem:[%s192 + $0x4] sm:$0xf]
      %v204 = vld [vmem:[%s192 + $0x8] sm:$0xf]
      %v205 = vld [vmem:[%s192 + $0xc] sm:$0xf]
      %v206 = vld [vmem:[%s192 + $0x10] sm:$0x3]
      %v207 = vld [vmem:[%s2] sm:$0xf]
      %v213 = vunpack.c.l.b16 %v202
      %v214 = vunpack.c.l.b16 %v203
      %v215 = vunpack.c.l.b16 %v204
      %v216 = vunpack.c.l.b16 %v205
      %v217 = vunpack.c.l.b16 %v206
      %v218 = vpack.c.b16 %v214, %v213
      %v219 = vpack.c.b16 %v216, %v215
      %v220 = vpack.c.b16 %v217, %v217
      %vm223 = vcmask 293888
      %v225 = vsel %vm223, %v201, 0
      %vm227 = vcmask 1041408
      %v229 = vsel %vm227, %v220, 0
      %231 = vmatprep.subr.bf16.mxu0 0
      %232 = vmatpush1.bf16.msra.mxu0 %v218
      %233 = vmatprep.subr.bf16.mxu0 0
      %234 = vmatpush1.bf16.msra.mxu0 %v219
      %235 = vmatprep.subr.bf16.mxu0 0
      %236 = vmatpush1.bf16.msra.mxu0 %v229
      %237 = vmatprep.subr.bf16.mxu0 0
      %238 = vmatpush1.bf16.msra.mxu0 0
      %239 = vmatprep.subr.bf16.mxu0 0
      %240 = vmatpush1.bf16.msra.mxu0 0
      %241 = vmatprep.subr.bf16.mxu0 0
      %242 = vmatpush1.bf16.msra.mxu0 0
      %243 = vmatprep.subr.bf16.mxu0 0
      %244 = vmatpush1.bf16.msra.mxu0 0
      %245 = vmatprep.subr.bf16.mxu0 0
      %246 = vmatpush1.bf16.msra.mxu0 0
      %247 = vmatprep.subr.bf16.mxu0 0
      %248 = vmatpush1.bf16.msra.mxu0 0
      %249 = vmatprep.subr.bf16.mxu0 0
      %250 = vmatpush1.bf16.msra.mxu0 0
      %251 = vmatprep.subr.bf16.mxu0 0
      %252 = vmatpush1.bf16.msra.mxu0 0
      %253 = vmatprep.subr.bf16.mxu0 0
      %254 = vmatpush1.bf16.msra.mxu0 0
      %255 = vmatprep.subr.bf16.mxu0 0
      %256 = vmatpush1.bf16.msra.mxu0 0
      %257 = vmatprep.subr.bf16.mxu0 0
      %258 = vmatpush1.bf16.msra.mxu0 0
      %259 = vmatprep.subr.bf16.mxu0 0
      %260 = vmatpush1.bf16.msra.mxu0 0
      %261 = vmatprep.subr.bf16.mxu0 0
      %262 = vmatpush1.bf16.msra.mxu0 0
      %263 = vmatprep.mubr.bf16.mxu0 0
      %264 = vmatmul.mubr.bf16.gmra.mrb[0].mxu0 %v225
      %v265 = vpop.f32.mrb[0].mxu0
      %v266 = vadd.f32 %v207, %v265
      %v267 = vpop.f32.mrb[0].mxu0
      %v268 = vpop.f32.mrb[0].mxu0
      %v269 = vpop.f32.mrb[0].mxu0
      %270 = vdwg.mxu0
      %v271 = vmax.f32 %v266, 0.0
      %v272 = vpack.c.bf16 %v271, %v271
      %vm273 = vcmask 1024
      %274 = vst.msk [vmem:[%s199] sm:$0x3] %vm273, %v272
      %p275 = scmp.lt.s32.totalorder %s18, 1
      %s276 = scalar_select %p275, %s18, 1
      %p277 = scmp.lt.s32.totalorder %s19, 0
      %s278 = scalar_select %p277, %s19, 0
      %s279 = sadd.s32 %s278, %s276
      %s280 = smul.addr %s279, 2
      %s281 = scalar_lea.vmem %s3, %s280
      // Predicated region
      $region33: #{esa_forward.13} parent=31 // pred_check
        %p282 = pneg %p116
      $region34: #{esa_forward.13} parent=31 // pred_check_branch
        %284 = sbr.rel (%p282) target = $region36
      $region35: #{esa_forward.13} parent=31 // pred_region
        _
      $region36: #{esa_forward.13} parent=31 // pred_fallthru
        _
    $region32: #{esa_forward.13} parent=5 // pred_fallthru
      _
    %p285 = scmp.le.s32.totalorder 2, %s9
    // Predicated region
    $region37: #{esa_forward.13} parent=5 // pred_check
      %p286 = pneg %p285
    $region38: #{esa_forward.13} parent=5 // pred_check_branch
      %288 = sbr.rel (%p286) target = $region40
    $region39: #{esa_forward.13} parent=5 // pred_region
      %s289 = ssub.s32 %s9, 2
      // Predicated region
      $region41: #{esa_forward.13} parent=39 // pred_check
        %p290 = pneg %p122
      $region42: #{esa_forward.13} parent=39 // pred_check_branch
        %292 = sbr.rel (%p290) target = $region44
      $region43: #{esa_forward.13} parent=39 // pred_region
        %p293 = scmp.lt.s32.totalorder %s20, 1
        %s294 = scalar_select %p293, %s20, 1
        %p295 = scmp.lt.s32.totalorder %s21, 0
        %s296 = scalar_select %p295, %s21, 0
        %s297 = sadd.s32 %s296, %s294
        %s298 = smul.addr %s297, 2
        %s299 = scalar_lea.vmem %s3, %s298
      $region44: #{esa_forward.13} parent=39 // pred_fallthru
        _
    $region40: #{esa_forward.13} parent=5 // pred_fallthru
      _
  $region6: #{esa_forward.13} parent=0 // loop_footer
    %s13 = sadd.s32 1, %s9
  $region7: #{esa_forward.13} parent=0 // loop_footer_branch
    %8 = sbr.rel target = $region3
  $region8: #{esa_forward.13} parent=0 // loop_exit
    _

// kernel: esa_forward.15
$region0: #{esa_forward.15}
  #allocation0 [shape = 'u32[]', space=smem, size = 0x4, offset = 0x4, fixed_abs, tag = 'smem constant byte address 0x4 - core index']
  #allocation1 [shape = 'u32[144,128]{1,0:T(1,128)}', space=vmem, size = 0x12000, scoped, tag = 'internal scratch']
  %s0 = inlined_call_operand.vmem [shape: bf16[2,36,1], index: 0, kind: input, shape index: {}]
  %s1 = inlined_call_operand.vmem [shape: bf16[4,36], index: 1, kind: input, shape index: {}]
  %s2 = inlined_call_operand.vmem [shape: f32[4,1], index: 2, kind: input, shape index: {}]
  %s3 = inlined_call_operand.vmem [shape: bf16[2,4,1], index: 3, kind: output, shape index: {}]
  %s4 = sld [smem:[#allocation0]]
  $region45: #{esa_forward.15} parent=0
    _
  %s6 = ssub.s32 1, %s4
  %s7 = scalar_select 0, %s6, %s4
  loop: start=0, step=1, limit=4
  $region2: #{esa_forward.15} parent=0 // loop_pre_header
    _
  $region3: #{esa_forward.15} parent=0 // loop_header
    %s9 = sphi 0, %s13
    %p10 = scmp.ge.s32.totalorder %s9, 4
    %s16 = sphi 0, %s28
    %s17 = sphi 0, %s24
    %s18 = sphi 0, %s16
    %s19 = sphi 0, %s17
    %s20 = sphi 0, %s18
    %s21 = sphi 0, %s19
    %s33 = sphi 0, %s35
    %s36 = sphi 0, %s33
    %s37 = sphi 0, %s36
    %s53 = sphi 0, %s37
    %s57 = sphi 0, %s57
    %s59 = sphi 0, %s57
    %s60 = sphi 0, %s59
    %s74 = sphi 0, %s60
    %s78 = sphi 0, %s78
    %s80 = sphi 0, %s78
    %s81 = sphi 0, %s80
    %s95 = sphi 0, %s81
    %s103 = sphi 0, %s105
    %s106 = sphi 0, %s103
    %s107 = sphi 0, %s106
    %s123 = sphi 0, %s107
  $region4: #{esa_forward.15} parent=0 // loop_header_branch
    %12 = sbr.rel (%p10) target = $region8
  $region5: #{esa_forward.15} parent=0 // loop_body
    %s14 = ssub.s32 %s9, 1
    %s15 = ssub.s32 %s9, 2
    %s22 = sadd.s32 1, %s17
    %p23 = scmp.ge.s32.totalorder %s22, 1
    %s24 = scalar_select %p23, 0, %s22
    %s25 = sadd.s32 1, %s16
    %s26 = scalar_select %p23, %s25, %s16
    %p27 = scmp.ge.s32.totalorder %s26, 2
    %s28 = scalar_select %p27, 0, %s26
    %s29 = ssub.s32 %s16, %s28
    %s30 = ssub.s32 %s17, %s24
    %s31 = sor.u32 %s29, %s30
    %p32 = scmp.eq.s32.totalorder %s31, 0
    %s34 = sadd.s32 %s33, 1
    %s35 = scalar_select %p32, %s33, %s34
    %p38 = pneg %p32
    %p39 = scmp.eq.s32.totalorder %s9, 1
    %p40 = por %p38, %p39
    %p41 = scmp.ne.s32.totalorder %s33, %s36
    %p42 = scmp.eq.s32.totalorder %s9, 0
    %p43 = por %p41, %p42
    %p44 = scmp.ne.s32.totalorder %s33, %s36
    %p45 = scmp.eq.s32.totalorder %s14, 1
    %p46 = por %p44, %p45
    %p47 = scmp.ne.s32.totalorder %s36, %s37
    %p48 = scmp.eq.s32.totalorder %s14, 0
    %p49 = por %p47, %p48
    %p50 = scmp.ne.s32.totalorder %s36, %s37
    %p51 = scmp.eq.s32.totalorder %s15, 1
    %p52 = por %p50, %p51
    %p54 = scmp.ne.s32.totalorder %s37, %s53
    %p55 = scmp.eq.s32.totalorder %s15, 0
    %p56 = por %p54, %p55
    %s58 = sadd.s32 %s57, 1
    %p61 = scmp.eq.s32.totalorder %s9, 1
    %p62 = scmp.ne.s32.totalorder %s57, %s59
    %p63 = scmp.eq.s32.totalorder %s9, 0
    %p64 = por %p62, %p63
    %p65 = scmp.ne.s32.totalorder %s57, %s59
    %p66 = scmp.eq.s32.totalorder %s14, 1
    %p67 = por %p65, %p66
    %p68 = scmp.ne.s32.totalorder %s59, %s60
    %p69 = scmp.eq.s32.totalorder %s14, 0
    %p70 = por %p68, %p69
    %p71 = scmp.ne.s32.totalorder %s59, %s60
    %p72 = scmp.eq.s32.totalorder %s15, 1
    %p73 = por %p71, %p72
    %p75 = scmp.ne.s32.totalorder %s60, %s74
    %p76 = scmp.eq.s32.totalorder %s15, 0
    %p77 = por %p75, %p76
    %s79 = sadd.s32 %s78, 1
    %p82 = scmp.eq.s32.totalorder %s9, 1
    %p83 = scmp.ne.s32.totalorder %s78, %s80
    %p84 = scmp.eq.s32.totalorder %s9, 0
    %p85 = por %p83, %p84
    %p86 = scmp.ne.s32.totalorder %s78, %s80
    %p87 = scmp.eq.s32.totalorder %s14, 1
    %p88 = por %p86, %p87
    %p89 = scmp.ne.s32.totalorder %s80, %s81
    %p90 = scmp.eq.s32.totalorder %s14, 0
    %p91 = por %p89, %p90
    %p92 = scmp.ne.s32.totalorder %s80, %s81
    %p93 = scmp.eq.s32.totalorder %s15, 1
    %p94 = por %p92, %p93
    %p96 = scmp.ne.s32.totalorder %s81, %s95
    %p97 = scmp.eq.s32.totalorder %s15, 0
    %p98 = por %p96, %p97
    %s99 = ssub.s32 %s16, %s28
    %s100 = ssub.s32 %s17, %s24
    %s101 = sor.u32 %s99, %s100
    %p102 = scmp.eq.s32.totalorder %s101, 0
    %s104 = sadd.s32 %s103, 1
    %s105 = scalar_select %p102, %s103, %s104
    %p108 = pneg %p102
    %p109 = scmp.eq.s32.totalorder %s9, 1
    %p110 = por %p108, %p109
    %p111 = scmp.ne.s32.totalorder %s103, %s106
    %p112 = scmp.eq.s32.totalorder %s9, 0
    %p113 = por %p111, %p112
    %p114 = scmp.ne.s32.totalorder %s103, %s106
    %p115 = scmp.eq.s32.totalorder %s14, 1
    %p116 = por %p114, %p115
    %p117 = scmp.ne.s32.totalorder %s106, %s107
    %p118 = scmp.eq.s32.totalorder %s14, 0
    %p119 = por %p117, %p118
    %p120 = scmp.ne.s32.totalorder %s106, %s107
    %p121 = scmp.eq.s32.totalorder %s15, 1
    %p122 = por %p120, %p121
    %p124 = scmp.ne.s32.totalorder %s107, %s123
    %p125 = scmp.eq.s32.totalorder %s15, 0
    %p126 = por %p124, %p125
    %p127 = scmp.le.s32.totalorder 1, %s9
    %p128 = scmp.lt.s32.totalorder %s9, 3
    %p129 = pnand %p127, %p128
    %p130 = pneg %p129
    // Predicated region
    $region9: #{esa_forward.15} parent=5 // pred_check
      _
    $region10: #{esa_forward.15} parent=5 // pred_check_branch
      %132 = sbr.rel (%p129) target = $region12
    $region11: #{esa_forward.15} parent=5 // pred_region
      %s133 = ssub.s32 %s9, 1
      // Predicated region
      $region13: #{esa_forward.15} parent=11 // pred_check
        %p134 = pneg %p70
      $region14: #{esa_forward.15} parent=11 // pred_check_branch
        %136 = sbr.rel (%p134) target = $region16
      $region15: #{esa_forward.15} parent=11 // pred_region
        _
      $region16: #{esa_forward.15} parent=11 // pred_fallthru
        _
      // Predicated region
      $region17: #{esa_forward.15} parent=11 // pred_check
        %p137 = pneg %p91
      $region18: #{esa_forward.15} parent=11 // pred_check_branch
        %139 = sbr.rel (%p137) target = $region20
      $region19: #{esa_forward.15} parent=11 // pred_region
        _
      $region20: #{esa_forward.15} parent=11 // pred_fallthru
        _
    $region12: #{esa_forward.15} parent=5 // pred_fallthru
      _
    %p140 = scmp.lt.s32.totalorder %s9, 2
    // Predicated region
    $region21: #{esa_forward.15} parent=5 // pred_check
      %p141 = pneg %p140
    $region22: #{esa_forward.15} parent=5 // pred_check_branch
      %143 = sbr.rel (%p141) target = $region24
    $region23: #{esa_forward.15} parent=5 // pred_region
      // Predicated region
      $region25: #{esa_forward.15} parent=23 // pred_check
        %p144 = pneg %p43
      $region26: #{esa_forward.15} parent=23 // pred_check_branch
        %146 = sbr.rel (%p144) target = $region28
      $region27: #{esa_forward.15} parent=23 // pred_region
        %p147 = scmp.lt.s32.totalorder %s16, 1
        %s148 = scalar_select %p147, %s16, 1
        %p149 = scmp.lt.s32.totalorder %s17, 0
        %s150 = scalar_select %p149, %s17, 0
        %s151 = smul.addr %s148, 5
        %s152 = sadd.s32 %s150, %s151
        %s153 = smul.addr %s152, 4
        %s154 = scalar_lea.vmem %s0, %s153
      $region28: #{esa_forward.15} parent=23 // pred_fallthru
        _
    $region24: #{esa_forward.15} parent=5 // pred_fallthru
      _
    %p155 = scmp.le.s32.totalorder 1, %s9
    %p156 = scmp.lt.s32.totalorder %s9, 3
    %p157 = pnand %p155, %p156
    %p158 = pneg %p157
    // Predicated region
    $region29: #{esa_forward.15} parent=5 // pred_check
      _
    $region30: #{esa_forward.15} parent=5 // pred_check_branch
      %160 = sbr.rel (%p157) target = $region32
    $region31: #{esa_forward.15} parent=5 // pred_region
      %s161 = ssub.s32 %s9, 1
      %p162 = scmp.lt.s32.totalorder %s18, 1
      %s163 = scalar_select %p162, %s18, 1
      %p164 = scmp.lt.s32.totalorder %s19, 0
      %s165 = scalar_select %p164, %s19, 0
      %s166 = smul.addr %s163, 5
      %s167 = sadd.s32 %s165, %s166
      %s168 = smul.addr %s167, 4
      %s169 = scalar_lea.vmem %s0, %s168
      %p170 = pneg %p49
      %p171 = pneg %p46
      %p172 = pneg %p70
      %p173 = pneg %p67
      %p174 = pneg %p91
      %p175 = pneg %p88
      %p176 = pneg %p119
      %p177 = pneg %p116
      %p178 = scmp.lt.s32.totalorder %s18, 1
      %s179 = scalar_select %p178, %s18, 1
      %p180 = scmp.lt.s32.totalorder %s19, 0
      %s181 = scalar_select %p180, %s19, 0
      %s182 = sadd.s32 %s181, %s179
      %s183 = smul.addr %s182, 2
      %s184 = scalar_lea.vmem %s3, %s183
      %p185 = scmp.lt.s32.totalorder %s18, 1
      %s186 = scalar_select %p185, %s18, 1
      %p187 = scmp.lt.s32.totalorder %s19, 0
      %s188 = scalar_select %p187, %s19, 0
      %s189 = smul.addr %s186, 5
      %s190 = sadd.s32 %s188, %s189
      %s191 = smul.addr %s190, 4
      %s192 = scalar_lea.vmem %s0, %s191
      %p193 = scmp.lt.s32.totalorder %s18, 1
      %s194 = scalar_select %p193, %s18, 1
      %p195 = scmp.lt.s32.totalorder %s19, 0
      %s196 = scalar_select %p195, %s19, 0
      %s197 = sadd.s32 %s196, %s194
      %s198 = smul.addr %s197, 2
      %s199 = scalar_lea.vmem %s3, %s198
      %v201 = vld [vmem:[%s1] sm:$0x3]
      %v202 = vld [vmem:[%s192] sm:$0xf]
      %v203 = vld [vmem:[%s192 + $0x4] sm:$0xf]
      %v204 = vld [vmem:[%s192 + $0x8] sm:$0xf]
      %v205 = vld [vmem:[%s192 + $0xc] sm:$0xf]
      %v206 = vld [vmem:[%s192 + $0x10] sm:$0x3]
      %v207 = vld [vmem:[%s2] sm:$0xf]
      %v213 = vunpack.c.l.b16 %v202
      %v214 = vunpack.c.l.b16 %v203
      %v215 = vunpack.c.l.b16 %v204
      %v216 = vunpack.c.l.b16 %v205
      %v217 = vunpack.c.l.b16 %v206
      %v218 = vpack.c.b16 %v214, %v213
      %v219 = vpack.c.b16 %v216, %v215
      %v220 = vpack.c.b16 %v217, %v217
      %vm223 = vcmask 293888
      %v225 = vsel %vm223, %v201, 0
      %vm227 = vcmask 1041408
      %v229 = vsel %vm227, %v220, 0
      %231 = vmatprep.subr.bf16.mxu0 0
      %232 = vmatpush1.bf16.msra.mxu0 %v218
      %233 = vmatprep.subr.bf16.mxu0 0
      %234 = vmatpush1.bf16.msra.mxu0 %v219
      %235 = vmatprep.subr.bf16.mxu0 0
      %236 = vmatpush1.bf16.msra.mxu0 %v229
      %237 = vmatprep.subr.bf16.mxu0 0
      %238 = vmatpush1.bf16.msra.mxu0 0
      %239 = vmatprep.subr.bf16.mxu0 0
      %240 = vmatpush1.bf16.msra.mxu0 0
      %241 = vmatprep.subr.bf16.mxu0 0
      %242 = vmatpush1.bf16.msra.mxu0 0
      %243 = vmatprep.subr.bf16.mxu0 0
      %244 = vmatpush1.bf16.msra.mxu0 0
      %245 = vmatprep.subr.bf16.mxu0 0
      %246 = vmatpush1.bf16.msra.mxu0 0
      %247 = vmatprep.subr.bf16.mxu0 0
      %248 = vmatpush1.bf16.msra.mxu0 0
      %249 = vmatprep.subr.bf16.mxu0 0
      %250 = vmatpush1.bf16.msra.mxu0 0
      %251 = vmatprep.subr.bf16.mxu0 0
      %252 = vmatpush1.bf16.msra.mxu0 0
      %253 = vmatprep.subr.bf16.mxu0 0
      %254 = vmatpush1.bf16.msra.mxu0 0
      %255 = vmatprep.subr.bf16.mxu0 0
      %256 = vmatpush1.bf16.msra.mxu0 0
      %257 = vmatprep.subr.bf16.mxu0 0
      %258 = vmatpush1.bf16.msra.mxu0 0
      %259 = vmatprep.subr.bf16.mxu0 0
      %260 = vmatpush1.bf16.msra.mxu0 0
      %261 = vmatprep.subr.bf16.mxu0 0
      %262 = vmatpush1.bf16.msra.mxu0 0
      %263 = vmatprep.mubr.bf16.mxu0 0
      %264 = vmatmul.mubr.bf16.gmra.mrb[0].mxu0 %v225
      %v265 = vpop.f32.mrb[0].mxu0
      %v266 = vadd.f32 %v207, %v265
      %v267 = vpop.f32.mrb[0].mxu0
      %v268 = vpop.f32.mrb[0].mxu0
      %v269 = vpop.f32.mrb[0].mxu0
      %270 = vdwg.mxu0
      %v271 = vpack.c.bf16 %v266, %v266
      %vm272 = vcmask 1024
      %273 = vst.msk [vmem:[%s199] sm:$0x3] %vm272, %v271
      %p274 = scmp.lt.s32.totalorder %s18, 1
      %s275 = scalar_select %p274, %s18, 1
      %p276 = scmp.lt.s32.totalorder %s19, 0
      %s277 = scalar_select %p276, %s19, 0
      %s278 = sadd.s32 %s277, %s275
      %s279 = smul.addr %s278, 2
      %s280 = scalar_lea.vmem %s3, %s279
      // Predicated region
      $region33: #{esa_forward.15} parent=31 // pred_check
        %p281 = pneg %p116
      $region34: #{esa_forward.15} parent=31 // pred_check_branch
        %283 = sbr.rel (%p281) target = $region36
      $region35: #{esa_forward.15} parent=31 // pred_region
        _
      $region36: #{esa_forward.15} parent=31 // pred_fallthru
        _
    $region32: #{esa_forward.15} parent=5 // pred_fallthru
      _
    %p284 = scmp.le.s32.totalorder 2, %s9
    // Predicated region
    $region37: #{esa_forward.15} parent=5 // pred_check
      %p285 = pneg %p284
    $region38: #{esa_forward.15} parent=5 // pred_check_branch
      %287 = sbr.rel (%p285) target = $region40
    $region39: #{esa_forward.15} parent=5 // pred_region
      %s288 = ssub.s32 %s9, 2
      // Predicated region
      $region41: #{esa_forward.15} parent=39 // pred_check
        %p289 = pneg %p122
      $region42: #{esa_forward.15} parent=39 // pred_check_branch
        %291 = sbr.rel (%p289) target = $region44
      $region43: #{esa_forward.15} parent=39 // pred_region
        %p292 = scmp.lt.s32.totalorder %s20, 1
        %s293 = scalar_select %p292, %s20, 1
        %p294 = scmp.lt.s32.totalorder %s21, 0
        %s295 = scalar_select %p294, %s21, 0
        %s296 = sadd.s32 %s295, %s293
        %s297 = smul.addr %s296, 2
        %s298 = scalar_lea.vmem %s3, %s297
      $region44: #{esa_forward.15} parent=39 // pred_fallthru
        _
    $region40: #{esa_forward.15} parent=5 // pred_fallthru
      _
  $region6: #{esa_forward.15} parent=0 // loop_footer
    %s13 = sadd.s32 1, %s9
  $region7: #{esa_forward.15} parent=0 // loop_footer_branch
    %8 = sbr.rel target = $region3
  $region8: #{esa_forward.15} parent=0 // loop_exit
    _

// kernel: esa_forward.16
$region0: #{esa_forward.16}
  #allocation0 [shape = 'u32[]', space=smem, size = 0x4, offset = 0x4, fixed_abs, tag = 'smem constant byte address 0x4 - core index']
  #allocation1 [shape = 'u32[144,128]{1,0:T(1,128)}', space=vmem, size = 0x12000, scoped, tag = 'internal scratch']
  %s0 = inlined_call_operand.vmem [shape: bf16[16,1], index: 0, kind: input, shape index: {}]
  %s1 = inlined_call_operand.vmem [shape: bf16[8,1,1], index: 1, kind: input, shape index: {}]
  %s2 = inlined_call_operand.vmem [shape: bf16[1,16], index: 2, kind: input, shape index: {}]
  %s3 = inlined_call_operand.vmem [shape: bf16[8,16,16], index: 3, kind: output, shape index: {}]
  %s4 = sld [smem:[#allocation0]]
  $region45: #{esa_forward.16} parent=0
    _
  %s6 = ssub.s32 1, %s4
  %s7 = scalar_select 0, %s6, %s4
  loop: start=0, step=1, limit=10
  $region2: #{esa_forward.16} parent=0 // loop_pre_header
    _
  $region3: #{esa_forward.16} parent=0 // loop_header
    %s9 = sphi 0, %s13
    %p10 = scmp.ge.s32.totalorder %s9, 10
    %s17 = sphi 0, %s17
    %s19 = sphi 0, %s17
    %s20 = sphi 0, %s19
    %s34 = sphi 0, %s20
    %s40 = sphi 0, %s42
    %s43 = sphi 0, %s40
    %s44 = sphi 0, %s43
    %s60 = sphi 0, %s44
    %s64 = sphi 0, %s64
    %s66 = sphi 0, %s64
    %s67 = sphi 0, %s66
    %s81 = sphi 0, %s67
    %s87 = sphi 0, %s89
    %s90 = sphi 0, %s87
    %s91 = sphi 0, %s90
    %s107 = sphi 0, %s91
  $region4: #{esa_forward.16} parent=0 // loop_header_branch
    %12 = sbr.rel (%p10) target = $region8
  $region5: #{esa_forward.16} parent=0 // loop_body
    %s14 = ssub.s32 %s9, 1
    %s15 = ssub.s32 %s9, 2
    %s16 = sadd.s32 %s9, 1
    %s18 = sadd.s32 %s17, 1
    %p21 = scmp.eq.s32.totalorder %s9, 7
    %p22 = scmp.ne.s32.totalorder %s17, %s19
    %p23 = scmp.eq.s32.totalorder %s9, 0
    %p24 = por %p22, %p23
    %p25 = scmp.ne.s32.totalorder %s17, %s19
    %p26 = scmp.eq.s32.totalorder %s14, 7
    %p27 = por %p25, %p26
    %p28 = scmp.ne.s32.totalorder %s19, %s20
    %p29 = scmp.eq.s32.totalorder %s14, 0
    %p30 = por %p28, %p29
    %p31 = scmp.ne.s32.totalorder %s19, %s20
    %p32 = scmp.eq.s32.totalorder %s15, 7
    %p33 = por %p31, %p32
    %p35 = scmp.ne.s32.totalorder %s20, %s34
    %p36 = scmp.eq.s32.totalorder %s15, 0
    %p37 = por %p35, %p36
    %s38 = ssub.s32 %s9, %s16
    %p39 = scmp.eq.s32.totalorder %s38, 0
    %s41 = sadd.s32 %s40, 1
    %s42 = scalar_select %p39, %s40, %s41
    %p45 = pneg %p39
    %p46 = scmp.eq.s32.totalorder %s9, 7
    %p47 = por %p45, %p46
    %p48 = scmp.ne.s32.totalorder %s40, %s43
    %p49 = scmp.eq.s32.totalorder %s9, 0
    %p50 = por %p48, %p49
    %p51 = scmp.ne.s32.totalorder %s40, %s43
    %p52 = scmp.eq.s32.totalorder %s14, 7
    %p53 = por %p51, %p52
    %p54 = scmp.ne.s32.totalorder %s43, %s44
    %p55 = scmp.eq.s32.totalorder %s14, 0
    %p56 = por %p54, %p55
    %p57 = scmp.ne.s32.totalorder %s43, %s44
    %p58 = scmp.eq.s32.totalorder %s15, 7
    %p59 = por %p57, %p58
    %p61 = scmp.ne.s32.totalorder %s44, %s60
    %p62 = scmp.eq.s32.totalorder %s15, 0
    %p63 = por %p61, %p62
    %s65 = sadd.s32 %s64, 1
    %p68 = scmp.eq.s32.totalorder %s9, 7
    %p69 = scmp.ne.s32.totalorder %s64, %s66
    %p70 = scmp.eq.s32.totalorder %s9, 0
    %p71 = por %p69, %p70
    %p72 = scmp.ne.s32.totalorder %s64, %s66
    %p73 = scmp.eq.s32.totalorder %s14, 7
    %p74 = por %p72, %p73
    %p75 = scmp.ne.s32.totalorder %s66, %s67
    %p76 = scmp.eq.s32.totalorder %s14, 0
    %p77 = por %p75, %p76
    %p78 = scmp.ne.s32.totalorder %s66, %s67
    %p79 = scmp.eq.s32.totalorder %s15, 7
    %p80 = por %p78, %p79
    %p82 = scmp.ne.s32.totalorder %s67, %s81
    %p83 = scmp.eq.s32.totalorder %s15, 0
    %p84 = por %p82, %p83
    %s85 = ssub.s32 %s9, %s16
    %p86 = scmp.eq.s32.totalorder %s85, 0
    %s88 = sadd.s32 %s87, 1
    %s89 = scalar_select %p86, %s87, %s88
    %p92 = pneg %p86
    %p93 = scmp.eq.s32.totalorder %s9, 7
    %p94 = por %p92, %p93
    %p95 = scmp.ne.s32.totalorder %s87, %s90
    %p96 = scmp.eq.s32.totalorder %s9, 0
    %p97 = por %p95, %p96
    %p98 = scmp.ne.s32.totalorder %s87, %s90
    %p99 = scmp.eq.s32.totalorder %s14, 7
    %p100 = por %p98, %p99
    %p101 = scmp.ne.s32.totalorder %s90, %s91
    %p102 = scmp.eq.s32.totalorder %s14, 0
    %p103 = por %p101, %p102
    %p104 = scmp.ne.s32.totalorder %s90, %s91
    %p105 = scmp.eq.s32.totalorder %s15, 7
    %p106 = por %p104, %p105
    %p108 = scmp.ne.s32.totalorder %s91, %s107
    %p109 = scmp.eq.s32.totalorder %s15, 0
    %p110 = por %p108, %p109
    %p111 = scmp.le.s32.totalorder 1, %s9
    %p112 = scmp.lt.s32.totalorder %s9, 9
    %p113 = pnand %p111, %p112
    %p114 = pneg %p113
    // Predicated region
    $region9: #{esa_forward.16} parent=5 // pred_check
      _
    $region10: #{esa_forward.16} parent=5 // pred_check_branch
      %116 = sbr.rel (%p113) target = $region12
    $region11: #{esa_forward.16} parent=5 // pred_region
      %s117 = ssub.s32 %s9, 1
      // Predicated region
      $region13: #{esa_forward.16} parent=11 // pred_check
        %p118 = pneg %p30
      $region14: #{esa_forward.16} parent=11 // pred_check_branch
        %120 = sbr.rel (%p118) target = $region16
      $region15: #{esa_forward.16} parent=11 // pred_region
        _
      $region16: #{esa_forward.16} parent=11 // pred_fallthru
        _
      // Predicated region
      $region17: #{esa_forward.16} parent=11 // pred_check
        %p121 = pneg %p77
      $region18: #{esa_forward.16} parent=11 // pred_check_branch
        %123 = sbr.rel (%p121) target = $region20
      $region19: #{esa_forward.16} parent=11 // pred_region
        _
      $region20: #{esa_forward.16} parent=11 // pred_fallthru
        _
    $region12: #{esa_forward.16} parent=5 // pred_fallthru
      _
    %p124 = scmp.lt.s32.totalorder %s9, 8
    // Predicated region
    $region21: #{esa_forward.16} parent=5 // pred_check
      %p125 = pneg %p124
    $region22: #{esa_forward.16} parent=5 // pred_check_branch
      %127 = sbr.rel (%p125) target = $region24
    $region23: #{esa_forward.16} parent=5 // pred_region
      // Predicated region
      $region25: #{esa_forward.16} parent=23 // pred_check
        %p128 = pneg %p50
      $region26: #{esa_forward.16} parent=23 // pred_check_branch
        %130 = sbr.rel (%p128) target = $region28
      $region27: #{esa_forward.16} parent=23 // pred_region
        %p131 = scmp.lt.s32.totalorder %s9, 7
        %s132 = scalar_select %p131, %s9, 7
        %s133 = scalar_lea.vmem %s1, %s132
      $region28: #{esa_forward.16} parent=23 // pred_fallthru
        _
    $region24: #{esa_forward.16} parent=5 // pred_fallthru
      _
    %p134 = scmp.le.s32.totalorder 1, %s9
    %p135 = scmp.lt.s32.totalorder %s9, 9
    %p136 = pnand %p134, %p135
    %p137 = pneg %p136
    // Predicated region
    $region29: #{esa_forward.16} parent=5 // pred_check
      _
    $region30: #{esa_forward.16} parent=5 // pred_check_branch
      %139 = sbr.rel (%p136) target = $region32
    $region31: #{esa_forward.16} parent=5 // pred_region
      %s140 = ssub.s32 %s9, 1
      %p141 = pneg %p30
      %p142 = pneg %p27
      %p143 = scmp.lt.s32.totalorder %s14, 7
      %s144 = scalar_select %p143, %s14, 7
      %s145 = scalar_lea.vmem %s1, %s144
      %p146 = pneg %p56
      %p147 = pneg %p53
      %p148 = pneg %p77
      %p149 = pneg %p74
      %p150 = pneg %p103
      %p151 = pneg %p100
      %p152 = scmp.lt.s32.totalorder %s14, 7
      %s153 = scalar_select %p152, %s14, 7
      %s154 = smul.addr %s153, 2
      %s155 = smul.addr %s154, 4
      %s156 = scalar_lea.vmem %s3, %s155
      %p157 = scmp.lt.s32.totalorder %s14, 7
      %s158 = scalar_select %p157, %s14, 7
      %s159 = scalar_lea.vmem %s1, %s158
      %p160 = scmp.lt.s32.totalorder %s14, 7
      %s161 = scalar_select %p160, %s14, 7
      %s162 = smul.addr %s161, 2
      %s163 = smul.addr %s162, 4
      %s164 = scalar_lea.vmem %s3, %s163
      %v166 = vld [vmem:[%s0] sm:$0xf]
      %v167 = vld [vmem:[%s0 + $0x4] sm:$0xf]
      %v168 = vld [vmem:[%s159] sm:$0x1]
      %v171 = vunpack.c.l.b16 %v166
      %v172 = vunpack.c.l.b16 %v167
      %v173 = vpack.c.b16 %v172, %v171
      %vm174 = vcmask 7168
      %v176 = vsel %vm174, %v173, 0
      %vm178 = vcmask 1040384
      %v179 = vsel 0, 4294967295, 65535
      %v180 = vsel %vm178, %v179, 0
      %v182 = vand.u32 %v168, %v180
      %184 = vmatprep.subr.bf16.mxu0 0
      %185 = vmatpush1.bf16.msra.mxu0 %v182
      %186 = vmatprep.subr.bf16.mxu0 0
      %187 = vmatpush1.bf16.msra.mxu0 0
      %188 = vmatprep.subr.bf16.mxu0 0
      %189 = vmatpush1.bf16.msra.mxu0 0
      %190 = vmatprep.subr.bf16.mxu0 0
      %191 = vmatpush1.bf16.msra.mxu0 0
      %192 = vmatprep.subr.bf16.mxu0 0
      %193 = vmatpush1.bf16.msra.mxu0 0
      %194 = vmatprep.subr.bf16.mxu0 0
      %195 = vmatpush1.bf16.msra.mxu0 0
      %196 = vmatprep.subr.bf16.mxu0 0
      %197 = vmatpush1.bf16.msra.mxu0 0
      %198 = vmatprep.subr.bf16.mxu0 0
      %199 = vmatpush1.bf16.msra.mxu0 0
      %200 = vmatprep.subr.bf16.mxu0 0
      %201 = vmatpush1.bf16.msra.mxu0 0
      %202 = vmatprep.subr.bf16.mxu0 0
      %203 = vmatpush1.bf16.msra.mxu0 0
      %204 = vmatprep.subr.bf16.mxu0 0
      %205 = vmatpush1.bf16.msra.mxu0 0
      %206 = vmatprep.subr.bf16.mxu0 0
      %207 = vmatpush1.bf16.msra.mxu0 0
      %208 = vmatprep.subr.bf16.mxu0 0
      %209 = vmatpush1.bf16.msra.mxu0 0
      %210 = vmatprep.subr.bf16.mxu0 0
      %211 = vmatpush1.bf16.msra.mxu0 0
      %212 = vmatprep.subr.bf16.mxu0 0
      %213 = vmatpush1.bf16.msra.mxu0 0
      %214 = vmatprep.subr.bf16.mxu0 0
      %215 = vmatpush1.bf16.msra.mxu0 0
      %216 = vmatprep.mubr.bf16.mxu0 0
      %217 = vmatmul.mubr.bf16.gmra.mrb[0].mxu0 %v176
      %v218 = vpop.f32.mrb[0].mxu0
      %v219 = vadd.f32 0.0, %v218
      %v220 = vpop.f32.mrb[0].mxu0
      %v221 = vpop.f32.mrb[0].mxu0
      %v222 = vadd.f32 0.0, %v221
      %v223 = vpop.f32.mrb[0].mxu0
      %224 = vdwg.mxu0
      %v225 = vpack.c.bf16 %v222, %v219
      %v226 = vld [vmem:[%s2] sm:$0x1]
      %v228 = vsel %vm174, %v225, 0
      %v231 = vand.u32 %v226, %v180
      %233 = vmatprep.subr.bf16.mxu0 0
      %234 = vmatpush1.bf16.msra.mxu0 %v231
      %235 = vmatprep.subr.bf16.mxu0 0
      %236 = vmatpush1.bf16.msra.mxu0 0
      %237 = vmatprep.subr.bf16.mxu0 0
      %238 = vmatpush1.bf16.msra.mxu0 0
      %239 = vmatprep.subr.bf16.mxu0 0
      %240 = vmatpush1.bf16.msra.mxu0 0
      %241 = vmatprep.subr.bf16.mxu0 0
      %242 = vmatpush1.bf16.msra.mxu0 0
      %243 = vmatprep.subr.bf16.mxu0 0
      %244 = vmatpush1.bf16.msra.mxu0 0
      %245 = vmatprep.subr.bf16.mxu0 0
      %246 = vmatpush1.bf16.msra.mxu0 0
      %247 = vmatprep.subr.bf16.mxu0 0
      %248 = vmatpush1.bf16.msra.mxu0 0
      %249 = vmatprep.subr.bf16.mxu0 0
      %250 = vmatpush1.bf16.msra.mxu0 0
      %251 = vmatprep.subr.bf16.mxu0 0
      %252 = vmatpush1.bf16.msra.mxu0 0
      %253 = vmatprep.subr.bf16.mxu0 0
      %254 = vmatpush1.bf16.msra.mxu0 0
      %255 = vmatprep.subr.bf16.mxu0 0
      %256 = vmatpush1.bf16.msra.mxu0 0
      %257 = vmatprep.subr.bf16.mxu0 0
      %258 = vmatpush1.bf16.msra.mxu0 0
      %259 = vmatprep.subr.bf16.mxu0 0
      %260 = vmatpush1.bf16.msra.mxu0 0
      %261 = vmatprep.subr.bf16.mxu0 0
      %262 = vmatpush1.bf16.msra.mxu0 0
      %263 = vmatprep.subr.bf16.mxu0 0
      %264 = vmatpush1.bf16.msra.mxu0 0
      %265 = vmatprep.mubr.bf16.mxu0 0
      %266 = vmatmul.mubr.bf16.gmra.mrb[0].mxu0 %v228
      %v267 = vpop.f32.mrb[0].mxu0
      %v268 = vadd.f32 0.0, %v267
      %v269 = vpop.f32.mrb[0].mxu0
      %v270 = vpop.f32.mrb[0].mxu0
      %v271 = vadd.f32 0.0, %v270
      %v272 = vpop.f32.mrb[0].mxu0
      %273 = vdwg.mxu0
      %v274 = vpack.c.bf16 %v271, %v268
      %v276 = vunpack.c.l.b16 %v274
      %v277 = vunpack.c.h.b16 %v274
      %v278 = vpack.c.b16 %v276, %v276
      %v279 = vpack.c.b16 %v277, %v277
      %vm282 = vcmask 125952
      %283 = vst.msk [vmem:[%s164] sm:$0xf] %vm282, %v278
      %284 = vst.msk [vmem:[%s164 + $0x4] sm:$0xf] %vm282, %v279
      %p285 = scmp.lt.s32.totalorder %s14, 7
      %s286 = scalar_select %p285, %s14, 7
      %s287 = smul.addr %s286, 2
      %s288 = smul.addr %s287, 4
      %s289 = scalar_lea.vmem %s3, %s288
      // Predicated region
      $region33: #{esa_forward.16} parent=31 // pred_check
        %p290 = pneg %p100
      $region34: #{esa_forward.16} parent=31 // pred_check_branch
        %292 = sbr.rel (%p290) target = $region36
      $region35: #{esa_forward.16} parent=31 // pred_region
        _
      $region36: #{esa_forward.16} parent=31 // pred_fallthru
        _
    $region32: #{esa_forward.16} parent=5 // pred_fallthru
      _
    %p293 = scmp.le.s32.totalorder 2, %s9
    // Predicated region
    $region37: #{esa_forward.16} parent=5 // pred_check
      %p294 = pneg %p293
    $region38: #{esa_forward.16} parent=5 // pred_check_branch
      %296 = sbr.rel (%p294) target = $region40
    $region39: #{esa_forward.16} parent=5 // pred_region
      %s297 = ssub.s32 %s9, 2
      // Predicated region
      $region41: #{esa_forward.16} parent=39 // pred_check
        %p298 = pneg %p106
      $region42: #{esa_forward.16} parent=39 // pred_check_branch
        %300 = sbr.rel (%p298) target = $region44
      $region43: #{esa_forward.16} parent=39 // pred_region
        %p301 = scmp.lt.s32.totalorder %s15, 7
        %s302 = scalar_select %p301, %s15, 7
        %s303 = smul.addr %s302, 2
        %s304 = smul.addr %s303, 4
        %s305 = scalar_lea.vmem %s3, %s304
      $region44: #{esa_forward.16} parent=39 // pred_fallthru
        _
    $region40: #{esa_forward.16} parent=5 // pred_fallthru
      _
  $region6: #{esa_forward.16} parent=0 // loop_footer
    %s13 = sadd.s32 1, %s9
  $region7: #{esa_forward.16} parent=0 // loop_footer_branch
    %8 = sbr.rel target = $region3
  $region8: #{esa_forward.16} parent=0 // loop_exit
    _

// kernel: esa_forward.17
$region0: #{esa_forward.17}
  #allocation0 [shape = 'u32[]', space=smem, size = 0x4, offset = 0x4, fixed_abs, tag = 'smem constant byte address 0x4 - core index']
  #allocation1 [shape = 'u32[144,128]{1,0:T(1,128)}', space=vmem, size = 0x12000, scoped, tag = 'internal scratch']
  %s0 = inlined_call_operand.vmem [shape: f32[2,16,256], index: 0, kind: input, shape index: {}]
  %s1 = inlined_call_operand.vmem [shape: bf16[2,4,256], index: 1, kind: input, shape index: {}]
  %s2 = inlined_call_operand.vmem [shape: bf16[2,4,256], index: 2, kind: input, shape index: {}]
  %s3 = inlined_call_operand.vmem [shape: bf16[16,4], index: 3, kind: input, shape index: {}]
  %s4 = inlined_call_operand.vmem [shape: f32[16,1], index: 4, kind: input, shape index: {}]
  %s5 = inlined_call_operand.vmem [shape: f32[2,16,256], index: 5, kind: output, shape index: {}]
  %s6 = sld [smem:[#allocation0]]
  $region53: #{esa_forward.17} parent=0
    _
  %s8 = ssub.s32 1, %s6
  %s9 = scalar_select 0, %s8, %s6
  loop: start=0, step=1, limit=4
  $region2: #{esa_forward.17} parent=0 // loop_pre_header
    _
  $region3: #{esa_forward.17} parent=0 // loop_header
    %s11 = sphi 0, %s15
    %p12 = scmp.ge.s32.totalorder %s11, 4
    %s18 = sphi 0, %s30
    %s19 = sphi 0, %s26
    %s20 = sphi 0, %s18
    %s21 = sphi 0, %s19
    %s22 = sphi 0, %s20
    %s23 = sphi 0, %s21
    %s35 = sphi 0, %s37
    %s38 = sphi 0, %s35
    %s39 = sphi 0, %s38
    %s55 = sphi 0, %s39
    %s63 = sphi 0, %s65
    %s66 = sphi 0, %s63
    %s67 = sphi 0, %s66
    %s83 = sphi 0, %s67
    %s91 = sphi 0, %s93
    %s94 = sphi 0, %s91
    %s95 = sphi 0, %s94
    %s111 = sphi 0, %s95
    %s115 = sphi 0, %s115
    %s117 = sphi 0, %s115
    %s118 = sphi 0, %s117
    %s132 = sphi 0, %s118
    %s136 = sphi 0, %s136
    %s138 = sphi 0, %s136
    %s139 = sphi 0, %s138
    %s153 = sphi 0, %s139
    %s161 = sphi 0, %s163
    %s164 = sphi 0, %s161
    %s165 = sphi 0, %s164
    %s181 = sphi 0, %s165
  $region4: #{esa_forward.17} parent=0 // loop_header_branch
    %14 = sbr.rel (%p12) target = $region8
  $region5: #{esa_forward.17} parent=0 // loop_body
    %s16 = ssub.s32 %s11, 1
    %s17 = ssub.s32 %s11, 2
    %s24 = sadd.s32 1, %s19
    %p25 = scmp.ge.s32.totalorder %s24, 1
    %s26 = scalar_select %p25, 0, %s24
    %s27 = sadd.s32 1, %s18
    %s28 = scalar_select %p25, %s27, %s18
    %p29 = scmp.ge.s32.totalorder %s28, 2
    %s30 = scalar_select %p29, 0, %s28
    %s31 = ssub.s32 %s18, %s30
    %s32 = ssub.s32 %s19, %s26
    %s33 = sor.u32 %s31, %s32
    %p34 = scmp.eq.s32.totalorder %s33, 0
    %s36 = sadd.s32 %s35, 1
    %s37 = scalar_select %p34, %s35, %s36
    %p40 = pneg %p34
    %p41 = scmp.eq.s32.totalorder %s11, 1
    %p42 = por %p40, %p41
    %p43 = scmp.ne.s32.totalorder %s35, %s38
    %p44 = scmp.eq.s32.totalorder %s11, 0
    %p45 = por %p43, %p44
    %p46 = scmp.ne.s32.totalorder %s35, %s38
    %p47 = scmp.eq.s32.totalorder %s16, 1
    %p48 = por %p46, %p47
    %p49 = scmp.ne.s32.totalorder %s38, %s39
    %p50 = scmp.eq.s32.totalorder %s16, 0
    %p51 = por %p49, %p50
    %p52 = scmp.ne.s32.totalorder %s38, %s39
    %p53 = scmp.eq.s32.totalorder %s17, 1
    %p54 = por %p52, %p53
    %p56 = scmp.ne.s32.totalorder %s39, %s55
    %p57 = scmp.eq.s32.totalorder %s17, 0
    %p58 = por %p56, %p57
    %s59 = ssub.s32 %s18, %s30
    %s60 = ssub.s32 %s19, %s26
    %s61 = sor.u32 %s59, %s60
    %p62 = scmp.eq.s32.totalorder %s61, 0
    %s64 = sadd.s32 %s63, 1
    %s65 = scalar_select %p62, %s63, %s64
    %p68 = pneg %p62
    %p69 = scmp.eq.s32.totalorder %s11, 1
    %p70 = por %p68, %p69
    %p71 = scmp.ne.s32.totalorder %s63, %s66
    %p72 = scmp.eq.s32.totalorder %s11, 0
    %p73 = por %p71, %p72
    %p74 = scmp.ne.s32.totalorder %s63, %s66
    %p75 = scmp.eq.s32.totalorder %s16, 1
    %p76 = por %p74, %p75
    %p77 = scmp.ne.s32.totalorder %s66, %s67
    %p78 = scmp.eq.s32.totalorder %s16, 0
    %p79 = por %p77, %p78
    %p80 = scmp.ne.s32.totalorder %s66, %s67
    %p81 = scmp.eq.s32.totalorder %s17, 1
    %p82 = por %p80, %p81
    %p84 = scmp.ne.s32.totalorder %s67, %s83
    %p85 = scmp.eq.s32.totalorder %s17, 0
    %p86 = por %p84, %p85
    %s87 = ssub.s32 %s18, %s30
    %s88 = ssub.s32 %s19, %s26
    %s89 = sor.u32 %s87, %s88
    %p90 = scmp.eq.s32.totalorder %s89, 0
    %s92 = sadd.s32 %s91, 1
    %s93 = scalar_select %p90, %s91, %s92
    %p96 = pneg %p90
    %p97 = scmp.eq.s32.totalorder %s11, 1
    %p98 = por %p96, %p97
    %p99 = scmp.ne.s32.totalorder %s91, %s94
    %p100 = scmp.eq.s32.totalorder %s11, 0
    %p101 = por %p99, %p100
    %p102 = scmp.ne.s32.totalorder %s91, %s94
    %p103 = scmp.eq.s32.totalorder %s16, 1
    %p104 = por %p102, %p103
    %p105 = scmp.ne.s32.totalorder %s94, %s95
    %p106 = scmp.eq.s32.totalorder %s16, 0
    %p107 = por %p105, %p106
    %p108 = scmp.ne.s32.totalorder %s94, %s95
    %p109 = scmp.eq.s32.totalorder %s17, 1
    %p110 = por %p108, %p109
    %p112 = scmp.ne.s32.totalorder %s95, %s111
    %p113 = scmp.eq.s32.totalorder %s17, 0
    %p114 = por %p112, %p113
    %s116 = sadd.s32 %s115, 1
    %p119 = scmp.eq.s32.totalorder %s11, 1
    %p120 = scmp.ne.s32.totalorder %s115, %s117
    %p121 = scmp.eq.s32.totalorder %s11, 0
    %p122 = por %p120, %p121
    %p123 = scmp.ne.s32.totalorder %s115, %s117
    %p124 = scmp.eq.s32.totalorder %s16, 1
    %p125 = por %p123, %p124
    %p126 = scmp.ne.s32.totalorder %s117, %s118
    %p127 = scmp.eq.s32.totalorder %s16, 0
    %p128 = por %p126, %p127
    %p129 = scmp.ne.s32.totalorder %s117, %s118
    %p130 = scmp.eq.s32.totalorder %s17, 1
    %p131 = por %p129, %p130
    %p133 = scmp.ne.s32.totalorder %s118, %s132
    %p134 = scmp.eq.s32.totalorder %s17, 0
    %p135 = por %p133, %p134
    %s137 = sadd.s32 %s136, 1
    %p140 = scmp.eq.s32.totalorder %s11, 1
    %p141 = scmp.ne.s32.totalorder %s136, %s138
    %p142 = scmp.eq.s32.totalorder %s11, 0
    %p143 = por %p141, %p142
    %p144 = scmp.ne.s32.totalorder %s136, %s138
    %p145 = scmp.eq.s32.totalorder %s16, 1
    %p146 = por %p144, %p145
    %p147 = scmp.ne.s32.totalorder %s138, %s139
    %p148 = scmp.eq.s32.totalorder %s16, 0
    %p149 = por %p147, %p148
    %p150 = scmp.ne.s32.totalorder %s138, %s139
    %p151 = scmp.eq.s32.totalorder %s17, 1
    %p152 = por %p150, %p151
    %p154 = scmp.ne.s32.totalorder %s139, %s153
    %p155 = scmp.eq.s32.totalorder %s17, 0
    %p156 = por %p154, %p155
    %s157 = ssub.s32 %s18, %s30
    %s158 = ssub.s32 %s19, %s26
    %s159 = sor.u32 %s157, %s158
    %p160 = scmp.eq.s32.totalorder %s159, 0
    %s162 = sadd.s32 %s161, 1
    %s163 = scalar_select %p160, %s161, %s162
    %p166 = pneg %p160
    %p167 = scmp.eq.s32.totalorder %s11, 1
    %p168 = por %p166, %p167
    %p169 = scmp.ne.s32.totalorder %s161, %s164
    %p170 = scmp.eq.s32.totalorder %s11, 0
    %p171 = por %p169, %p170
    %p172 = scmp.ne.s32.totalorder %s161, %s164
    %p173 = scmp.eq.s32.totalorder %s16, 1
    %p174 = por %p172, %p173
    %p175 = scmp.ne.s32.totalorder %s164, %s165
    %p176 = scmp.eq.s32.totalorder %s16, 0
    %p177 = por %p175, %p176
    %p178 = scmp.ne.s32.totalorder %s164, %s165
    %p179 = scmp.eq.s32.totalorder %s17, 1
    %p180 = por %p178, %p179
    %p182 = scmp.ne.s32.totalorder %s165, %s181
    %p183 = scmp.eq.s32.totalorder %s17, 0
    %p184 = por %p182, %p183
    %p185 = scmp.le.s32.totalorder 1, %s11
    %p186 = scmp.lt.s32.totalorder %s11, 3
    %p187 = pnand %p185, %p186
    %p188 = pneg %p187
    // Predicated region
    $region9: #{esa_forward.17} parent=5 // pred_check
      _
    $region10: #{esa_forward.17} parent=5 // pred_check_branch
      %190 = sbr.rel (%p187) target = $region12
    $region11: #{esa_forward.17} parent=5 // pred_region
      %s191 = ssub.s32 %s11, 1
      // Predicated region
      $region13: #{esa_forward.17} parent=11 // pred_check
        %p192 = pneg %p128
      $region14: #{esa_forward.17} parent=11 // pred_check_branch
        %194 = sbr.rel (%p192) target = $region16
      $region15: #{esa_forward.17} parent=11 // pred_region
        _
      $region16: #{esa_forward.17} parent=11 // pred_fallthru
        _
      // Predicated region
      $region17: #{esa_forward.17} parent=11 // pred_check
        %p195 = pneg %p149
      $region18: #{esa_forward.17} parent=11 // pred_check_branch
        %197 = sbr.rel (%p195) target = $region20
      $region19: #{esa_forward.17} parent=11 // pred_region
        _
      $region20: #{esa_forward.17} parent=11 // pred_fallthru
        _
    $region12: #{esa_forward.17} parent=5 // pred_fallthru
      _
    %p198 = scmp.lt.s32.totalorder %s11, 2
    // Predicated region
    $region21: #{esa_forward.17} parent=5 // pred_check
      %p199 = pneg %p198
    $region22: #{esa_forward.17} parent=5 // pred_check_branch
      %201 = sbr.rel (%p199) target = $region24
    $region23: #{esa_forward.17} parent=5 // pred_region
      // Predicated region
      $region25: #{esa_forward.17} parent=23 // pred_check
        %p202 = pneg %p45
      $region26: #{esa_forward.17} parent=23 // pred_check_branch
        %204 = sbr.rel (%p202) target = $region28
      $region27: #{esa_forward.17} parent=23 // pred_region
        %s205 = smul.u32 2, %s19
        %p206 = scmp.lt.s32.totalorder %s18, 1
        %s207 = scalar_select %p206, %s18, 1
        %p208 = scmp.lt.s32.totalorder %s205, 1
        %s209 = scalar_select %p208, %s205, 1
        %s210 = smul.addr %s207, 4
        %s211 = sadd.s32 %s209, %s210
        %s212 = smul.addr %s211, 8
        %s213 = scalar_lea.vmem %s0, %s212
        %s214 = smul.u32 2, %s19
      $region28: #{esa_forward.17} parent=23 // pred_fallthru
        _
      // Predicated region
      $region29: #{esa_forward.17} parent=23 // pred_check
        %p215 = pneg %p73
      $region30: #{esa_forward.17} parent=23 // pred_check_branch
        %217 = sbr.rel (%p215) target = $region32
      $region31: #{esa_forward.17} parent=23 // pred_region
        %s218 = smul.u32 2, %s19
        %p219 = scmp.lt.s32.totalorder %s18, 1
        %s220 = scalar_select %p219, %s18, 1
        %p221 = scmp.lt.s32.totalorder %s218, 1
        %s222 = scalar_select %p221, %s218, 1
        %s223 = smul.addr %s220, 2
        %s224 = sadd.s32 %s222, %s223
        %s225 = smul.addr %s224, 2
        %s226 = scalar_lea.vmem %s1, %s225
        %s227 = smul.u32 2, %s19
      $region32: #{esa_forward.17} parent=23 // pred_fallthru
        _
      // Predicated region
      $region33: #{esa_forward.17} parent=23 // pred_check
        %p228 = pneg %p101
      $region34: #{esa_forward.17} parent=23 // pred_check_branch
        %230 = sbr.rel (%p228) target = $region36
      $region35: #{esa_forward.17} parent=23 // pred_region
        %s231 = smul.u32 2, %s19
        %p232 = scmp.lt.s32.totalorder %s18, 1
        %s233 = scalar_select %p232, %s18, 1
        %p234 = scmp.lt.s32.totalorder %s231, 1
        %s235 = scalar_select %p234, %s231, 1
        %s236 = smul.addr %s233, 2
        %s237 = sadd.s32 %s235, %s236
        %s238 = smul.addr %s237, 2
        %s239 = scalar_lea.vmem %s2, %s238
        %s240 = smul.u32 2, %s19
      $region36: #{esa_forward.17} parent=23 // pred_fallthru
        _
    $region24: #{esa_forward.17} parent=5 // pred_fallthru
      _
    %p241 = scmp.le.s32.totalorder 1, %s11
    %p242 = scmp.lt.s32.totalorder %s11, 3
    %p243 = pnand %p241, %p242
    %p244 = pneg %p243
    // Predicated region
    $region37: #{esa_forward.17} parent=5 // pred_check
      _
    $region38: #{esa_forward.17} parent=5 // pred_check_branch
      %246 = sbr.rel (%p243) target = $region40
    $region39: #{esa_forward.17} parent=5 // pred_region
      %s247 = ssub.s32 %s11, 1
      %s248 = smul.u32 2, %s21
      %p249 = scmp.lt.s32.totalorder %s20, 1
      %s250 = scalar_select %p249, %s20, 1
      %p251 = scmp.lt.s32.totalorder %s248, 1
      %s252 = scalar_select %p251, %s248, 1
      %s253 = smul.addr %s250, 4
      %s254 = sadd.s32 %s252, %s253
      %s255 = smul.addr %s254, 8
      %s256 = scalar_lea.vmem %s0, %s255
      %p257 = pneg %p51
      %p258 = pneg %p48
      %s259 = smul.u32 2, %s21
      %p260 = scmp.lt.s32.totalorder %s20, 1
      %s261 = scalar_select %p260, %s20, 1
      %p262 = scmp.lt.s32.totalorder %s259, 1
      %s263 = scalar_select %p262, %s259, 1
      %s264 = smul.addr %s261, 2
      %s265 = sadd.s32 %s263, %s264
      %s266 = smul.addr %s265, 2
      %s267 = scalar_lea.vmem %s1, %s266
      %p268 = pneg %p79
      %p269 = pneg %p76
      %s270 = smul.u32 2, %s21
      %p271 = scmp.lt.s32.totalorder %s20, 1
      %s272 = scalar_select %p271, %s20, 1
      %p273 = scmp.lt.s32.totalorder %s270, 1
      %s274 = scalar_select %p273, %s270, 1
      %s275 = smul.addr %s272, 2
      %s276 = sadd.s32 %s274, %s275
      %s277 = smul.addr %s276, 2
      %s278 = scalar_lea.vmem %s2, %s277
      %p279 = pneg %p107
      %p280 = pneg %p104
      %p281 = pneg %p128
      %p282 = pneg %p125
      %p283 = pneg %p149
      %p284 = pneg %p146
      %p285 = pneg %p177
      %p286 = pneg %p174
      %s287 = smul.u32 2, %s21
      %p288 = scmp.lt.s32.totalorder %s20, 1
      %s289 = scalar_select %p288, %s20, 1
      %p290 = scmp.lt.s32.totalorder %s287, 1
      %s291 = scalar_select %p290, %s287, 1
      %s292 = smul.addr %s289, 4
      %s293 = sadd.s32 %s291, %s292
      %s294 = smul.addr %s293, 8
      %s295 = scalar_lea.vmem %s5, %s294
      %s296 = smul.u32 2, %s21
      %p297 = scmp.lt.s32.totalorder %s20, 1
      %s298 = scalar_select %p297, %s20, 1
      %p299 = scmp.lt.s32.totalorder %s296, 1
      %s300 = scalar_select %p299, %s296, 1
      %s301 = smul.addr %s298, 4
      %s302 = sadd.s32 %s300, %s301
      %s303 = smul.addr %s302, 8
      %s304 = scalar_lea.vmem %s0, %s303
      %s305 = smul.u32 2, %s21
      %s306 = smul.u32 2, %s21
      %p307 = scmp.lt.s32.totalorder %s20, 1
      %s308 = scalar_select %p307, %s20, 1
      %p309 = scmp.lt.s32.totalorder %s306, 1
      %s310 = scalar_select %p309, %s306, 1
      %s311 = smul.addr %s308, 2
      %s312 = sadd.s32 %s310, %s311
      %s313 = smul.addr %s312, 2
      %s314 = scalar_lea.vmem %s1, %s313
      %s315 = smul.u32 2, %s21
      %s316 = smul.u32 2, %s21
      %p317 = scmp.lt.s32.totalorder %s20, 1
      %s318 = scalar_select %p317, %s20, 1
      %p319 = scmp.lt.s32.totalorder %s316, 1
      %s320 = scalar_select %p319, %s316, 1
      %s321 = smul.addr %s318, 2
      %s322 = sadd.s32 %s320, %s321
      %s323 = smul.addr %s322, 2
      %s324 = scalar_lea.vmem %s2, %s323
      %s325 = smul.u32 2, %s21
      %s326 = smul.u32 2, %s21
      %p327 = scmp.lt.s32.totalorder %s20, 1
      %s328 = scalar_select %p327, %s20, 1
      %p329 = scmp.lt.s32.totalorder %s326, 1
      %s330 = scalar_select %p329, %s326, 1
      %s331 = smul.addr %s328, 4
      %s332 = sadd.s32 %s330, %s331
      %s333 = smul.addr %s332, 8
      %s334 = scalar_lea.vmem %s5, %s333
      %s335 = smul.u32 2, %s21
      %v337 = vld [vmem:[%s314] sm:$0xf]
      %v338 = vld [vmem:[%s324] sm:$0xf]
      %v339 = vadd.bf16 %v337, %v338
      %v340 = vld [vmem:[%s3] sm:$0xf]
      %v341 = vld [vmem:[%s3 + $0x4] sm:$0xf]
      %v342 = vld [vmem:[%s4] sm:$0xff]
      %v343 = vld [vmem:[%s4 + $0x8] sm:$0xff]
      %345 = vset.pattern.permute.xlu0 0
      %346 = vperm.xlu0 %345, %v342
      %v347 = vpop.permute.xlu0 %346
      %350 = vset.pattern.permute.xlu0 0
      %351 = vperm.xlu0 %350, %v343
      %v352 = vpop.permute.xlu0 %351
      %v356 = vunpack.c.l.b16 %v340
      %v357 = vunpack.c.l.b16 %v341
      %v358 = vpack.c.b16 %v357, %v356
      %v361 = vunpack.c.l.s4 1983009808
      %v362 = vunpack.c.0.s8 %v361
      %v363 = vlaneseq
      %v364 = vshrl.u32 %v363, 7
      %v365 = vsub.s32 %v362, %v364
      %v366 = vrot.slane %v339, %v365
      %v367 = vcombine.high %v366, %v366
      %vm368 = vcmask 31744
      %v370 = vsel %vm368, %v358, 0
      %vm372 = vcmask 1041408
      %v374 = vsel %vm372, %v366, 0
      %v377 = vsel %vm372, %v367, 0
      %379 = vmatprep.subr.bf16.mxu0 %v377
      %380 = vmatpush1.bf16.msra.mxu0 %v374
      %381 = vmatprep.subr.bf16.mxu0 0
      %382 = vmatpush1.bf16.msra.mxu0 0
      %383 = vmatprep.subr.bf16.mxu0 0
      %384 = vmatpush1.bf16.msra.mxu0 0
      %385 = vmatprep.subr.bf16.mxu0 0
      %386 = vmatpush1.bf16.msra.mxu0 0
      %387 = vmatprep.subr.bf16.mxu0 0
      %388 = vmatpush1.bf16.msra.mxu0 0
      %389 = vmatprep.subr.bf16.mxu0 0
      %390 = vmatpush1.bf16.msra.mxu0 0
      %391 = vmatprep.subr.bf16.mxu0 0
      %392 = vmatpush1.bf16.msra.mxu0 0
      %393 = vmatprep.subr.bf16.mxu0 0
      %394 = vmatpush1.bf16.msra.mxu0 0
      %395 = vmatprep.subr.bf16.mxu0 0
      %396 = vmatpush1.bf16.msra.mxu0 0
      %397 = vmatprep.subr.bf16.mxu0 0
      %398 = vmatpush1.bf16.msra.mxu0 0
      %399 = vmatprep.subr.bf16.mxu0 0
      %400 = vmatpush1.bf16.msra.mxu0 0
      %401 = vmatprep.subr.bf16.mxu0 0
      %402 = vmatpush1.bf16.msra.mxu0 0
      %403 = vmatprep.subr.bf16.mxu0 0
      %404 = vmatpush1.bf16.msra.mxu0 0
      %405 = vmatprep.subr.bf16.mxu0 0
      %406 = vmatpush1.bf16.msra.mxu0 0
      %407 = vmatprep.subr.bf16.mxu0 0
      %408 = vmatpush1.bf16.msra.mxu0 0
      %409 = vmatprep.subr.bf16.mxu0 0
      %410 = vmatpush1.bf16.msra.mxu0 0
      %411 = vmatprep.mubr.bf16.mxu0 0
      %412 = vmatmul.mubr.bf16.gmra.mrb[0].mxu0 %v370
      %v413 = vpop.f32.mrb[0].mxu0
      %v414 = vadd.f32 %v347, %v413
      %v415 = vpop.f32.mrb[0].mxu0
      %v416 = vadd.f32 %v347, %v415
      %v417 = vpop.f32.mrb[0].mxu0
      %v418 = vadd.f32 %v352, %v417
      %v419 = vpop.f32.mrb[0].mxu0
      %v420 = vadd.f32 %v352, %v419
      %421 = vdwg.mxu0
      %v422 = vxor.u32 %v414, 2147483648
      %v423 = vxor.u32 %v416, 2147483648
      %v424 = vxor.u32 %v418, 2147483648
      %v425 = vxor.u32 %v420, 2147483648
      %v426 = vmul.f32 %v422, 1.442695
      %v427 = vpow.pop %v426
      %v428 = vmul.f32 %v423, 1.442695
      %v429 = vpow.pop %v428
      %v430 = vmul.f32 %v424, 1.442695
      %v431 = vpow.pop %v430
      %v432 = vmul.f32 %v425, 1.442695
      %v433 = vpow.pop %v432
      %v434 = vadd.f32 %v427, 1.0
      %v435 = vadd.f32 %v429, 1.0
      %v436 = vadd.f32 %v431, 1.0
      %v437 = vadd.f32 %v433, 1.0
      %v438 = vrcp.pop %v434
      %v439 = vmul.f32 1.0, %v438
      %v440 = vrcp.pop %v435
      %v441 = vmul.f32 1.0, %v440
      %v442 = vrcp.pop %v436
      %v443 = vmul.f32 1.0, %v442
      %v444 = vrcp.pop %v437
      %v445 = vmul.f32 1.0, %v444
      %v446 = vld [vmem:[%s304] sm:$0xff]
      %v447 = vld [vmem:[%s304 + $0x8] sm:$0xff]
      %v448 = vld [vmem:[%s304 + $0x10] sm:$0xff]
      %v449 = vld [vmem:[%s304 + $0x18] sm:$0xff]
      %v450 = vmul.f32 %v446, %v439
      %v451 = vmul.f32 %v447, %v441
      %v452 = vmul.f32 %v448, %v443
      %v453 = vmul.f32 %v449, %v445
      %454 = vst [vmem:[%s334] sm:$0xff] %v450
      %455 = vst [vmem:[%s334 + $0x8] sm:$0xff] %v451
      %456 = vst [vmem:[%s334 + $0x10] sm:$0xff] %v452
      %457 = vst [vmem:[%s334 + $0x18] sm:$0xff] %v453
      %s458 = smul.u32 2, %s21
      %p459 = scmp.lt.s32.totalorder %s20, 1
      %s460 = scalar_select %p459, %s20, 1
      %p461 = scmp.lt.s32.totalorder %s458, 1
      %s462 = scalar_select %p461, %s458, 1
      %s463 = smul.addr %s460, 4
      %s464 = sadd.s32 %s462, %s463
      %s465 = smul.addr %s464, 8
      %s466 = scalar_lea.vmem %s5, %s465
      // Predicated region
      $region41: #{esa_forward.17} parent=39 // pred_check
        %p467 = pneg %p174
      $region42: #{esa_forward.17} parent=39 // pred_check_branch
        %469 = sbr.rel (%p467) target = $region44
      $region43: #{esa_forward.17} parent=39 // pred_region
        %s470 = smul.u32 2, %s21
      $region44: #{esa_forward.17} parent=39 // pred_fallthru
        _
    $region40: #{esa_forward.17} parent=5 // pred_fallthru
      _
    %p471 = scmp.le.s32.totalorder 2, %s11
    // Predicated region
    $region45: #{esa_forward.17} parent=5 // pred_check
      %p472 = pneg %p471
    $region46: #{esa_forward.17} parent=5 // pred_check_branch
      %474 = sbr.rel (%p472) target = $region48
    $region47: #{esa_forward.17} parent=5 // pred_region
      %s475 = ssub.s32 %s11, 2
      // Predicated region
      $region49: #{esa_forward.17} parent=47 // pred_check
        %p476 = pneg %p180
      $region50: #{esa_forward.17} parent=47 // pred_check_branch
        %478 = sbr.rel (%p476) target = $region52
      $region51: #{esa_forward.17} parent=47 // pred_region
        %s479 = smul.u32 2, %s23
        %p480 = scmp.lt.s32.totalorder %s22, 1
        %s481 = scalar_select %p480, %s22, 1
        %p482 = scmp.lt.s32.totalorder %s479, 1
        %s483 = scalar_select %p482, %s479, 1
        %s484 = smul.addr %s481, 4
        %s485 = sadd.s32 %s483, %s484
        %s486 = smul.addr %s485, 8
        %s487 = scalar_lea.vmem %s5, %s486
      $region52: #{esa_forward.17} parent=47 // pred_fallthru
        _
    $region48: #{esa_forward.17} parent=5 // pred_fallthru
      _
  $region6: #{esa_forward.17} parent=0 // loop_footer
    %s15 = sadd.s32 1, %s11
  $region7: #{esa_forward.17} parent=0 // loop_footer_branch
    %10 = sbr.rel target = $region3
  $region8: #{esa_forward.17} parent=0 // loop_exit
    _

</llo_original>
